<compile_context>
chip_gen: v6e
topology: v6e:2x2x1
jax: 0.10.0
libtpu: 0.0.40
codegen_flags: <defaults>
</compile_context>

<pallas_src>
import math
import functools

import jax
import jax.numpy as jnp
from jax.experimental import pallas as pl
from jax.experimental.pallas import tpu as pltpu


# ----------------------------- config ---------------------------------------
class Config:
    n_dec_vocab = 64
    d_embed = 32
    n_layer = 2
    n_head = 4
    d_head = 8          # n_head * d_head == d_embed
    d_ff = 64
    dropout = 0.0       # dropout is identity (eval mode)
    layer_norm_epsilon = 1e-6


NEG_INF = -1.0e9


# ----------------------------- in-kernel helpers -----------------------------
def _gelu(x):
    # tanh-approximation gelu, exactly as defined in the reference module
    return 0.5 * x * (1.0 + jnp.tanh(math.sqrt(2.0 / math.pi)
                                     * (x + 0.044715 * x * x * x)))


def _layer_norm(x, g, b, eps):
    mu = jnp.mean(x, axis=-1, keepdims=True)
    var = jnp.mean((x - mu) ** 2, axis=-1, keepdims=True)   # biased var, like torch LN
    return (x - mu) * jax.lax.rsqrt(var + eps) * g + b


def _full_spec(shape):
    """Whole-array BlockSpec for a grid=(1,) kernel."""
    rank = len(shape)
    return pl.BlockSpec(shape, lambda i: (0,) * rank)


# ============================================================================
# Single fused kernel: QKVR proj + rel-attn + out proj + LN1 + FFN + LN2
# ============================================================================
def _layer_kernel(x_ref, pos_ref, w_ref, b_ref, wr_ref, rwb_ref, rrb_ref, mask_ref,
                  wo_ref, bo_ref, g1_ref, b1_ref, w1_ref, c1b_ref, w2_ref, c2b_ref,
                  g2_ref, b2_ref, o_ref, *, B, H, qlen, klen, dh, scale, eps):
    Hdh = H * dh

    x = x_ref[...]                        # (M, d)   h-stream, M = B*qlen
    pos = pos_ref[...]                    # (klen, d)

    # ---- stacked projection (lane-dense N = 4*Hdh = 128); pos only through Wr ----
    yx = jnp.dot(x, w_ref[...], preferred_element_type=jnp.float32) + b_ref[...]
    rf = jnp.dot(pos, wr_ref[...], preferred_element_type=jnp.float32)   # (klen, Hdh)

    qf = yx[:, 0:Hdh]                     # (M, Hdh)
    kf = yx[:, Hdh:2 * Hdh]
    vf = yx[:, 2 * Hdh:3 * Hdh]

    # leading-dim split only (last dim unchanged; sublane-aligned) -> cheap
    q_rw = (qf + rwb_ref[...]).reshape(B, qlen, Hdh)
    q_rr = (qf + rrb_ref[...]).reshape(B, qlen, Hdh)
    k3 = kf.reshape(B, klen, Hdh)         # klen == qlen (mems start empty)
    v3 = vf.reshape(B, klen, Hdh)
    r3 = jnp.broadcast_to(rf[None], (B, klen, Hdh))   # hoisted, shared by all heads

    # ---- per-head AC / BD, batched over B ----
    ac, bd = [], []
    for h in range(H):
        cs = slice(h * dh, (h + 1) * dh)
        ac.append(jnp.einsum('bqd,bkd->bqk', q_rw[:, :, cs], k3[:, :, cs],
                             preferred_element_type=jnp.float32))       # (B, q, klen)
        bd.append(jnp.einsum('bqd,bkd->bqk', q_rr[:, :, cs], r3[:, :, cs],
                             preferred_element_type=jnp.float32))       # (B, q, klen)

    # ---- _rel_shift: the torch zero-pad(dim=1) + .view is, on the flat buffer,
    # a *static* (batch, head) slab permutation: out[b,h] = padded slab B + b*H + h.
    def bd_shift_head(h):
        rows = []
        for b in range(B):
            n = B + b * H + h
            bp, r = divmod(n, H + 1)
            rows.append(jnp.zeros((1, qlen, klen), jnp.float32) if r == 0
                        else bd[r - 1][bp:bp + 1])
        return jnp.concatenate(rows, axis=0)                            # (B, q, klen)

    # ---- scores -> ONE batched softmax over all heads ----
    mask = mask_ref[...]                  # (B, q, klen), 0 or -1e9 (additive bias)
    scores = jnp.concatenate(
        [(ac[h] + bd_shift_head(h)) * scale + mask for h in range(H)], axis=1)
    # (B, H*q, klen): rows [h*q:(h+1)*q] belong to head h
    scores = scores - jnp.max(scores, axis=-1, keepdims=True)
    e = jnp.exp(scores)
    prob = e * pl.reciprocal(jnp.sum(e, axis=-1, keepdims=True), approx=True)

    # ---- prob @ V, batched over B, per head ----
    av = []
    for h in range(H):
        cs = slice(h * dh, (h + 1) * dh)
        av.append(jnp.einsum('bqk,bkd->bqd', prob[:, h * qlen:(h + 1) * qlen, :],
                             v3[:, :, cs],
                             preferred_element_type=jnp.float32))        # (B, q, dh)

    # ---- the module's `.contiguous().view(B, -1, H*dh)` ("weird view"):
    # row-major reinterpretation of (B, H, q, dh) as (B, q, H*dh), built lane-dense
    # with static sublane slices + lane concats (no risky minor-dim reshape).
    rph = (qlen * dh) // Hdh              # rows of the weird view produced per head
    bands = []
    for h in range(H):
        for g in range(rph):
            pieces = [av[h][:, g * H + j: g * H + j + 1, :] for j in range(H)]
            bands.append(jnp.concatenate(pieces, axis=2))                # (B, 1, Hdh)
    av_flat = jnp.concatenate(bands, axis=1).reshape(B * qlen, Hdh)      # (M, Hdh)

    # ---- output projection + residual + LN1 ----
    attn = jnp.dot(av_flat, wo_ref[...],
                   preferred_element_type=jnp.float32) + bo_ref[...]
    h1 = _layer_norm(x + attn, g1_ref[...], b1_ref[...], eps)

    # ---- position-wise FFN (1x1 convs) + residual + LN2 ----
    ff = jnp.dot(h1, w1_ref[...], preferred_element_type=jnp.float32) + c1b_ref[...]
    ff = _gelu(ff)
    ff = jnp.dot(ff, w2_ref[...], preferred_element_type=jnp.float32) + c2b_ref[...]
    o_ref[...] = _layer_norm(ff + h1, g2_ref[...], b2_ref[...], eps)


def fused_decoder_layer(x2, pos_emb, lp, rwb, rrb, mask_bias, cfg):
    B, qlen, klen = mask_bias.shape
    H, dh, d = cfg.n_head, cfg.d_head, cfg.d_embed
    Hdh = H * dh
    d_ff = cfg.d_ff
    M = B * qlen
    assert qlen % H == 0, "weird-view band construction assumes qlen % n_head == 0"

    kern = functools.partial(_layer_kernel, B=B, H=H, qlen=qlen, klen=klen,
                             dh=dh, scale=1.0 / (dh ** 0.5),
                             eps=float(cfg.layer_norm_epsilon))
    out = pl.pallas_call(
        kern,
        grid=(1,),
        in_specs=[_full_spec((M, d)),                 # x (h-stream, flattened)
                  _full_spec((klen, d)),              # pos_emb
                  _full_spec((d, 4 * Hdh)),           # [Wq|Wk|Wv|Wr], [K,N] layout
                  _full_spec((1, 4 * Hdh)),           # [bq,bk,bv,0]
                  _full_spec((d, Hdh)),               # Wr alone (pos projection)
                  _full_spec((1, Hdh)),               # r_w_bias (flattened)
                  _full_spec((1, Hdh)),               # r_r_bias (flattened)
                  _full_spec((B, qlen, klen)),        # additive mask bias
                  _full_spec((Hdh, d)), _full_spec((1, d)),        # Wo, bo
                  _full_spec((1, d)), _full_spec((1, d)),          # ln1 gamma/beta
                  _full_spec((d, d_ff)), _full_spec((1, d_ff)),    # conv1 (k=1)
                  _full_spec((d_ff, d)), _full_spec((1, d)),       # conv2 (k=1)
                  _full_spec((1, d)), _full_spec((1, d))],         # ln2 gamma/beta
        out_specs=_full_spec((M, d)),
        out_shape=jax.ShapeDtypeStruct((M, d), jnp.float32),
        compiler_params=pltpu.CompilerParams(dimension_semantics=("arbitrary",)),
    )(x2, pos_emb, lp["w_qkvr"], lp["b_qkvr"], lp["w_r"], rwb, rrb, mask_bias,
      lp["wo"], lp["bo"], lp["ln1_g"], lp["ln1_b"],
      lp["conv1_w"], lp["conv1_b"], lp["conv2_w"], lp["conv2_b"],
      lp["ln2_g"], lp["ln2_b"])
    return out


# ----------------------------- decoder layer / forward -----------------------
def decoder_layer(output_h, pos_emb, r_w_bias, r_r_bias, mask_bias_h, lp, cfg):
    B, qlen, d = output_h.shape
    H, dh = cfg.n_head, cfg.d_head
    x2 = output_h.reshape(B * qlen, d)
    h_out = fused_decoder_layer(
        x2, pos_emb, lp,
        r_w_bias.reshape(1, H * dh), r_r_bias.reshape(1, H * dh),
        mask_bias_h, cfg)
    # TODO(synk): the reference DecoderLayer also runs a g-stream attention whose
    # result is discarded (it returns input_g unchanged) -> skipped, no effect.
    return h_out.reshape(B, qlen, d)


def decoder_forward(params, inp_k, perm_mask, cfg):
    B, qlen = inp_k.shape
    mlen = 0                 # mems start empty (init_mems)
    klen = mlen + qlen

    attn_mask = jnp.triu(jnp.ones((B, qlen, klen), jnp.float32), k=1 + mlen)
    mems_mask = jnp.zeros((B, perm_mask.shape[1], mlen), jnp.float32)
    data_mask = jnp.concatenate([mems_mask, perm_mask], axis=2)
    attn_mask = attn_mask + data_mask
    attn_mask = (attn_mask > 0).astype(jnp.float32)

    eye_mask = -jnp.eye(qlen, dtype=jnp.float32)
    mem_mask = jnp.zeros((qlen, mlen), jnp.float32)
    non_tgt = jnp.concatenate([mem_mask, eye_mask], axis=1)
    non_tgt_mask = ((attn_mask + non_tgt[None]) > 0).astype(jnp.float32)

    # Additive mask bias (masked_fill(-1e9) -> +(-1e9)); identical probabilities
    # since every query row keeps its diagonal un-masked.  Computed once,
    # reused by every layer.
    # TODO(synk): at production klen generate this in-kernel from iota + perm_mask.
    mask_bias_h = non_tgt_mask * NEG_INF

    # embedding gather / pos encodings (glue, plain JAX inside the jit)
    output_h = params["word_emb"][inp_k]                                   # (B, q, d)
    output_g = jnp.broadcast_to(params["mask_emb"], (B, qlen, cfg.d_embed)) + 0.0

    inv_freq = 1.0 / (10000.0 ** (jnp.arange(0.0, cfg.d_embed, 2.0,
                                             dtype=jnp.float32) / cfg.d_embed))
    pos_seq = jnp.arange(klen - 1, -1, -1, dtype=jnp.float32)
    sinusoid_inp = jnp.outer(pos_seq, inv_freq)
    pos_emb = jnp.concatenate([jnp.sin(sinusoid_inp), jnp.cos(sinusoid_inp)], axis=-1)

    hids = [output_h]
    for i in range(cfg.n_layer):
        output_h = decoder_layer(
            output_h, pos_emb,
            params["r_w_bias"][i], params["r_r_bias"][i],
            mask_bias_h, params["layers"][i], cfg)
        hids.append(output_h)

    new_mems = hids          # _update_mems just detaches hids
    return output_h, output_g, new_mems


# ----------------------------- deterministic params --------------------------
def init_params(key, cfg):
    def nrm(k, shape, scale=0.02):
        return scale * jax.random.normal(k, shape, jnp.float32)

    keys = jax.random.split(key, 4 + cfg.n_layer)
    d, H, dh, d_ff = cfg.d_embed, cfg.n_head, cfg.d_head, cfg.d_ff
    Hdh = H * dh
    params = {
        "word_emb": nrm(keys[0], (cfg.n_dec_vocab, d), 1.0),
        "mask_emb": nrm(keys[1], (1, 1, d), 1.0),
        "r_w_bias": nrm(keys[2], (cfg.n_layer, H, dh)),
        "r_r_bias": nrm(keys[3], (cfg.n_layer, H, dh)),
        "layers": [],
    }
    for i in range(cfg.n_layer):
        lk = jax.random.split(keys[4 + i], 12)
        wq, bq = nrm(lk[0], (Hdh, d)), nrm(lk[1], (Hdh,))
        wk, bk = nrm(lk[2], (Hdh, d)), nrm(lk[3], (Hdh,))
        wv, bv = nrm(lk[4], (Hdh, d)), nrm(lk[5], (Hdh,))
        wr = nrm(lk[6], (Hdh, d))                          # r_net has no bias
        params["layers"].append(dict(
            # All weights pre-transposed host-side to canonical [K, N] layout.
            # x goes through the full 4-way stack (Q/K/V needed; Wr slab rides the
            # same 128-wide MXU pass for free and keeps N lane-dense); pos only
            # through w_r.
            w_qkvr=jnp.concatenate([wq, wk, wv, wr], axis=0).T,          # (d, 4*Hdh)
            b_qkvr=jnp.concatenate(
                [bq, bk, bv, jnp.zeros((Hdh,), jnp.float32)]).reshape(1, 4 * Hdh),
            w_r=wr.T,                                                    # (d, Hdh)
            wo=nrm(lk[7], (d, Hdh)).T,                                   # (Hdh, d)
            bo=nrm(lk[8], (d,)).reshape(1, d),
            ln1_g=jnp.ones((1, d), jnp.float32), ln1_b=jnp.zeros((1, d), jnp.float32),
            conv1_w=nrm(lk[9], (d_ff, d)).T,                             # (d, d_ff)
            conv1_b=nrm(lk[10], (d_ff,)).reshape(1, d_ff),
            conv2_w=nrm(lk[11], (d, d_ff)).T,                            # (d_ff, d)
            conv2_b=jnp.zeros((1, d), jnp.float32),
            ln2_g=jnp.ones((1, d), jnp.float32), ln2_b=jnp.zeros((1, d), jnp.float32),
        ))
    return params


# ----------------------------- main ------------------------------------------
if __name__ == "__main__":
    cfg = Config()
    root = jax.random.PRNGKey(0)
    pkey, ikey, mkey = jax.random.split(root, 3)
    params = init_params(pkey, cfg)

    B, qlen = 2, 8
    inp_k = jax.random.randint(ikey, (B, qlen), 0, cfg.n_dec_vocab)
    perm_mask = jax.random.bernoulli(mkey, 0.3, (B, qlen, qlen)).astype(jnp.float32)

    fwd = jax.jit(functools.partial(decoder_forward, cfg=cfg))
    output_h, output_g, new_mems = fwd(params, inp_k, perm_mask)
    jax.block_until_ready(output_h)
    jax.block_until_ready(output_g)
    jax.block_until_ready(new_mems[-1])

    assert output_h.shape == (B, qlen, cfg.d_embed)
    assert output_g.shape == (B, qlen, cfg.d_embed)
    assert len(new_mems) == cfg.n_layer + 1
    assert bool(jnp.isfinite(output_h).all())
    print("KERNEL_OK")
</pallas_src>

<mosaic_0001>
module attributes {stable_mosaic.version = 11 : i64} {
  func.func @_layer_kernel(%arg0: i32, %arg1: memref<16x32xf32, #tpu.memory_space<vmem>>, %arg2: memref<8x32xf32, #tpu.memory_space<vmem>>, %arg3: memref<32x128xf32, #tpu.memory_space<vmem>>, %arg4: memref<1x128xf32, #tpu.memory_space<vmem>>, %arg5: memref<32x32xf32, #tpu.memory_space<vmem>>, %arg6: memref<1x32xf32, #tpu.memory_space<vmem>>, %arg7: memref<1x32xf32, #tpu.memory_space<vmem>>, %arg8: memref<2x8x8xf32, #tpu.memory_space<vmem>>, %arg9: memref<32x32xf32, #tpu.memory_space<vmem>>, %arg10: memref<1x32xf32, #tpu.memory_space<vmem>>, %arg11: memref<1x32xf32, #tpu.memory_space<vmem>>, %arg12: memref<1x32xf32, #tpu.memory_space<vmem>>, %arg13: memref<32x64xf32, #tpu.memory_space<vmem>>, %arg14: memref<1x64xf32, #tpu.memory_space<vmem>>, %arg15: memref<64x32xf32, #tpu.memory_space<vmem>>, %arg16: memref<1x32xf32, #tpu.memory_space<vmem>>, %arg17: memref<1x32xf32, #tpu.memory_space<vmem>>, %arg18: memref<1x32xf32, #tpu.memory_space<vmem>>, %arg19: memref<16x32xf32, #tpu.memory_space<vmem>>) attributes {dimension_semantics = [#tpu.dimension_semantics<arbitrary>], iteration_bounds = array<i64: 1>, scalar_prefetch = 0 : i64, scratch_operands = 0 : i64, tpu.core_type = #tpu.core_type<tc>, window_params = [{pipeline_mode = #tpu.pipeline_mode<synchronous>, transform_indices = @transform_0, window_bounds = array<i64: 16, 32>}, {pipeline_mode = #tpu.pipeline_mode<synchronous>, transform_indices = @transform_1, window_bounds = array<i64: 8, 32>}, {pipeline_mode = #tpu.pipeline_mode<synchronous>, transform_indices = @transform_2, window_bounds = array<i64: 32, 128>}, {pipeline_mode = #tpu.pipeline_mode<synchronous>, transform_indices = @transform_3, window_bounds = array<i64: 1, 128>}, {pipeline_mode = #tpu.pipeline_mode<synchronous>, transform_indices = @transform_4, window_bounds = array<i64: 32, 32>}, {pipeline_mode = #tpu.pipeline_mode<synchronous>, transform_indices = @transform_5, window_bounds = array<i64: 1, 32>}, {pipeline_mode = #tpu.pipeline_mode<synchronous>, transform_indices = @transform_6, window_bounds = array<i64: 1, 32>}, {pipeline_mode = #tpu.pipeline_mode<synchronous>, transform_indices = @transform_7, window_bounds = array<i64: 2, 8, 8>}, {pipeline_mode = #tpu.pipeline_mode<synchronous>, transform_indices = @transform_8, window_bounds = array<i64: 32, 32>}, {pipeline_mode = #tpu.pipeline_mode<synchronous>, transform_indices = @transform_9, window_bounds = array<i64: 1, 32>}, {pipeline_mode = #tpu.pipeline_mode<synchronous>, transform_indices = @transform_10, window_bounds = array<i64: 1, 32>}, {pipeline_mode = #tpu.pipeline_mode<synchronous>, transform_indices = @transform_11, window_bounds = array<i64: 1, 32>}, {pipeline_mode = #tpu.pipeline_mode<synchronous>, transform_indices = @transform_12, window_bounds = array<i64: 32, 64>}, {pipeline_mode = #tpu.pipeline_mode<synchronous>, transform_indices = @transform_13, window_bounds = array<i64: 1, 64>}, {pipeline_mode = #tpu.pipeline_mode<synchronous>, transform_indices = @transform_14, window_bounds = array<i64: 64, 32>}, {pipeline_mode = #tpu.pipeline_mode<synchronous>, transform_indices = @transform_15, window_bounds = array<i64: 1, 32>}, {pipeline_mode = #tpu.pipeline_mode<synchronous>, transform_indices = @transform_16, window_bounds = array<i64: 1, 32>}, {pipeline_mode = #tpu.pipeline_mode<synchronous>, transform_indices = @transform_17, window_bounds = array<i64: 1, 32>}, {pipeline_mode = #tpu.pipeline_mode<synchronous>, transform_indices = @transform_18, window_bounds = array<i64: 16, 32>}]} {
    %c0 = arith.constant 0 : index
    %c0_0 = arith.constant 0 : index
    %0 = vector.load %arg1[%c0, %c0_0] : memref<16x32xf32, #tpu.memory_space<vmem>>, vector<16x32xf32>
    %c0_1 = arith.constant 0 : index
    %c0_2 = arith.constant 0 : index
    %1 = vector.load %arg2[%c0_1, %c0_2] : memref<8x32xf32, #tpu.memory_space<vmem>>, vector<8x32xf32>
    %c0_3 = arith.constant 0 : index
    %c0_4 = arith.constant 0 : index
    %2 = vector.load %arg3[%c0_3, %c0_4] : memref<32x128xf32, #tpu.memory_space<vmem>>, vector<32x128xf32>
    %cst = arith.constant dense<0.000000e+00> : vector<16x128xf32>
    %3 = tpu.matmul %0, %2, %cst {dimension_numbers = #tpu.dot_dimension_numbers<[1], [0], [0], [1], [0, 0, 1, 1], [], []>} : vector<16x32xf32>, vector<32x128xf32>, vector<16x128xf32> -> vector<16x128xf32>
    %c0_5 = arith.constant 0 : index
    %c0_6 = arith.constant 0 : index
    %4 = vector.load %arg4[%c0_5, %c0_6] : memref<1x128xf32, #tpu.memory_space<vmem>>, vector<1x128xf32>
    %5 = vector.broadcast %4 : vector<1x128xf32> to vector<16x128xf32>
    %6 = arith.addf %3, %5 : vector<16x128xf32>
    %c0_7 = arith.constant 0 : index
    %c0_8 = arith.constant 0 : index
    %7 = vector.load %arg5[%c0_7, %c0_8] : memref<32x32xf32, #tpu.memory_space<vmem>>, vector<32x32xf32>
    %cst_9 = arith.constant dense<0.000000e+00> : vector<8x32xf32>
    %8 = tpu.matmul %1, %7, %cst_9 {dimension_numbers = #tpu.dot_dimension_numbers<[1], [0], [0], [1], [0, 0, 1, 1], [], []>} : vector<8x32xf32>, vector<32x32xf32>, vector<8x32xf32> -> vector<8x32xf32>
    %9 = vector.extract_strided_slice %6 {offsets = [0, 0], sizes = [16, 32], strides = [1, 1]} : vector<16x128xf32> to vector<16x32xf32>
    %10 = vector.extract_strided_slice %6 {offsets = [0, 32], sizes = [16, 32], strides = [1, 1]} : vector<16x128xf32> to vector<16x32xf32>
    %11 = vector.extract_strided_slice %6 {offsets = [0, 64], sizes = [16, 32], strides = [1, 1]} : vector<16x128xf32> to vector<16x32xf32>
    %c0_10 = arith.constant 0 : index
    %c0_11 = arith.constant 0 : index
    %12 = vector.load %arg6[%c0_10, %c0_11] : memref<1x32xf32, #tpu.memory_space<vmem>>, vector<1x32xf32>
    %13 = vector.broadcast %12 : vector<1x32xf32> to vector<16x32xf32>
    %14 = arith.addf %9, %13 : vector<16x32xf32>
    %15 = vector.shape_cast %14 : vector<16x32xf32> to vector<2x8x32xf32>
    %c0_12 = arith.constant 0 : index
    %c0_13 = arith.constant 0 : index
    %16 = vector.load %arg7[%c0_12, %c0_13] : memref<1x32xf32, #tpu.memory_space<vmem>>, vector<1x32xf32>
    %17 = vector.broadcast %16 : vector<1x32xf32> to vector<16x32xf32>
    %18 = arith.addf %9, %17 : vector<16x32xf32>
    %19 = vector.shape_cast %18 : vector<16x32xf32> to vector<2x8x32xf32>
    %20 = vector.shape_cast %10 : vector<16x32xf32> to vector<2x8x32xf32>
    %21 = vector.shape_cast %11 : vector<16x32xf32> to vector<2x8x32xf32>
    %22 = vector.shape_cast %8 : vector<8x32xf32> to vector<1x8x32xf32>
    %23 = vector.shape_cast %22 : vector<1x8x32xf32> to vector<1x8x32xf32>
    %24 = vector.broadcast %23 : vector<1x8x32xf32> to vector<2x8x32xf32>
    %25 = vector.extract_strided_slice %15 {offsets = [0, 0, 0], sizes = [2, 8, 8], strides = [1, 1, 1]} : vector<2x8x32xf32> to vector<2x8x8xf32>
    %26 = vector.extract_strided_slice %20 {offsets = [0, 0, 0], sizes = [2, 8, 8], strides = [1, 1, 1]} : vector<2x8x32xf32> to vector<2x8x8xf32>
    "tpu.trace_start"() <{level = 10 : i32, message = "bqd,bkd->bqk"}> : () -> ()
    %cst_14 = arith.constant dense<0.000000e+00> : vector<2x8x8xf32>
    %27 = tpu.matmul %25, %26, %cst_14 {dimension_numbers = #tpu.dot_dimension_numbers<[2], [2], [1], [1], [0, 0, 0, 1, 1, 1], [0], [0]>} : vector<2x8x8xf32>, vector<2x8x8xf32>, vector<2x8x8xf32> -> vector<2x8x8xf32>
    "tpu.trace_stop"() : () -> ()
    %28 = vector.extract_strided_slice %19 {offsets = [0, 0, 0], sizes = [2, 8, 8], strides = [1, 1, 1]} : vector<2x8x32xf32> to vector<2x8x8xf32>
    %29 = vector.extract_strided_slice %24 {offsets = [0, 0, 0], sizes = [2, 8, 8], strides = [1, 1, 1]} : vector<2x8x32xf32> to vector<2x8x8xf32>
    "tpu.trace_start"() <{level = 10 : i32, message = "bqd,bkd->bqk"}> : () -> ()
    %cst_15 = arith.constant dense<0.000000e+00> : vector<2x8x8xf32>
    %30 = tpu.matmul %28, %29, %cst_15 {dimension_numbers = #tpu.dot_dimension_numbers<[2], [2], [1], [1], [0, 0, 0, 1, 1, 1], [0], [0]>} : vector<2x8x8xf32>, vector<2x8x8xf32>, vector<2x8x8xf32> -> vector<2x8x8xf32>
    "tpu.trace_stop"() : () -> ()
    %31 = vector.extract_strided_slice %15 {offsets = [0, 0, 8], sizes = [2, 8, 8], strides = [1, 1, 1]} : vector<2x8x32xf32> to vector<2x8x8xf32>
    %32 = vector.extract_strided_slice %20 {offsets = [0, 0, 8], sizes = [2, 8, 8], strides = [1, 1, 1]} : vector<2x8x32xf32> to vector<2x8x8xf32>
    "tpu.trace_start"() <{level = 10 : i32, message = "bqd,bkd->bqk"}> : () -> ()
    %cst_16 = arith.constant dense<0.000000e+00> : vector<2x8x8xf32>
    %33 = tpu.matmul %31, %32, %cst_16 {dimension_numbers = #tpu.dot_dimension_numbers<[2], [2], [1], [1], [0, 0, 0, 1, 1, 1], [0], [0]>} : vector<2x8x8xf32>, vector<2x8x8xf32>, vector<2x8x8xf32> -> vector<2x8x8xf32>
    "tpu.trace_stop"() : () -> ()
    %34 = vector.extract_strided_slice %19 {offsets = [0, 0, 8], sizes = [2, 8, 8], strides = [1, 1, 1]} : vector<2x8x32xf32> to vector<2x8x8xf32>
    %35 = vector.extract_strided_slice %24 {offsets = [0, 0, 8], sizes = [2, 8, 8], strides = [1, 1, 1]} : vector<2x8x32xf32> to vector<2x8x8xf32>
    "tpu.trace_start"() <{level = 10 : i32, message = "bqd,bkd->bqk"}> : () -> ()
    %cst_17 = arith.constant dense<0.000000e+00> : vector<2x8x8xf32>
    %36 = tpu.matmul %34, %35, %cst_17 {dimension_numbers = #tpu.dot_dimension_numbers<[2], [2], [1], [1], [0, 0, 0, 1, 1, 1], [0], [0]>} : vector<2x8x8xf32>, vector<2x8x8xf32>, vector<2x8x8xf32> -> vector<2x8x8xf32>
    "tpu.trace_stop"() : () -> ()
    %37 = vector.extract_strided_slice %15 {offsets = [0, 0, 16], sizes = [2, 8, 8], strides = [1, 1, 1]} : vector<2x8x32xf32> to vector<2x8x8xf32>
    %38 = vector.extract_strided_slice %20 {offsets = [0, 0, 16], sizes = [2, 8, 8], strides = [1, 1, 1]} : vector<2x8x32xf32> to vector<2x8x8xf32>
    "tpu.trace_start"() <{level = 10 : i32, message = "bqd,bkd->bqk"}> : () -> ()
    %cst_18 = arith.constant dense<0.000000e+00> : vector<2x8x8xf32>
    %39 = tpu.matmul %37, %38, %cst_18 {dimension_numbers = #tpu.dot_dimension_numbers<[2], [2], [1], [1], [0, 0, 0, 1, 1, 1], [0], [0]>} : vector<2x8x8xf32>, vector<2x8x8xf32>, vector<2x8x8xf32> -> vector<2x8x8xf32>
    "tpu.trace_stop"() : () -> ()
    %40 = vector.extract_strided_slice %19 {offsets = [0, 0, 16], sizes = [2, 8, 8], strides = [1, 1, 1]} : vector<2x8x32xf32> to vector<2x8x8xf32>
    %41 = vector.extract_strided_slice %24 {offsets = [0, 0, 16], sizes = [2, 8, 8], strides = [1, 1, 1]} : vector<2x8x32xf32> to vector<2x8x8xf32>
    "tpu.trace_start"() <{level = 10 : i32, message = "bqd,bkd->bqk"}> : () -> ()
    %cst_19 = arith.constant dense<0.000000e+00> : vector<2x8x8xf32>
    %42 = tpu.matmul %40, %41, %cst_19 {dimension_numbers = #tpu.dot_dimension_numbers<[2], [2], [1], [1], [0, 0, 0, 1, 1, 1], [0], [0]>} : vector<2x8x8xf32>, vector<2x8x8xf32>, vector<2x8x8xf32> -> vector<2x8x8xf32>
    "tpu.trace_stop"() : () -> ()
    %43 = vector.extract_strided_slice %15 {offsets = [0, 0, 24], sizes = [2, 8, 8], strides = [1, 1, 1]} : vector<2x8x32xf32> to vector<2x8x8xf32>
    %44 = vector.extract_strided_slice %20 {offsets = [0, 0, 24], sizes = [2, 8, 8], strides = [1, 1, 1]} : vector<2x8x32xf32> to vector<2x8x8xf32>
    "tpu.trace_start"() <{level = 10 : i32, message = "bqd,bkd->bqk"}> : () -> ()
    %cst_20 = arith.constant dense<0.000000e+00> : vector<2x8x8xf32>
    %45 = tpu.matmul %43, %44, %cst_20 {dimension_numbers = #tpu.dot_dimension_numbers<[2], [2], [1], [1], [0, 0, 0, 1, 1, 1], [0], [0]>} : vector<2x8x8xf32>, vector<2x8x8xf32>, vector<2x8x8xf32> -> vector<2x8x8xf32>
    "tpu.trace_stop"() : () -> ()
    %46 = vector.extract_strided_slice %19 {offsets = [0, 0, 24], sizes = [2, 8, 8], strides = [1, 1, 1]} : vector<2x8x32xf32> to vector<2x8x8xf32>
    %47 = vector.extract_strided_slice %24 {offsets = [0, 0, 24], sizes = [2, 8, 8], strides = [1, 1, 1]} : vector<2x8x32xf32> to vector<2x8x8xf32>
    "tpu.trace_start"() <{level = 10 : i32, message = "bqd,bkd->bqk"}> : () -> ()
    %cst_21 = arith.constant dense<0.000000e+00> : vector<2x8x8xf32>
    %48 = tpu.matmul %46, %47, %cst_21 {dimension_numbers = #tpu.dot_dimension_numbers<[2], [2], [1], [1], [0, 0, 0, 1, 1, 1], [0], [0]>} : vector<2x8x8xf32>, vector<2x8x8xf32>, vector<2x8x8xf32> -> vector<2x8x8xf32>
    "tpu.trace_stop"() : () -> ()
    %c0_22 = arith.constant 0 : index
    %c0_23 = arith.constant 0 : index
    %c0_24 = arith.constant 0 : index
    %49 = vector.load %arg8[%c0_22, %c0_23, %c0_24] : memref<2x8x8xf32, #tpu.memory_space<vmem>>, vector<2x8x8xf32>
    %50 = vector.extract_strided_slice %36 {offsets = [0, 0, 0], sizes = [1, 8, 8], strides = [1, 1, 1]} : vector<2x8x8xf32> to vector<1x8x8xf32>
    %51 = vector.extract_strided_slice %30 {offsets = [1, 0, 0], sizes = [1, 8, 8], strides = [1, 1, 1]} : vector<2x8x8xf32> to vector<1x8x8xf32>
    %52 = tpu.concatenate %50, %51 in 0 : vector<1x8x8xf32>, vector<1x8x8xf32> -> vector<2x8x8xf32>
    %53 = arith.addf %27, %52 : vector<2x8x8xf32>
    %cst_25 = arith.constant 0.353553385 : f32
    %54 = vector.broadcast %cst_25 : f32 to vector<2x8x8xf32>
    %55 = arith.mulf %53, %54 : vector<2x8x8xf32>
    %56 = arith.addf %55, %49 : vector<2x8x8xf32>
    %57 = vector.extract_strided_slice %42 {offsets = [0, 0, 0], sizes = [1, 8, 8], strides = [1, 1, 1]} : vector<2x8x8xf32> to vector<1x8x8xf32>
    %58 = vector.extract_strided_slice %36 {offsets = [1, 0, 0], sizes = [1, 8, 8], strides = [1, 1, 1]} : vector<2x8x8xf32> to vector<1x8x8xf32>
    %59 = tpu.concatenate %57, %58 in 0 : vector<1x8x8xf32>, vector<1x8x8xf32> -> vector<2x8x8xf32>
    %60 = arith.addf %33, %59 : vector<2x8x8xf32>
    %cst_26 = arith.constant 0.353553385 : f32
    %61 = vector.broadcast %cst_26 : f32 to vector<2x8x8xf32>
    %62 = arith.mulf %60, %61 : vector<2x8x8xf32>
    %63 = arith.addf %62, %49 : vector<2x8x8xf32>
    %64 = vector.extract_strided_slice %48 {offsets = [0, 0, 0], sizes = [1, 8, 8], strides = [1, 1, 1]} : vector<2x8x8xf32> to vector<1x8x8xf32>
    %65 = vector.extract_strided_slice %42 {offsets = [1, 0, 0], sizes = [1, 8, 8], strides = [1, 1, 1]} : vector<2x8x8xf32> to vector<1x8x8xf32>
    %66 = tpu.concatenate %64, %65 in 0 : vector<1x8x8xf32>, vector<1x8x8xf32> -> vector<2x8x8xf32>
    %67 = arith.addf %39, %66 : vector<2x8x8xf32>
    %cst_27 = arith.constant 0.353553385 : f32
    %68 = vector.broadcast %cst_27 : f32 to vector<2x8x8xf32>
    %69 = arith.mulf %67, %68 : vector<2x8x8xf32>
    %70 = arith.addf %69, %49 : vector<2x8x8xf32>
    %cst_28 = arith.constant 0.000000e+00 : f32
    %71 = vector.broadcast %cst_28 : f32 to vector<1x8x8xf32>
    %72 = vector.extract_strided_slice %48 {offsets = [1, 0, 0], sizes = [1, 8, 8], strides = [1, 1, 1]} : vector<2x8x8xf32> to vector<1x8x8xf32>
    %73 = tpu.concatenate %71, %72 in 0 : vector<1x8x8xf32>, vector<1x8x8xf32> -> vector<2x8x8xf32>
    %74 = arith.addf %45, %73 : vector<2x8x8xf32>
    %cst_29 = arith.constant 0.353553385 : f32
    %75 = vector.broadcast %cst_29 : f32 to vector<2x8x8xf32>
    %76 = arith.mulf %74, %75 : vector<2x8x8xf32>
    %77 = arith.addf %76, %49 : vector<2x8x8xf32>
    %78 = tpu.concatenate %56, %63, %70, %77 in 1 : vector<2x8x8xf32>, vector<2x8x8xf32>, vector<2x8x8xf32>, vector<2x8x8xf32> -> vector<2x32x8xf32>
    %cst_30 = arith.constant dense<0xFF800000> : vector<2x32xf32>
    %79 = vector.multi_reduction <maximumf>, %78, %cst_30 [2] : vector<2x32x8xf32> to vector<2x32xf32>
    %80 = vector.shape_cast %79 : vector<2x32xf32> to vector<2x32x1xf32>
    %81 = vector.broadcast %80 : vector<2x32x1xf32> to vector<2x32x8xf32>
    %82 = arith.subf %78, %81 : vector<2x32x8xf32>
    %83 = math.exp %82 : vector<2x32x8xf32>
    %cst_31 = arith.constant dense<0.000000e+00> : vector<2x32xf32>
    %84 = vector.multi_reduction <add>, %83, %cst_31 [2] : vector<2x32x8xf32> to vector<2x32xf32>
    %85 = vector.shape_cast %84 : vector<2x32xf32> to vector<2x32x1xf32>
    %86 = tpu.reciprocal %85 {approx = true} : vector<2x32x1xf32> -> vector<2x32x1xf32>
    %87 = vector.broadcast %86 : vector<2x32x1xf32> to vector<2x32x8xf32>
    %88 = arith.mulf %83, %87 : vector<2x32x8xf32>
    %89 = vector.extract_strided_slice %88 {offsets = [0, 0, 0], sizes = [2, 8, 8], strides = [1, 1, 1]} : vector<2x32x8xf32> to vector<2x8x8xf32>
    %90 = vector.extract_strided_slice %21 {offsets = [0, 0, 0], sizes = [2, 8, 8], strides = [1, 1, 1]} : vector<2x8x32xf32> to vector<2x8x8xf32>
    "tpu.trace_start"() <{level = 10 : i32, message = "bqk,bkd->bqd"}> : () -> ()
    %cst_32 = arith.constant dense<0.000000e+00> : vector<2x8x8xf32>
    %91 = tpu.matmul %89, %90, %cst_32 {dimension_numbers = #tpu.dot_dimension_numbers<[2], [1], [1], [2], [0, 0, 0, 1, 1, 2], [0], [0]>} : vector<2x8x8xf32>, vector<2x8x8xf32>, vector<2x8x8xf32> -> vector<2x8x8xf32>
    "tpu.trace_stop"() : () -> ()
    %92 = vector.extract_strided_slice %88 {offsets = [0, 8, 0], sizes = [2, 8, 8], strides = [1, 1, 1]} : vector<2x32x8xf32> to vector<2x8x8xf32>
    %93 = vector.extract_strided_slice %21 {offsets = [0, 0, 8], sizes = [2, 8, 8], strides = [1, 1, 1]} : vector<2x8x32xf32> to vector<2x8x8xf32>
    "tpu.trace_start"() <{level = 10 : i32, message = "bqk,bkd->bqd"}> : () -> ()
    %cst_33 = arith.constant dense<0.000000e+00> : vector<2x8x8xf32>
    %94 = tpu.matmul %92, %93, %cst_33 {dimension_numbers = #tpu.dot_dimension_numbers<[2], [1], [1], [2], [0, 0, 0, 1, 1, 2], [0], [0]>} : vector<2x8x8xf32>, vector<2x8x8xf32>, vector<2x8x8xf32> -> vector<2x8x8xf32>
    "tpu.trace_stop"() : () -> ()
    %95 = vector.extract_strided_slice %88 {offsets = [0, 16, 0], sizes = [2, 8, 8], strides = [1, 1, 1]} : vector<2x32x8xf32> to vector<2x8x8xf32>
    %96 = vector.extract_strided_slice %21 {offsets = [0, 0, 16], sizes = [2, 8, 8], strides = [1, 1, 1]} : vector<2x8x32xf32> to vector<2x8x8xf32>
    "tpu.trace_start"() <{level = 10 : i32, message = "bqk,bkd->bqd"}> : () -> ()
    %cst_34 = arith.constant dense<0.000000e+00> : vector<2x8x8xf32>
    %97 = tpu.matmul %95, %96, %cst_34 {dimension_numbers = #tpu.dot_dimension_numbers<[2], [1], [1], [2], [0, 0, 0, 1, 1, 2], [0], [0]>} : vector<2x8x8xf32>, vector<2x8x8xf32>, vector<2x8x8xf32> -> vector<2x8x8xf32>
    "tpu.trace_stop"() : () -> ()
    %98 = vector.extract_strided_slice %88 {offsets = [0, 24, 0], sizes = [2, 8, 8], strides = [1, 1, 1]} : vector<2x32x8xf32> to vector<2x8x8xf32>
    %99 = vector.extract_strided_slice %21 {offsets = [0, 0, 24], sizes = [2, 8, 8], strides = [1, 1, 1]} : vector<2x8x32xf32> to vector<2x8x8xf32>
    "tpu.trace_start"() <{level = 10 : i32, message = "bqk,bkd->bqd"}> : () -> ()
    %cst_35 = arith.constant dense<0.000000e+00> : vector<2x8x8xf32>
    %100 = tpu.matmul %98, %99, %cst_35 {dimension_numbers = #tpu.dot_dimension_numbers<[2], [1], [1], [2], [0, 0, 0, 1, 1, 2], [0], [0]>} : vector<2x8x8xf32>, vector<2x8x8xf32>, vector<2x8x8xf32> -> vector<2x8x8xf32>
    "tpu.trace_stop"() : () -> ()
    %101 = vector.extract_strided_slice %91 {offsets = [0, 0, 0], sizes = [2, 1, 8], strides = [1, 1, 1]} : vector<2x8x8xf32> to vector<2x1x8xf32>
    %102 = vector.extract_strided_slice %91 {offsets = [0, 1, 0], sizes = [2, 1, 8], strides = [1, 1, 1]} : vector<2x8x8xf32> to vector<2x1x8xf32>
    %103 = vector.extract_strided_slice %91 {offsets = [0, 2, 0], sizes = [2, 1, 8], strides = [1, 1, 1]} : vector<2x8x8xf32> to vector<2x1x8xf32>
    %104 = vector.extract_strided_slice %91 {offsets = [0, 3, 0], sizes = [2, 1, 8], strides = [1, 1, 1]} : vector<2x8x8xf32> to vector<2x1x8xf32>
    %105 = tpu.concatenate %101, %102, %103, %104 in 2 : vector<2x1x8xf32>, vector<2x1x8xf32>, vector<2x1x8xf32>, vector<2x1x8xf32> -> vector<2x1x32xf32>
    %106 = vector.extract_strided_slice %91 {offsets = [0, 4, 0], sizes = [2, 1, 8], strides = [1, 1, 1]} : vector<2x8x8xf32> to vector<2x1x8xf32>
    %107 = vector.extract_strided_slice %91 {offsets = [0, 5, 0], sizes = [2, 1, 8], strides = [1, 1, 1]} : vector<2x8x8xf32> to vector<2x1x8xf32>
    %108 = vector.extract_strided_slice %91 {offsets = [0, 6, 0], sizes = [2, 1, 8], strides = [1, 1, 1]} : vector<2x8x8xf32> to vector<2x1x8xf32>
    %109 = vector.extract_strided_slice %91 {offsets = [0, 7, 0], sizes = [2, 1, 8], strides = [1, 1, 1]} : vector<2x8x8xf32> to vector<2x1x8xf32>
    %110 = tpu.concatenate %106, %107, %108, %109 in 2 : vector<2x1x8xf32>, vector<2x1x8xf32>, vector<2x1x8xf32>, vector<2x1x8xf32> -> vector<2x1x32xf32>
    %111 = vector.extract_strided_slice %94 {offsets = [0, 0, 0], sizes = [2, 1, 8], strides = [1, 1, 1]} : vector<2x8x8xf32> to vector<2x1x8xf32>
    %112 = vector.extract_strided_slice %94 {offsets = [0, 1, 0], sizes = [2, 1, 8], strides = [1, 1, 1]} : vector<2x8x8xf32> to vector<2x1x8xf32>
    %113 = vector.extract_strided_slice %94 {offsets = [0, 2, 0], sizes = [2, 1, 8], strides = [1, 1, 1]} : vector<2x8x8xf32> to vector<2x1x8xf32>
    %114 = vector.extract_strided_slice %94 {offsets = [0, 3, 0], sizes = [2, 1, 8], strides = [1, 1, 1]} : vector<2x8x8xf32> to vector<2x1x8xf32>
    %115 = tpu.concatenate %111, %112, %113, %114 in 2 : vector<2x1x8xf32>, vector<2x1x8xf32>, vector<2x1x8xf32>, vector<2x1x8xf32> -> vector<2x1x32xf32>
    %116 = vector.extract_strided_slice %94 {offsets = [0, 4, 0], sizes = [2, 1, 8], strides = [1, 1, 1]} : vector<2x8x8xf32> to vector<2x1x8xf32>
    %117 = vector.extract_strided_slice %94 {offsets = [0, 5, 0], sizes = [2, 1, 8], strides = [1, 1, 1]} : vector<2x8x8xf32> to vector<2x1x8xf32>
    %118 = vector.extract_strided_slice %94 {offsets = [0, 6, 0], sizes = [2, 1, 8], strides = [1, 1, 1]} : vector<2x8x8xf32> to vector<2x1x8xf32>
    %119 = vector.extract_strided_slice %94 {offsets = [0, 7, 0], sizes = [2, 1, 8], strides = [1, 1, 1]} : vector<2x8x8xf32> to vector<2x1x8xf32>
    %120 = tpu.concatenate %116, %117, %118, %119 in 2 : vector<2x1x8xf32>, vector<2x1x8xf32>, vector<2x1x8xf32>, vector<2x1x8xf32> -> vector<2x1x32xf32>
    %121 = vector.extract_strided_slice %97 {offsets = [0, 0, 0], sizes = [2, 1, 8], strides = [1, 1, 1]} : vector<2x8x8xf32> to vector<2x1x8xf32>
    %122 = vector.extract_strided_slice %97 {offsets = [0, 1, 0], sizes = [2, 1, 8], strides = [1, 1, 1]} : vector<2x8x8xf32> to vector<2x1x8xf32>
    %123 = vector.extract_strided_slice %97 {offsets = [0, 2, 0], sizes = [2, 1, 8], strides = [1, 1, 1]} : vector<2x8x8xf32> to vector<2x1x8xf32>
    %124 = vector.extract_strided_slice %97 {offsets = [0, 3, 0], sizes = [2, 1, 8], strides = [1, 1, 1]} : vector<2x8x8xf32> to vector<2x1x8xf32>
    %125 = tpu.concatenate %121, %122, %123, %124 in 2 : vector<2x1x8xf32>, vector<2x1x8xf32>, vector<2x1x8xf32>, vector<2x1x8xf32> -> vector<2x1x32xf32>
    %126 = vector.extract_strided_slice %97 {offsets = [0, 4, 0], sizes = [2, 1, 8], strides = [1, 1, 1]} : vector<2x8x8xf32> to vector<2x1x8xf32>
    %127 = vector.extract_strided_slice %97 {offsets = [0, 5, 0], sizes = [2, 1, 8], strides = [1, 1, 1]} : vector<2x8x8xf32> to vector<2x1x8xf32>
    %128 = vector.extract_strided_slice %97 {offsets = [0, 6, 0], sizes = [2, 1, 8], strides = [1, 1, 1]} : vector<2x8x8xf32> to vector<2x1x8xf32>
    %129 = vector.extract_strided_slice %97 {offsets = [0, 7, 0], sizes = [2, 1, 8], strides = [1, 1, 1]} : vector<2x8x8xf32> to vector<2x1x8xf32>
    %130 = tpu.concatenate %126, %127, %128, %129 in 2 : vector<2x1x8xf32>, vector<2x1x8xf32>, vector<2x1x8xf32>, vector<2x1x8xf32> -> vector<2x1x32xf32>
    %131 = vector.extract_strided_slice %100 {offsets = [0, 0, 0], sizes = [2, 1, 8], strides = [1, 1, 1]} : vector<2x8x8xf32> to vector<2x1x8xf32>
    %132 = vector.extract_strided_slice %100 {offsets = [0, 1, 0], sizes = [2, 1, 8], strides = [1, 1, 1]} : vector<2x8x8xf32> to vector<2x1x8xf32>
    %133 = vector.extract_strided_slice %100 {offsets = [0, 2, 0], sizes = [2, 1, 8], strides = [1, 1, 1]} : vector<2x8x8xf32> to vector<2x1x8xf32>
    %134 = vector.extract_strided_slice %100 {offsets = [0, 3, 0], sizes = [2, 1, 8], strides = [1, 1, 1]} : vector<2x8x8xf32> to vector<2x1x8xf32>
    %135 = tpu.concatenate %131, %132, %133, %134 in 2 : vector<2x1x8xf32>, vector<2x1x8xf32>, vector<2x1x8xf32>, vector<2x1x8xf32> -> vector<2x1x32xf32>
    %136 = vector.extract_strided_slice %100 {offsets = [0, 4, 0], sizes = [2, 1, 8], strides = [1, 1, 1]} : vector<2x8x8xf32> to vector<2x1x8xf32>
    %137 = vector.extract_strided_slice %100 {offsets = [0, 5, 0], sizes = [2, 1, 8], strides = [1, 1, 1]} : vector<2x8x8xf32> to vector<2x1x8xf32>
    %138 = vector.extract_strided_slice %100 {offsets = [0, 6, 0], sizes = [2, 1, 8], strides = [1, 1, 1]} : vector<2x8x8xf32> to vector<2x1x8xf32>
    %139 = vector.extract_strided_slice %100 {offsets = [0, 7, 0], sizes = [2, 1, 8], strides = [1, 1, 1]} : vector<2x8x8xf32> to vector<2x1x8xf32>
    %140 = tpu.concatenate %136, %137, %138, %139 in 2 : vector<2x1x8xf32>, vector<2x1x8xf32>, vector<2x1x8xf32>, vector<2x1x8xf32> -> vector<2x1x32xf32>
    %141 = tpu.concatenate %105, %110, %115, %120, %125, %130, %135, %140 in 1 : vector<2x1x32xf32>, vector<2x1x32xf32>, vector<2x1x32xf32>, vector<2x1x32xf32>, vector<2x1x32xf32>, vector<2x1x32xf32>, vector<2x1x32xf32>, vector<2x1x32xf32> -> vector<2x8x32xf32>
    %142 = vector.shape_cast %141 : vector<2x8x32xf32> to vector<16x32xf32>
    %c0_36 = arith.constant 0 : index
    %c0_37 = arith.constant 0 : index
    %143 = vector.load %arg9[%c0_36, %c0_37] : memref<32x32xf32, #tpu.memory_space<vmem>>, vector<32x32xf32>
    %cst_38 = arith.constant dense<0.000000e+00> : vector<16x32xf32>
    %144 = tpu.matmul %142, %143, %cst_38 {dimension_numbers = #tpu.dot_dimension_numbers<[1], [0], [0], [1], [0, 0, 1, 1], [], []>} : vector<16x32xf32>, vector<32x32xf32>, vector<16x32xf32> -> vector<16x32xf32>
    %c0_39 = arith.constant 0 : index
    %c0_40 = arith.constant 0 : index
    %145 = vector.load %arg10[%c0_39, %c0_40] : memref<1x32xf32, #tpu.memory_space<vmem>>, vector<1x32xf32>
    %146 = vector.broadcast %145 : vector<1x32xf32> to vector<16x32xf32>
    %147 = arith.addf %144, %146 : vector<16x32xf32>
    %148 = arith.addf %0, %147 : vector<16x32xf32>
    %c0_41 = arith.constant 0 : index
    %c0_42 = arith.constant 0 : index
    %149 = vector.load %arg11[%c0_41, %c0_42] : memref<1x32xf32, #tpu.memory_space<vmem>>, vector<1x32xf32>
    %c0_43 = arith.constant 0 : index
    %c0_44 = arith.constant 0 : index
    %150 = vector.load %arg12[%c0_43, %c0_44] : memref<1x32xf32, #tpu.memory_space<vmem>>, vector<1x32xf32>
    %cst_45 = arith.constant dense<0.000000e+00> : vector<16xf32>
    %151 = vector.multi_reduction <add>, %148, %cst_45 [1] : vector<16x32xf32> to vector<16xf32>
    %152 = vector.shape_cast %151 : vector<16xf32> to vector<16x1xf32>
    %cst_46 = arith.constant 3.200000e+01 : f32
    %153 = vector.broadcast %cst_46 : f32 to vector<16x1xf32>
    %154 = arith.divf %152, %153 : vector<16x1xf32>
    %155 = vector.broadcast %154 : vector<16x1xf32> to vector<16x32xf32>
    %156 = arith.subf %148, %155 : vector<16x32xf32>
    %157 = arith.mulf %156, %156 : vector<16x32xf32>
    %cst_47 = arith.constant dense<0.000000e+00> : vector<16xf32>
    %158 = vector.multi_reduction <add>, %157, %cst_47 [1] : vector<16x32xf32> to vector<16xf32>
    %159 = vector.shape_cast %158 : vector<16xf32> to vector<16x1xf32>
    %cst_48 = arith.constant 3.200000e+01 : f32
    %160 = vector.broadcast %cst_48 : f32 to vector<16x1xf32>
    %161 = arith.divf %159, %160 : vector<16x1xf32>
    %162 = vector.broadcast %154 : vector<16x1xf32> to vector<16x32xf32>
    %163 = arith.subf %148, %162 : vector<16x32xf32>
    %cst_49 = arith.constant 9.99999997E-7 : f32
    %164 = vector.broadcast %cst_49 : f32 to vector<16x1xf32>
    %165 = arith.addf %161, %164 : vector<16x1xf32>
    %166 = math.rsqrt %165 : vector<16x1xf32>
    %167 = vector.broadcast %166 : vector<16x1xf32> to vector<16x32xf32>
    %168 = arith.mulf %163, %167 : vector<16x32xf32>
    %169 = vector.broadcast %149 : vector<1x32xf32> to vector<16x32xf32>
    %170 = arith.mulf %168, %169 : vector<16x32xf32>
    %171 = vector.broadcast %150 : vector<1x32xf32> to vector<16x32xf32>
    %172 = arith.addf %170, %171 : vector<16x32xf32>
    %c0_50 = arith.constant 0 : index
    %c0_51 = arith.constant 0 : index
    %173 = vector.load %arg13[%c0_50, %c0_51] : memref<32x64xf32, #tpu.memory_space<vmem>>, vector<32x64xf32>
    %cst_52 = arith.constant dense<0.000000e+00> : vector<16x64xf32>
    %174 = tpu.matmul %172, %173, %cst_52 {dimension_numbers = #tpu.dot_dimension_numbers<[1], [0], [0], [1], [0, 0, 1, 1], [], []>} : vector<16x32xf32>, vector<32x64xf32>, vector<16x64xf32> -> vector<16x64xf32>
    %c0_53 = arith.constant 0 : index
    %c0_54 = arith.constant 0 : index
    %175 = vector.load %arg14[%c0_53, %c0_54] : memref<1x64xf32, #tpu.memory_space<vmem>>, vector<1x64xf32>
    %176 = vector.broadcast %175 : vector<1x64xf32> to vector<16x64xf32>
    %177 = arith.addf %174, %176 : vector<16x64xf32>
    %cst_55 = arith.constant 5.000000e-01 : f32
    %178 = vector.broadcast %cst_55 : f32 to vector<16x64xf32>
    %179 = arith.mulf %178, %177 : vector<16x64xf32>
    %cst_56 = arith.constant 4.471500e-02 : f32
    %180 = vector.broadcast %cst_56 : f32 to vector<16x64xf32>
    %181 = arith.mulf %180, %177 : vector<16x64xf32>
    %182 = arith.mulf %181, %177 : vector<16x64xf32>
    %183 = arith.mulf %182, %177 : vector<16x64xf32>
    %184 = arith.addf %177, %183 : vector<16x64xf32>
    %cst_57 = arith.constant 0.797884583 : f32
    %185 = vector.broadcast %cst_57 : f32 to vector<16x64xf32>
    %186 = arith.mulf %185, %184 : vector<16x64xf32>
    %187 = math.tanh %186 : vector<16x64xf32>
    %cst_58 = arith.constant 1.000000e+00 : f32
    %188 = vector.broadcast %cst_58 : f32 to vector<16x64xf32>
    %189 = arith.addf %188, %187 : vector<16x64xf32>
    %190 = arith.mulf %179, %189 : vector<16x64xf32>
    %c0_59 = arith.constant 0 : index
    %c0_60 = arith.constant 0 : index
    %191 = vector.load %arg15[%c0_59, %c0_60] : memref<64x32xf32, #tpu.memory_space<vmem>>, vector<64x32xf32>
    %cst_61 = arith.constant dense<0.000000e+00> : vector<16x32xf32>
    %192 = tpu.matmul %190, %191, %cst_61 {dimension_numbers = #tpu.dot_dimension_numbers<[1], [0], [0], [1], [0, 0, 1, 1], [], []>} : vector<16x64xf32>, vector<64x32xf32>, vector<16x32xf32> -> vector<16x32xf32>
    %c0_62 = arith.constant 0 : index
    %c0_63 = arith.constant 0 : index
    %193 = vector.load %arg16[%c0_62, %c0_63] : memref<1x32xf32, #tpu.memory_space<vmem>>, vector<1x32xf32>
    %194 = vector.broadcast %193 : vector<1x32xf32> to vector<16x32xf32>
    %195 = arith.addf %192, %194 : vector<16x32xf32>
    %196 = arith.addf %195, %172 : vector<16x32xf32>
    %c0_64 = arith.constant 0 : index
    %c0_65 = arith.constant 0 : index
    %197 = vector.load %arg17[%c0_64, %c0_65] : memref<1x32xf32, #tpu.memory_space<vmem>>, vector<1x32xf32>
    %c0_66 = arith.constant 0 : index
    %c0_67 = arith.constant 0 : index
    %198 = vector.load %arg18[%c0_66, %c0_67] : memref<1x32xf32, #tpu.memory_space<vmem>>, vector<1x32xf32>
    %cst_68 = arith.constant dense<0.000000e+00> : vector<16xf32>
    %199 = vector.multi_reduction <add>, %196, %cst_68 [1] : vector<16x32xf32> to vector<16xf32>
    %200 = vector.shape_cast %199 : vector<16xf32> to vector<16x1xf32>
    %cst_69 = arith.constant 3.200000e+01 : f32
    %201 = vector.broadcast %cst_69 : f32 to vector<16x1xf32>
    %202 = arith.divf %200, %201 : vector<16x1xf32>
    %203 = vector.broadcast %202 : vector<16x1xf32> to vector<16x32xf32>
    %204 = arith.subf %196, %203 : vector<16x32xf32>
    %205 = arith.mulf %204, %204 : vector<16x32xf32>
    %cst_70 = arith.constant dense<0.000000e+00> : vector<16xf32>
    %206 = vector.multi_reduction <add>, %205, %cst_70 [1] : vector<16x32xf32> to vector<16xf32>
    %207 = vector.shape_cast %206 : vector<16xf32> to vector<16x1xf32>
    %cst_71 = arith.constant 3.200000e+01 : f32
    %208 = vector.broadcast %cst_71 : f32 to vector<16x1xf32>
    %209 = arith.divf %207, %208 : vector<16x1xf32>
    %210 = vector.broadcast %202 : vector<16x1xf32> to vector<16x32xf32>
    %211 = arith.subf %196, %210 : vector<16x32xf32>
    %cst_72 = arith.constant 9.99999997E-7 : f32
    %212 = vector.broadcast %cst_72 : f32 to vector<16x1xf32>
    %213 = arith.addf %209, %212 : vector<16x1xf32>
    %214 = math.rsqrt %213 : vector<16x1xf32>
    %215 = vector.broadcast %214 : vector<16x1xf32> to vector<16x32xf32>
    %216 = arith.mulf %211, %215 : vector<16x32xf32>
    %217 = vector.broadcast %197 : vector<1x32xf32> to vector<16x32xf32>
    %218 = arith.mulf %216, %217 : vector<16x32xf32>
    %219 = vector.broadcast %198 : vector<1x32xf32> to vector<16x32xf32>
    %220 = arith.addf %218, %219 : vector<16x32xf32>
    %c0_73 = arith.constant 0 : index
    %c0_74 = arith.constant 0 : index
    %221 = vector.load %arg19[%c0_73, %c0_74] : memref<16x32xf32, #tpu.memory_space<vmem>>, vector<16x32xf32>
    tpu.vector_store %arg19[%c0_73, %c0_74], %220 {strides = array<i32>} : memref<16x32xf32, #tpu.memory_space<vmem>>, vector<16x32xf32>,
    return
  }
  func.func @transform_0(%arg0: i32) -> (i32, i32) {
    %c0_i32 = arith.constant 0 : i32
    %c0_i32_0 = arith.constant 0 : i32
    %c0_i32_1 = arith.constant 0 : i32
    return %c0_i32, %c0_i32_0 : i32, i32
  }
  func.func @transform_1(%arg0: i32) -> (i32, i32) {
    %c0_i32 = arith.constant 0 : i32
    %c0_i32_0 = arith.constant 0 : i32
    %c0_i32_1 = arith.constant 0 : i32
    return %c0_i32, %c0_i32_0 : i32, i32
  }
  func.func @transform_2(%arg0: i32) -> (i32, i32) {
    %c0_i32 = arith.constant 0 : i32
    %c0_i32_0 = arith.constant 0 : i32
    %c0_i32_1 = arith.constant 0 : i32
    return %c0_i32, %c0_i32_0 : i32, i32
  }
  func.func @transform_3(%arg0: i32) -> (i32, i32) {
    %c0_i32 = arith.constant 0 : i32
    %c0_i32_0 = arith.constant 0 : i32
    %c0_i32_1 = arith.constant 0 : i32
    return %c0_i32, %c0_i32_0 : i32, i32
  }
  func.func @transform_4(%arg0: i32) -> (i32, i32) {
    %c0_i32 = arith.constant 0 : i32
    %c0_i32_0 = arith.constant 0 : i32
    %c0_i32_1 = arith.constant 0 : i32
    return %c0_i32, %c0_i32_0 : i32, i32
  }
  func.func @transform_5(%arg0: i32) -> (i32, i32) {
    %c0_i32 = arith.constant 0 : i32
    %c0_i32_0 = arith.constant 0 : i32
    %c0_i32_1 = arith.constant 0 : i32
    return %c0_i32, %c0_i32_0 : i32, i32
  }
  func.func @transform_6(%arg0: i32) -> (i32, i32) {
    %c0_i32 = arith.constant 0 : i32
    %c0_i32_0 = arith.constant 0 : i32
    %c0_i32_1 = arith.constant 0 : i32
    return %c0_i32, %c0_i32_0 : i32, i32
  }
  func.func @transform_7(%arg0: i32) -> (i32, i32, i32) {
    %c0_i32 = arith.constant 0 : i32
    %c0_i32_0 = arith.constant 0 : i32
    %c0_i32_1 = arith.constant 0 : i32
    %c0_i32_2 = arith.constant 0 : i32
    return %c0_i32, %c0_i32_0, %c0_i32_1 : i32, i32, i32
  }
  func.func @transform_8(%arg0: i32) -> (i32, i32) {
    %c0_i32 = arith.constant 0 : i32
    %c0_i32_0 = arith.constant 0 : i32
    %c0_i32_1 = arith.constant 0 : i32
    return %c0_i32, %c0_i32_0 : i32, i32
  }
  func.func @transform_9(%arg0: i32) -> (i32, i32) {
    %c0_i32 = arith.constant 0 : i32
    %c0_i32_0 = arith.constant 0 : i32
    %c0_i32_1 = arith.constant 0 : i32
    return %c0_i32, %c0_i32_0 : i32, i32
  }
  func.func @transform_10(%arg0: i32) -> (i32, i32) {
    %c0_i32 = arith.constant 0 : i32
    %c0_i32_0 = arith.constant 0 : i32
    %c0_i32_1 = arith.constant 0 : i32
    return %c0_i32, %c0_i32_0 : i32, i32
  }
  func.func @transform_11(%arg0: i32) -> (i32, i32) {
    %c0_i32 = arith.constant 0 : i32
    %c0_i32_0 = arith.constant 0 : i32
    %c0_i32_1 = arith.constant 0 : i32
    return %c0_i32, %c0_i32_0 : i32, i32
  }
  func.func @transform_12(%arg0: i32) -> (i32, i32) {
    %c0_i32 = arith.constant 0 : i32
    %c0_i32_0 = arith.constant 0 : i32
    %c0_i32_1 = arith.constant 0 : i32
    return %c0_i32, %c0_i32_0 : i32, i32
  }
  func.func @transform_13(%arg0: i32) -> (i32, i32) {
    %c0_i32 = arith.constant 0 : i32
    %c0_i32_0 = arith.constant 0 : i32
    %c0_i32_1 = arith.constant 0 : i32
    return %c0_i32, %c0_i32_0 : i32, i32
  }
  func.func @transform_14(%arg0: i32) -> (i32, i32) {
    %c0_i32 = arith.constant 0 : i32
    %c0_i32_0 = arith.constant 0 : i32
    %c0_i32_1 = arith.constant 0 : i32
    return %c0_i32, %c0_i32_0 : i32, i32
  }
  func.func @transform_15(%arg0: i32) -> (i32, i32) {
    %c0_i32 = arith.constant 0 : i32
    %c0_i32_0 = arith.constant 0 : i32
    %c0_i32_1 = arith.constant 0 : i32
    return %c0_i32, %c0_i32_0 : i32, i32
  }
  func.func @transform_16(%arg0: i32) -> (i32, i32) {
    %c0_i32 = arith.constant 0 : i32
    %c0_i32_0 = arith.constant 0 : i32
    %c0_i32_1 = arith.constant 0 : i32
    return %c0_i32, %c0_i32_0 : i32, i32
  }
  func.func @transform_17(%arg0: i32) -> (i32, i32) {
    %c0_i32 = arith.constant 0 : i32
    %c0_i32_0 = arith.constant 0 : i32
    %c0_i32_1 = arith.constant 0 : i32
    return %c0_i32, %c0_i32_0 : i32, i32
  }
  func.func @transform_18(%arg0: i32) -> (i32, i32) {
    %c0_i32 = arith.constant 0 : i32
    %c0_i32_0 = arith.constant 0 : i32
    %c0_i32_1 = arith.constant 0 : i32
    return %c0_i32, %c0_i32_0 : i32, i32
  }
}

</mosaic_0001>

<llo_original>
// kernel: squeeze.4
$region0: #{squeeze.4}
  %s0 = inlined_call_operand.vmem [shape: f32[1,4,8], index: 0, kind: input, shape index: {}]
  %s1 = inlined_call_operand.vmem [shape: f32[1,32], index: 1, kind: output, shape index: {}]
  $region1: #{squeeze.4} parent=0
    #allocation0 [shape = 'u8[4096]{0}', space=vmem, size = 0x1000, scoped, tag = 'scoped mem for output reshape']
    #allocation1 [shape = 'u8[4096]{0}', space=vmem, size = 0x1000, scoped, tag = 'scoped mem for input reshape']
    %s3 = sshll.u32 1, 4
    %s4 = ssub.s32 %s3, 1
    %v5 = vld [vmem:[%s0] sm:%s4]
    %6 = vst [vmem:[#allocation1] sm:%s4] %v5
    %v7 = vld [vmem:[#allocation1] sm:$0x1]
    %vm8 = vcmask 64512
    %9 = vst.msk [vmem:[#allocation0] sm:$0x1] %vm8, %v7
    %s10 = scalar_lea.vmem [#allocation1], 3
    %v11 = vld [vmem:[%s10] sm:$0x1]
    %12 = vrot.lane.b32.xlu0 %v11, 24
    %v13 = vpop.permute.xlu0 %12
    %vm14 = vcmask 261312
    %15 = vst.msk [vmem:[#allocation0] sm:$0x1] %vm14, %v13
    %s16 = scalar_lea.vmem [#allocation1], 2
    %v17 = vld [vmem:[%s16] sm:$0x1]
    %18 = vrot.lane.b32.xlu0 %v17, 16
    %v19 = vpop.permute.xlu0 %18
    %vm20 = vcmask 195712
    %21 = vst.msk [vmem:[#allocation0] sm:$0x1] %vm20, %v19
    %s22 = scalar_lea.vmem [#allocation1], 1
    %v23 = vld [vmem:[%s22] sm:$0x1]
    %24 = vrot.lane.b32.xlu0 %v23, 8
    %v25 = vpop.permute.xlu0 %24
    %vm26 = vcmask 130112
    %27 = vst.msk [vmem:[#allocation0] sm:$0x1] %vm26, %v25
    %s29 = sshll.u32 1, 1
    %s30 = ssub.s32 %s29, 1
    %v32 = vld [vmem:[#allocation0] sm:%s30]
    %s33 = sshll.u32 1, 1
    %s34 = ssub.s32 %s33, 1
    %35 = vst [vmem:[%s1] sm:%s34] %v32

// kernel: decoder_forward.2
$region0: #{decoder_forward.2}
  #allocation0 [shape = 'u32[]', space=smem, size = 0x4, offset = 0x4, fixed_abs, tag = 'smem constant byte address 0x4 - core index']
  #allocation1 [shape = 'u32[144,128]{1,0:T(1,128)}', space=vmem, size = 0x12000, scoped, tag = 'internal scratch']
  %s0 = inlined_call_operand.vmem [shape: f32[16,32], index: 0, kind: input, shape index: {}]
  %s1 = inlined_call_operand.vmem [shape: f32[8,32], index: 1, kind: input, shape index: {}]
  %s2 = inlined_call_operand.vmem [shape: f32[32,128], index: 2, kind: input, shape index: {}]
  %s3 = inlined_call_operand.vmem [shape: f32[1,128], index: 3, kind: input, shape index: {}]
  %s4 = inlined_call_operand.vmem [shape: f32[32,32], index: 4, kind: input, shape index: {}]
  %s5 = inlined_call_operand.vmem [shape: f32[1,32], index: 5, kind: input, shape index: {}]
  %s6 = inlined_call_operand.vmem [shape: f32[1,32], index: 6, kind: input, shape index: {}]
  %s7 = inlined_call_operand.vmem [shape: f32[2,8,8], index: 7, kind: input, shape index: {}]
  %s8 = inlined_call_operand.vmem [shape: f32[32,32], index: 8, kind: input, shape index: {}]
  %s9 = inlined_call_operand.vmem [shape: f32[1,32], index: 9, kind: input, shape index: {}]
  %s10 = inlined_call_operand.vmem [shape: f32[1,32], index: 10, kind: input, shape index: {}]
  %s11 = inlined_call_operand.vmem [shape: f32[1,32], index: 11, kind: input, shape index: {}]
  %s12 = inlined_call_operand.vmem [shape: f32[32,64], index: 12, kind: input, shape index: {}]
  %s13 = inlined_call_operand.vmem [shape: f32[1,64], index: 13, kind: input, shape index: {}]
  %s14 = inlined_call_operand.vmem [shape: f32[64,32], index: 14, kind: input, shape index: {}]
  %s15 = inlined_call_operand.vmem [shape: f32[1,32], index: 15, kind: input, shape index: {}]
  %s16 = inlined_call_operand.vmem [shape: f32[1,32], index: 16, kind: input, shape index: {}]
  %s17 = inlined_call_operand.vmem [shape: f32[1,32], index: 17, kind: input, shape index: {}]
  %s18 = inlined_call_operand.vmem [shape: f32[16,32], index: 18, kind: output, shape index: {}]
  %s19 = sld [smem:[#allocation0]]
  $region82: #{decoder_forward.2} parent=0
    _
  %s21 = ssub.s32 1, %s19
  %s22 = scalar_select 0, %s21, %s19
  // Predicated region
  $region2: #{decoder_forward.2} parent=0 // pred_check
    _
  $region3: #{decoder_forward.2} parent=0 // pred_check_branch
    %24 = sbr.rel (0) target = $region5
  $region4: #{decoder_forward.2} parent=0 // pred_region
    _
  $region5: #{decoder_forward.2} parent=0 // pred_fallthru
    _
  // Predicated region
  $region6: #{decoder_forward.2} parent=0 // pred_check
    _
  $region7: #{decoder_forward.2} parent=0 // pred_check_branch
    %26 = sbr.rel (0) target = $region9
  $region8: #{decoder_forward.2} parent=0 // pred_region
    _
  $region9: #{decoder_forward.2} parent=0 // pred_fallthru
    _
  // Predicated region
  $region10: #{decoder_forward.2} parent=0 // pred_check
    _
  $region11: #{decoder_forward.2} parent=0 // pred_check_branch
    %28 = sbr.rel (0) target = $region13
  $region12: #{decoder_forward.2} parent=0 // pred_region
    _
  $region13: #{decoder_forward.2} parent=0 // pred_fallthru
    _
  // Predicated region
  $region14: #{decoder_forward.2} parent=0 // pred_check
    _
  $region15: #{decoder_forward.2} parent=0 // pred_check_branch
    %30 = sbr.rel (0) target = $region17
  $region16: #{decoder_forward.2} parent=0 // pred_region
    _
  $region17: #{decoder_forward.2} parent=0 // pred_fallthru
    _
  // Predicated region
  $region18: #{decoder_forward.2} parent=0 // pred_check
    _
  $region19: #{decoder_forward.2} parent=0 // pred_check_branch
    %32 = sbr.rel (0) target = $region21
  $region20: #{decoder_forward.2} parent=0 // pred_region
    _
  $region21: #{decoder_forward.2} parent=0 // pred_fallthru
    _
  // Predicated region
  $region22: #{decoder_forward.2} parent=0 // pred_check
    _
  $region23: #{decoder_forward.2} parent=0 // pred_check_branch
    %34 = sbr.rel (0) target = $region25
  $region24: #{decoder_forward.2} parent=0 // pred_region
    _
  $region25: #{decoder_forward.2} parent=0 // pred_fallthru
    _
  // Predicated region
  $region26: #{decoder_forward.2} parent=0 // pred_check
    _
  $region27: #{decoder_forward.2} parent=0 // pred_check_branch
    %36 = sbr.rel (0) target = $region29
  $region28: #{decoder_forward.2} parent=0 // pred_region
    _
  $region29: #{decoder_forward.2} parent=0 // pred_fallthru
    _
  // Predicated region
  $region30: #{decoder_forward.2} parent=0 // pred_check
    _
  $region31: #{decoder_forward.2} parent=0 // pred_check_branch
    %38 = sbr.rel (0) target = $region33
  $region32: #{decoder_forward.2} parent=0 // pred_region
    _
  $region33: #{decoder_forward.2} parent=0 // pred_fallthru
    _
  // Predicated region
  $region34: #{decoder_forward.2} parent=0 // pred_check
    _
  $region35: #{decoder_forward.2} parent=0 // pred_check_branch
    %40 = sbr.rel (0) target = $region37
  $region36: #{decoder_forward.2} parent=0 // pred_region
    _
  $region37: #{decoder_forward.2} parent=0 // pred_fallthru
    _
  // Predicated region
  $region38: #{decoder_forward.2} parent=0 // pred_check
    _
  $region39: #{decoder_forward.2} parent=0 // pred_check_branch
    %42 = sbr.rel (0) target = $region41
  $region40: #{decoder_forward.2} parent=0 // pred_region
    _
  $region41: #{decoder_forward.2} parent=0 // pred_fallthru
    _
  // Predicated region
  $region42: #{decoder_forward.2} parent=0 // pred_check
    _
  $region43: #{decoder_forward.2} parent=0 // pred_check_branch
    %44 = sbr.rel (0) target = $region45
  $region44: #{decoder_forward.2} parent=0 // pred_region
    _
  $region45: #{decoder_forward.2} parent=0 // pred_fallthru
    _
  // Predicated region
  $region46: #{decoder_forward.2} parent=0 // pred_check
    _
  $region47: #{decoder_forward.2} parent=0 // pred_check_branch
    %46 = sbr.rel (0) target = $region49
  $region48: #{decoder_forward.2} parent=0 // pred_region
    _
  $region49: #{decoder_forward.2} parent=0 // pred_fallthru
    _
  // Predicated region
  $region50: #{decoder_forward.2} parent=0 // pred_check
    _
  $region51: #{decoder_forward.2} parent=0 // pred_check_branch
    %48 = sbr.rel (0) target = $region53
  $region52: #{decoder_forward.2} parent=0 // pred_region
    _
  $region53: #{decoder_forward.2} parent=0 // pred_fallthru
    _
  // Predicated region
  $region54: #{decoder_forward.2} parent=0 // pred_check
    _
  $region55: #{decoder_forward.2} parent=0 // pred_check_branch
    %50 = sbr.rel (0) target = $region57
  $region56: #{decoder_forward.2} parent=0 // pred_region
    _
  $region57: #{decoder_forward.2} parent=0 // pred_fallthru
    _
  // Predicated region
  $region58: #{decoder_forward.2} parent=0 // pred_check
    _
  $region59: #{decoder_forward.2} parent=0 // pred_check_branch
    %52 = sbr.rel (0) target = $region61
  $region60: #{decoder_forward.2} parent=0 // pred_region
    _
  $region61: #{decoder_forward.2} parent=0 // pred_fallthru
    _
  // Predicated region
  $region62: #{decoder_forward.2} parent=0 // pred_check
    _
  $region63: #{decoder_forward.2} parent=0 // pred_check_branch
    %54 = sbr.rel (0) target = $region65
  $region64: #{decoder_forward.2} parent=0 // pred_region
    _
  $region65: #{decoder_forward.2} parent=0 // pred_fallthru
    _
  // Predicated region
  $region66: #{decoder_forward.2} parent=0 // pred_check
    _
  $region67: #{decoder_forward.2} parent=0 // pred_check_branch
    %56 = sbr.rel (0) target = $region69
  $region68: #{decoder_forward.2} parent=0 // pred_region
    _
  $region69: #{decoder_forward.2} parent=0 // pred_fallthru
    _
  // Predicated region
  $region70: #{decoder_forward.2} parent=0 // pred_check
    _
  $region71: #{decoder_forward.2} parent=0 // pred_check_branch
    %58 = sbr.rel (0) target = $region73
  $region72: #{decoder_forward.2} parent=0 // pred_region
    _
  $region73: #{decoder_forward.2} parent=0 // pred_fallthru
    _
  %v59 = vld [vmem:[%s0] sm:$0xff]
  %v60 = vld [vmem:[%s0 + $0x8] sm:$0xff]
  %v61 = vld [vmem:[%s1] sm:$0xff]
  %v62 = vld [vmem:[%s2] sm:$0xff]
  %v63 = vld [vmem:[%s2 + $0x8] sm:$0xff]
  %v64 = vld [vmem:[%s2 + $0x10] sm:$0xff]
  %v65 = vld [vmem:[%s2 + $0x18] sm:$0xff]
  %v66 = vld [vmem:[%s3] sm:$0x1]
  %v68 = vlaneseq
  %v69 = vshrl.u32 %v68, 7
  %v70 = vsub.s32 0, %v69
  %v71 = vrot.slane %v66, %v70
  %vm73 = vcmask 261120
  %v75 = vsel %vm73, %v59, 0
  %v78 = vsel %vm73, %v60, 0
  %80 = vmatprep.subr.mxu0 0.0
  %81 = vmatpush1.msra.mxu0 0.0
  %82 = vmatprep.subr.mxu0 0.0
  %83 = vmatpush1.msra.mxu0 0.0
  %84 = vmatprep.subr.mxu0 0.0
  %85 = vmatpush1.msra.mxu0 0.0
  %86 = vmatprep.subr.mxu0 0.0
  %87 = vmatpush1.msra.mxu0 0.0
  %88 = vmatprep.subr.mxu0 0.0
  %89 = vmatpush1.msra.mxu0 0.0
  %90 = vmatprep.subr.mxu0 0.0
  %91 = vmatpush1.msra.mxu0 0.0
  %92 = vmatprep.subr.mxu0 0.0
  %93 = vmatpush1.msra.mxu0 0.0
  %94 = vmatprep.subr.mxu0 0.0
  %95 = vmatpush1.msra.mxu0 0.0
  %96 = vmatprep.subr.mxu0 0.0
  %97 = vmatpush1.msra.mxu0 0.0
  %98 = vmatprep.subr.mxu0 0.0
  %99 = vmatpush1.msra.mxu0 0.0
  %100 = vmatprep.subr.mxu0 0.0
  %101 = vmatpush1.msra.mxu0 0.0
  %102 = vmatprep.subr.mxu0 0.0
  %103 = vmatpush1.msra.mxu0 0.0
  %104 = vmatprep.subr.mxu0 0.0
  %105 = vmatpush1.msra.mxu0 %v65
  %106 = vmatprep.subr.mxu0 0.0
  %107 = vmatpush1.msra.mxu0 %v64
  %108 = vmatprep.subr.mxu0 0.0
  %109 = vmatpush1.msra.mxu0 %v63
  %110 = vmatprep.subr.mxu0 0.0
  %111 = vmatpush1.msra.mxu0 %v62
  %112 = vmatprep.subr.mxu0 0.0
  %113 = vmatpush2.msra.mxu0 0.0
  %114 = vmatprep.subr.mxu0 0.0
  %115 = vmatpush2.msra.mxu0 0.0
  %116 = vmatprep.subr.mxu0 0.0
  %117 = vmatpush2.msra.mxu0 0.0
  %118 = vmatprep.subr.mxu0 0.0
  %119 = vmatpush2.msra.mxu0 0.0
  %120 = vmatprep.subr.mxu0 0.0
  %121 = vmatpush2.msra.mxu0 0.0
  %122 = vmatprep.subr.mxu0 0.0
  %123 = vmatpush2.msra.mxu0 0.0
  %124 = vmatprep.subr.mxu0 0.0
  %125 = vmatpush2.msra.mxu0 0.0
  %126 = vmatprep.subr.mxu0 0.0
  %127 = vmatpush2.msra.mxu0 0.0
  %128 = vmatprep.subr.mxu0 0.0
  %129 = vmatpush2.msra.mxu0 0.0
  %130 = vmatprep.subr.mxu0 0.0
  %131 = vmatpush2.msra.mxu0 0.0
  %132 = vmatprep.subr.mxu0 0.0
  %133 = vmatpush2.msra.mxu0 0.0
  %134 = vmatprep.subr.mxu0 0.0
  %135 = vmatpush2.msra.mxu0 0.0
  %136 = vmatprep.subr.mxu0 0.0
  %137 = vmatpush2.msra.mxu0 0.0
  %138 = vmatprep.subr.mxu0 0.0
  %139 = vmatpush2.msra.mxu0 0.0
  %140 = vmatprep.subr.mxu0 0.0
  %141 = vmatpush2.msra.mxu0 0.0
  %142 = vmatprep.subr.mxu0 0.0
  %143 = vmatpush2.msra.mxu0 0.0
  %144 = vmatprep.mubr.f32.mxu0 0.0
  %145 = vmatmul.mubr.f32.gmra.mxu0 %v75
  %v146 = vpop.f32.mrf.mxu0
  %v147 = vadd.f32 %v71, %v146
  %v148 = vpop.f32.mrf.mxu0
  %149 = vmatprep.mubr.f32.mxu0 0.0
  %150 = vmatmul.mubr.f32.gmra.mxu0 %v78
  %v151 = vpop.f32.mrf.mxu0
  %v152 = vadd.f32 %v71, %v151
  %v153 = vpop.f32.mrf.mxu0
  %154 = vdwg.mxu0
  %v155 = vld [vmem:[%s4] sm:$0xff]
  %v156 = vld [vmem:[%s4 + $0x8] sm:$0xff]
  %v157 = vld [vmem:[%s4 + $0x10] sm:$0xff]
  %v158 = vld [vmem:[%s4 + $0x18] sm:$0xff]
  %v160 = vsel %vm73, %v61, 0
  %162 = vmatprep.subr.mxu0 0.0
  %163 = vmatpush1.msra.mxu0 0.0
  %164 = vmatprep.subr.mxu0 0.0
  %165 = vmatpush1.msra.mxu0 0.0
  %166 = vmatprep.subr.mxu0 0.0
  %167 = vmatpush1.msra.mxu0 0.0
  %168 = vmatprep.subr.mxu0 0.0
  %169 = vmatpush1.msra.mxu0 0.0
  %170 = vmatprep.subr.mxu0 0.0
  %171 = vmatpush1.msra.mxu0 0.0
  %172 = vmatprep.subr.mxu0 0.0
  %173 = vmatpush1.msra.mxu0 0.0
  %174 = vmatprep.subr.mxu0 0.0
  %175 = vmatpush1.msra.mxu0 0.0
  %176 = vmatprep.subr.mxu0 0.0
  %177 = vmatpush1.msra.mxu0 0.0
  %178 = vmatprep.subr.mxu0 0.0
  %179 = vmatpush1.msra.mxu0 0.0
  %180 = vmatprep.subr.mxu0 0.0
  %181 = vmatpush1.msra.mxu0 0.0
  %182 = vmatprep.subr.mxu0 0.0
  %183 = vmatpush1.msra.mxu0 0.0
  %184 = vmatprep.subr.mxu0 0.0
  %185 = vmatpush1.msra.mxu0 0.0
  %186 = vmatprep.subr.mxu0 0.0
  %187 = vmatpush1.msra.mxu0 %v158
  %188 = vmatprep.subr.mxu0 0.0
  %189 = vmatpush1.msra.mxu0 %v157
  %190 = vmatprep.subr.mxu0 0.0
  %191 = vmatpush1.msra.mxu0 %v156
  %192 = vmatprep.subr.mxu0 0.0
  %193 = vmatpush1.msra.mxu0 %v155
  %194 = vmatprep.subr.mxu0 0.0
  %195 = vmatpush2.msra.mxu0 0.0
  %196 = vmatprep.subr.mxu0 0.0
  %197 = vmatpush2.msra.mxu0 0.0
  %198 = vmatprep.subr.mxu0 0.0
  %199 = vmatpush2.msra.mxu0 0.0
  %200 = vmatprep.subr.mxu0 0.0
  %201 = vmatpush2.msra.mxu0 0.0
  %202 = vmatprep.subr.mxu0 0.0
  %203 = vmatpush2.msra.mxu0 0.0
  %204 = vmatprep.subr.mxu0 0.0
  %205 = vmatpush2.msra.mxu0 0.0
  %206 = vmatprep.subr.mxu0 0.0
  %207 = vmatpush2.msra.mxu0 0.0
  %208 = vmatprep.subr.mxu0 0.0
  %209 = vmatpush2.msra.mxu0 0.0
  %210 = vmatprep.subr.mxu0 0.0
  %211 = vmatpush2.msra.mxu0 0.0
  %212 = vmatprep.subr.mxu0 0.0
  %213 = vmatpush2.msra.mxu0 0.0
  %214 = vmatprep.subr.mxu0 0.0
  %215 = vmatpush2.msra.mxu0 0.0
  %216 = vmatprep.subr.mxu0 0.0
  %217 = vmatpush2.msra.mxu0 0.0
  %218 = vmatprep.subr.mxu0 0.0
  %219 = vmatpush2.msra.mxu0 0.0
  %220 = vmatprep.subr.mxu0 0.0
  %221 = vmatpush2.msra.mxu0 0.0
  %222 = vmatprep.subr.mxu0 0.0
  %223 = vmatpush2.msra.mxu0 0.0
  %224 = vmatprep.subr.mxu0 0.0
  %225 = vmatpush2.msra.mxu0 0.0
  %226 = vmatprep.mubr.f32.mxu0 0.0
  %227 = vmatmul.mubr.f32.gmra.mxu0 %v160
  %v228 = vpop.f32.mrf.mxu0
  %v229 = vadd.f32 0.0, %v228
  %v230 = vpop.f32.mrf.mxu0
  %231 = vdwg.mxu0
  %v232 = vld [vmem:[%s5] sm:$0x1]
  %v234 = vlaneseq
  %v235 = vshrl.u32 %v234, 7
  %v236 = vsub.s32 0, %v235
  %v237 = vrot.slane %v232, %v236
  %v239 = vadd.f32 %v147, %v237
  %v240 = vadd.f32 %v152, %v237
  %v241 = vld [vmem:[%s6] sm:$0x1]
  %v243 = vlaneseq
  %v244 = vshrl.u32 %v243, 7
  %v245 = vsub.s32 0, %v244
  %v246 = vrot.slane %v241, %v245
  %v248 = vadd.f32 %v147, %v246
  %v249 = vadd.f32 %v152, %v246
  %vm250 = vcmask 64512
  %v252 = vsel %vm250, %v249, 0
  %v255 = vsel %vm250, %v229, 0
  %257 = vmatprep.subr.mxu0 0.0
  %258 = vmatpush1.xpose.msra.mxu0 0.0
  %259 = vmatprep.subr.mxu0 0.0
  %260 = vmatpush1.xpose.msra.mxu0 0.0
  %261 = vmatprep.subr.mxu0 0.0
  %262 = vmatpush1.xpose.msra.mxu0 0.0
  %263 = vmatprep.subr.mxu0 0.0
  %264 = vmatpush1.xpose.msra.mxu0 0.0
  %265 = vmatprep.subr.mxu0 0.0
  %266 = vmatpush1.xpose.msra.mxu0 0.0
  %267 = vmatprep.subr.mxu0 0.0
  %268 = vmatpush1.xpose.msra.mxu0 0.0
  %269 = vmatprep.subr.mxu0 0.0
  %270 = vmatpush1.xpose.msra.mxu0 0.0
  %271 = vmatprep.subr.mxu0 0.0
  %272 = vmatpush1.xpose.msra.mxu0 0.0
  %273 = vmatprep.subr.mxu0 0.0
  %274 = vmatpush1.xpose.msra.mxu0 0.0
  %275 = vmatprep.subr.mxu0 0.0
  %276 = vmatpush1.xpose.msra.mxu0 0.0
  %277 = vmatprep.subr.mxu0 0.0
  %278 = vmatpush1.xpose.msra.mxu0 0.0
  %279 = vmatprep.subr.mxu0 0.0
  %280 = vmatpush1.xpose.msra.mxu0 0.0
  %281 = vmatprep.subr.mxu0 0.0
  %282 = vmatpush1.xpose.msra.mxu0 0.0
  %283 = vmatprep.subr.mxu0 0.0
  %284 = vmatpush1.xpose.msra.mxu0 0.0
  %285 = vmatprep.subr.mxu0 0.0
  %286 = vmatpush1.xpose.msra.mxu0 0.0
  %287 = vmatprep.subr.mxu0 0.0
  %288 = vmatpush1.xpose.msra.mxu0 %v255
  %289 = vmatprep.subr.mxu0 0.0
  %290 = vmatpush2.xpose.msra.mxu0 0.0
  %291 = vmatprep.subr.mxu0 0.0
  %292 = vmatpush2.xpose.msra.mxu0 0.0
  %293 = vmatprep.subr.mxu0 0.0
  %294 = vmatpush2.xpose.msra.mxu0 0.0
  %295 = vmatprep.subr.mxu0 0.0
  %296 = vmatpush2.xpose.msra.mxu0 0.0
  %297 = vmatprep.subr.mxu0 0.0
  %298 = vmatpush2.xpose.msra.mxu0 0.0
  %299 = vmatprep.subr.mxu0 0.0
  %300 = vmatpush2.xpose.msra.mxu0 0.0
  %301 = vmatprep.subr.mxu0 0.0
  %302 = vmatpush2.xpose.msra.mxu0 0.0
  %303 = vmatprep.subr.mxu0 0.0
  %304 = vmatpush2.xpose.msra.mxu0 0.0
  %305 = vmatprep.subr.mxu0 0.0
  %306 = vmatpush2.xpose.msra.mxu0 0.0
  %307 = vmatprep.subr.mxu0 0.0
  %308 = vmatpush2.xpose.msra.mxu0 0.0
  %309 = vmatprep.subr.mxu0 0.0
  %310 = vmatpush2.xpose.msra.mxu0 0.0
  %311 = vmatprep.subr.mxu0 0.0
  %312 = vmatpush2.xpose.msra.mxu0 0.0
  %313 = vmatprep.subr.mxu0 0.0
  %314 = vmatpush2.xpose.msra.mxu0 0.0
  %315 = vmatprep.subr.mxu0 0.0
  %316 = vmatpush2.xpose.msra.mxu0 0.0
  %317 = vmatprep.subr.mxu0 0.0
  %318 = vmatpush2.xpose.msra.mxu0 0.0
  %319 = vmatprep.subr.mxu0 0.0
  %320 = vmatpush2.xpose.msra.mxu0 0.0
  %321 = vmatprep.mubr.f32.mxu0 0.0
  %322 = vmatmul.mubr.f32.gmra.mxu0 %v252
  %v323 = vpop.f32.mrf.mxu0
  %v324 = vadd.f32 0.0, %v323
  %v325 = vpop.f32.mrf.mxu0
  %326 = vdwg.mxu0
  %328 = vrot.lane.b32.xlu0 %v248, 120
  %v329 = vpop.permute.xlu0 %328
  %330 = vrot.lane.b32.xlu0 %v229, 120
  %v331 = vpop.permute.xlu0 %330
  %v332 = vsel %vm250, %v329, 0
  %v334 = vsel %vm250, %v331, 0
  %336 = vmatprep.subr.mxu0 0.0
  %337 = vmatpush1.xpose.msra.mxu0 0.0
  %338 = vmatprep.subr.mxu0 0.0
  %339 = vmatpush1.xpose.msra.mxu0 0.0
  %340 = vmatprep.subr.mxu0 0.0
  %341 = vmatpush1.xpose.msra.mxu0 0.0
  %342 = vmatprep.subr.mxu0 0.0
  %343 = vmatpush1.xpose.msra.mxu0 0.0
  %344 = vmatprep.subr.mxu0 0.0
  %345 = vmatpush1.xpose.msra.mxu0 0.0
  %346 = vmatprep.subr.mxu0 0.0
  %347 = vmatpush1.xpose.msra.mxu0 0.0
  %348 = vmatprep.subr.mxu0 0.0
  %349 = vmatpush1.xpose.msra.mxu0 0.0
  %350 = vmatprep.subr.mxu0 0.0
  %351 = vmatpush1.xpose.msra.mxu0 0.0
  %352 = vmatprep.subr.mxu0 0.0
  %353 = vmatpush1.xpose.msra.mxu0 0.0
  %354 = vmatprep.subr.mxu0 0.0
  %355 = vmatpush1.xpose.msra.mxu0 0.0
  %356 = vmatprep.subr.mxu0 0.0
  %357 = vmatpush1.xpose.msra.mxu0 0.0
  %358 = vmatprep.subr.mxu0 0.0
  %359 = vmatpush1.xpose.msra.mxu0 0.0
  %360 = vmatprep.subr.mxu0 0.0
  %361 = vmatpush1.xpose.msra.mxu0 0.0
  %362 = vmatprep.subr.mxu0 0.0
  %363 = vmatpush1.xpose.msra.mxu0 0.0
  %364 = vmatprep.subr.mxu0 0.0
  %365 = vmatpush1.xpose.msra.mxu0 0.0
  %366 = vmatprep.subr.mxu0 0.0
  %367 = vmatpush1.xpose.msra.mxu0 %v334
  %368 = vmatprep.subr.mxu0 0.0
  %369 = vmatpush2.xpose.msra.mxu0 0.0
  %370 = vmatprep.subr.mxu0 0.0
  %371 = vmatpush2.xpose.msra.mxu0 0.0
  %372 = vmatprep.subr.mxu0 0.0
  %373 = vmatpush2.xpose.msra.mxu0 0.0
  %374 = vmatprep.subr.mxu0 0.0
  %375 = vmatpush2.xpose.msra.mxu0 0.0
  %376 = vmatprep.subr.mxu0 0.0
  %377 = vmatpush2.xpose.msra.mxu0 0.0
  %378 = vmatprep.subr.mxu0 0.0
  %379 = vmatpush2.xpose.msra.mxu0 0.0
  %380 = vmatprep.subr.mxu0 0.0
  %381 = vmatpush2.xpose.msra.mxu0 0.0
  %382 = vmatprep.subr.mxu0 0.0
  %383 = vmatpush2.xpose.msra.mxu0 0.0
  %384 = vmatprep.subr.mxu0 0.0
  %385 = vmatpush2.xpose.msra.mxu0 0.0
  %386 = vmatprep.subr.mxu0 0.0
  %387 = vmatpush2.xpose.msra.mxu0 0.0
  %388 = vmatprep.subr.mxu0 0.0
  %389 = vmatpush2.xpose.msra.mxu0 0.0
  %390 = vmatprep.subr.mxu0 0.0
  %391 = vmatpush2.xpose.msra.mxu0 0.0
  %392 = vmatprep.subr.mxu0 0.0
  %393 = vmatpush2.xpose.msra.mxu0 0.0
  %394 = vmatprep.subr.mxu0 0.0
  %395 = vmatpush2.xpose.msra.mxu0 0.0
  %396 = vmatprep.subr.mxu0 0.0
  %397 = vmatpush2.xpose.msra.mxu0 0.0
  %398 = vmatprep.subr.mxu0 0.0
  %399 = vmatpush2.xpose.msra.mxu0 0.0
  %400 = vmatprep.mubr.f32.mxu0 0.0
  %401 = vmatmul.mubr.f32.gmra.mxu0 %v332
  %v402 = vpop.f32.mrf.mxu0
  %v403 = vadd.f32 0.0, %v402
  %v404 = vpop.f32.mrf.mxu0
  %405 = vdwg.mxu0
  %406 = vrot.lane.b32.xlu0 %v249, 120
  %v407 = vpop.permute.xlu0 %406
  %v408 = vsel %vm250, %v407, 0
  %410 = vmatprep.subr.mxu0 0.0
  %411 = vmatpush1.xpose.msra.mxu0 0.0
  %412 = vmatprep.subr.mxu0 0.0
  %413 = vmatpush1.xpose.msra.mxu0 0.0
  %414 = vmatprep.subr.mxu0 0.0
  %415 = vmatpush1.xpose.msra.mxu0 0.0
  %416 = vmatprep.subr.mxu0 0.0
  %417 = vmatpush1.xpose.msra.mxu0 0.0
  %418 = vmatprep.subr.mxu0 0.0
  %419 = vmatpush1.xpose.msra.mxu0 0.0
  %420 = vmatprep.subr.mxu0 0.0
  %421 = vmatpush1.xpose.msra.mxu0 0.0
  %422 = vmatprep.subr.mxu0 0.0
  %423 = vmatpush1.xpose.msra.mxu0 0.0
  %424 = vmatprep.subr.mxu0 0.0
  %425 = vmatpush1.xpose.msra.mxu0 0.0
  %426 = vmatprep.subr.mxu0 0.0
  %427 = vmatpush1.xpose.msra.mxu0 0.0
  %428 = vmatprep.subr.mxu0 0.0
  %429 = vmatpush1.xpose.msra.mxu0 0.0
  %430 = vmatprep.subr.mxu0 0.0
  %431 = vmatpush1.xpose.msra.mxu0 0.0
  %432 = vmatprep.subr.mxu0 0.0
  %433 = vmatpush1.xpose.msra.mxu0 0.0
  %434 = vmatprep.subr.mxu0 0.0
  %435 = vmatpush1.xpose.msra.mxu0 0.0
  %436 = vmatprep.subr.mxu0 0.0
  %437 = vmatpush1.xpose.msra.mxu0 0.0
  %438 = vmatprep.subr.mxu0 0.0
  %439 = vmatpush1.xpose.msra.mxu0 0.0
  %440 = vmatprep.subr.mxu0 0.0
  %441 = vmatpush1.xpose.msra.mxu0 %v334
  %442 = vmatprep.subr.mxu0 0.0
  %443 = vmatpush2.xpose.msra.mxu0 0.0
  %444 = vmatprep.subr.mxu0 0.0
  %445 = vmatpush2.xpose.msra.mxu0 0.0
  %446 = vmatprep.subr.mxu0 0.0
  %447 = vmatpush2.xpose.msra.mxu0 0.0
  %448 = vmatprep.subr.mxu0 0.0
  %449 = vmatpush2.xpose.msra.mxu0 0.0
  %450 = vmatprep.subr.mxu0 0.0
  %451 = vmatpush2.xpose.msra.mxu0 0.0
  %452 = vmatprep.subr.mxu0 0.0
  %453 = vmatpush2.xpose.msra.mxu0 0.0
  %454 = vmatprep.subr.mxu0 0.0
  %455 = vmatpush2.xpose.msra.mxu0 0.0
  %456 = vmatprep.subr.mxu0 0.0
  %457 = vmatpush2.xpose.msra.mxu0 0.0
  %458 = vmatprep.subr.mxu0 0.0
  %459 = vmatpush2.xpose.msra.mxu0 0.0
  %460 = vmatprep.subr.mxu0 0.0
  %461 = vmatpush2.xpose.msra.mxu0 0.0
  %462 = vmatprep.subr.mxu0 0.0
  %463 = vmatpush2.xpose.msra.mxu0 0.0
  %464 = vmatprep.subr.mxu0 0.0
  %465 = vmatpush2.xpose.msra.mxu0 0.0
  %466 = vmatprep.subr.mxu0 0.0
  %467 = vmatpush2.xpose.msra.mxu0 0.0
  %468 = vmatprep.subr.mxu0 0.0
  %469 = vmatpush2.xpose.msra.mxu0 0.0
  %470 = vmatprep.subr.mxu0 0.0
  %471 = vmatpush2.xpose.msra.mxu0 0.0
  %472 = vmatprep.subr.mxu0 0.0
  %473 = vmatpush2.xpose.msra.mxu0 0.0
  %474 = vmatprep.mubr.f32.mxu0 0.0
  %475 = vmatmul.mubr.f32.gmra.mxu0 %v408
  %v476 = vpop.f32.mrf.mxu0
  %v477 = vadd.f32 0.0, %v476
  %v478 = vpop.f32.mrf.mxu0
  %479 = vdwg.mxu0
  %480 = vrot.lane.b32.xlu0 %v248, 112
  %v481 = vpop.permute.xlu0 %480
  %482 = vrot.lane.b32.xlu0 %v229, 112
  %v483 = vpop.permute.xlu0 %482
  %v484 = vsel %vm250, %v481, 0
  %v486 = vsel %vm250, %v483, 0
  %488 = vmatprep.subr.mxu0 0.0
  %489 = vmatpush1.xpose.msra.mxu0 0.0
  %490 = vmatprep.subr.mxu0 0.0
  %491 = vmatpush1.xpose.msra.mxu0 0.0
  %492 = vmatprep.subr.mxu0 0.0
  %493 = vmatpush1.xpose.msra.mxu0 0.0
  %494 = vmatprep.subr.mxu0 0.0
  %495 = vmatpush1.xpose.msra.mxu0 0.0
  %496 = vmatprep.subr.mxu0 0.0
  %497 = vmatpush1.xpose.msra.mxu0 0.0
  %498 = vmatprep.subr.mxu0 0.0
  %499 = vmatpush1.xpose.msra.mxu0 0.0
  %500 = vmatprep.subr.mxu0 0.0
  %501 = vmatpush1.xpose.msra.mxu0 0.0
  %502 = vmatprep.subr.mxu0 0.0
  %503 = vmatpush1.xpose.msra.mxu0 0.0
  %504 = vmatprep.subr.mxu0 0.0
  %505 = vmatpush1.xpose.msra.mxu0 0.0
  %506 = vmatprep.subr.mxu0 0.0
  %507 = vmatpush1.xpose.msra.mxu0 0.0
  %508 = vmatprep.subr.mxu0 0.0
  %509 = vmatpush1.xpose.msra.mxu0 0.0
  %510 = vmatprep.subr.mxu0 0.0
  %511 = vmatpush1.xpose.msra.mxu0 0.0
  %512 = vmatprep.subr.mxu0 0.0
  %513 = vmatpush1.xpose.msra.mxu0 0.0
  %514 = vmatprep.subr.mxu0 0.0
  %515 = vmatpush1.xpose.msra.mxu0 0.0
  %516 = vmatprep.subr.mxu0 0.0
  %517 = vmatpush1.xpose.msra.mxu0 0.0
  %518 = vmatprep.subr.mxu0 0.0
  %519 = vmatpush1.xpose.msra.mxu0 %v486
  %520 = vmatprep.subr.mxu0 0.0
  %521 = vmatpush2.xpose.msra.mxu0 0.0
  %522 = vmatprep.subr.mxu0 0.0
  %523 = vmatpush2.xpose.msra.mxu0 0.0
  %524 = vmatprep.subr.mxu0 0.0
  %525 = vmatpush2.xpose.msra.mxu0 0.0
  %526 = vmatprep.subr.mxu0 0.0
  %527 = vmatpush2.xpose.msra.mxu0 0.0
  %528 = vmatprep.subr.mxu0 0.0
  %529 = vmatpush2.xpose.msra.mxu0 0.0
  %530 = vmatprep.subr.mxu0 0.0
  %531 = vmatpush2.xpose.msra.mxu0 0.0
  %532 = vmatprep.subr.mxu0 0.0
  %533 = vmatpush2.xpose.msra.mxu0 0.0
  %534 = vmatprep.subr.mxu0 0.0
  %535 = vmatpush2.xpose.msra.mxu0 0.0
  %536 = vmatprep.subr.mxu0 0.0
  %537 = vmatpush2.xpose.msra.mxu0 0.0
  %538 = vmatprep.subr.mxu0 0.0
  %539 = vmatpush2.xpose.msra.mxu0 0.0
  %540 = vmatprep.subr.mxu0 0.0
  %541 = vmatpush2.xpose.msra.mxu0 0.0
  %542 = vmatprep.subr.mxu0 0.0
  %543 = vmatpush2.xpose.msra.mxu0 0.0
  %544 = vmatprep.subr.mxu0 0.0
  %545 = vmatpush2.xpose.msra.mxu0 0.0
  %546 = vmatprep.subr.mxu0 0.0
  %547 = vmatpush2.xpose.msra.mxu0 0.0
  %548 = vmatprep.subr.mxu0 0.0
  %549 = vmatpush2.xpose.msra.mxu0 0.0
  %550 = vmatprep.subr.mxu0 0.0
  %551 = vmatpush2.xpose.msra.mxu0 0.0
  %552 = vmatprep.mubr.f32.mxu0 0.0
  %553 = vmatmul.mubr.f32.gmra.mxu0 %v484
  %v554 = vpop.f32.mrf.mxu0
  %v555 = vadd.f32 0.0, %v554
  %v556 = vpop.f32.mrf.mxu0
  %557 = vdwg.mxu0
  %558 = vrot.lane.b32.xlu0 %v249, 112
  %v559 = vpop.permute.xlu0 %558
  %v560 = vsel %vm250, %v559, 0
  %562 = vmatprep.subr.mxu0 0.0
  %563 = vmatpush1.xpose.msra.mxu0 0.0
  %564 = vmatprep.subr.mxu0 0.0
  %565 = vmatpush1.xpose.msra.mxu0 0.0
  %566 = vmatprep.subr.mxu0 0.0
  %567 = vmatpush1.xpose.msra.mxu0 0.0
  %568 = vmatprep.subr.mxu0 0.0
  %569 = vmatpush1.xpose.msra.mxu0 0.0
  %570 = vmatprep.subr.mxu0 0.0
  %571 = vmatpush1.xpose.msra.mxu0 0.0
  %572 = vmatprep.subr.mxu0 0.0
  %573 = vmatpush1.xpose.msra.mxu0 0.0
  %574 = vmatprep.subr.mxu0 0.0
  %575 = vmatpush1.xpose.msra.mxu0 0.0
  %576 = vmatprep.subr.mxu0 0.0
  %577 = vmatpush1.xpose.msra.mxu0 0.0
  %578 = vmatprep.subr.mxu0 0.0
  %579 = vmatpush1.xpose.msra.mxu0 0.0
  %580 = vmatprep.subr.mxu0 0.0
  %581 = vmatpush1.xpose.msra.mxu0 0.0
  %582 = vmatprep.subr.mxu0 0.0
  %583 = vmatpush1.xpose.msra.mxu0 0.0
  %584 = vmatprep.subr.mxu0 0.0
  %585 = vmatpush1.xpose.msra.mxu0 0.0
  %586 = vmatprep.subr.mxu0 0.0
  %587 = vmatpush1.xpose.msra.mxu0 0.0
  %588 = vmatprep.subr.mxu0 0.0
  %589 = vmatpush1.xpose.msra.mxu0 0.0
  %590 = vmatprep.subr.mxu0 0.0
  %591 = vmatpush1.xpose.msra.mxu0 0.0
  %592 = vmatprep.subr.mxu0 0.0
  %593 = vmatpush1.xpose.msra.mxu0 %v486
  %594 = vmatprep.subr.mxu0 0.0
  %595 = vmatpush2.xpose.msra.mxu0 0.0
  %596 = vmatprep.subr.mxu0 0.0
  %597 = vmatpush2.xpose.msra.mxu0 0.0
  %598 = vmatprep.subr.mxu0 0.0
  %599 = vmatpush2.xpose.msra.mxu0 0.0
  %600 = vmatprep.subr.mxu0 0.0
  %601 = vmatpush2.xpose.msra.mxu0 0.0
  %602 = vmatprep.subr.mxu0 0.0
  %603 = vmatpush2.xpose.msra.mxu0 0.0
  %604 = vmatprep.subr.mxu0 0.0
  %605 = vmatpush2.xpose.msra.mxu0 0.0
  %606 = vmatprep.subr.mxu0 0.0
  %607 = vmatpush2.xpose.msra.mxu0 0.0
  %608 = vmatprep.subr.mxu0 0.0
  %609 = vmatpush2.xpose.msra.mxu0 0.0
  %610 = vmatprep.subr.mxu0 0.0
  %611 = vmatpush2.xpose.msra.mxu0 0.0
  %612 = vmatprep.subr.mxu0 0.0
  %613 = vmatpush2.xpose.msra.mxu0 0.0
  %614 = vmatprep.subr.mxu0 0.0
  %615 = vmatpush2.xpose.msra.mxu0 0.0
  %616 = vmatprep.subr.mxu0 0.0
  %617 = vmatpush2.xpose.msra.mxu0 0.0
  %618 = vmatprep.subr.mxu0 0.0
  %619 = vmatpush2.xpose.msra.mxu0 0.0
  %620 = vmatprep.subr.mxu0 0.0
  %621 = vmatpush2.xpose.msra.mxu0 0.0
  %622 = vmatprep.subr.mxu0 0.0
  %623 = vmatpush2.xpose.msra.mxu0 0.0
  %624 = vmatprep.subr.mxu0 0.0
  %625 = vmatpush2.xpose.msra.mxu0 0.0
  %626 = vmatprep.mubr.f32.mxu0 0.0
  %627 = vmatmul.mubr.f32.gmra.mxu0 %v560
  %v628 = vpop.f32.mrf.mxu0
  %v629 = vadd.f32 0.0, %v628
  %v630 = vpop.f32.mrf.mxu0
  %631 = vdwg.mxu0
  %632 = vrot.lane.b32.xlu0 %v248, 104
  %v633 = vpop.permute.xlu0 %632
  %634 = vrot.lane.b32.xlu0 %v229, 104
  %v635 = vpop.permute.xlu0 %634
  %v636 = vsel %vm250, %v633, 0
  %v638 = vsel %vm250, %v635, 0
  %640 = vmatprep.subr.mxu0 0.0
  %641 = vmatpush1.xpose.msra.mxu0 0.0
  %642 = vmatprep.subr.mxu0 0.0
  %643 = vmatpush1.xpose.msra.mxu0 0.0
  %644 = vmatprep.subr.mxu0 0.0
  %645 = vmatpush1.xpose.msra.mxu0 0.0
  %646 = vmatprep.subr.mxu0 0.0
  %647 = vmatpush1.xpose.msra.mxu0 0.0
  %648 = vmatprep.subr.mxu0 0.0
  %649 = vmatpush1.xpose.msra.mxu0 0.0
  %650 = vmatprep.subr.mxu0 0.0
  %651 = vmatpush1.xpose.msra.mxu0 0.0
  %652 = vmatprep.subr.mxu0 0.0
  %653 = vmatpush1.xpose.msra.mxu0 0.0
  %654 = vmatprep.subr.mxu0 0.0
  %655 = vmatpush1.xpose.msra.mxu0 0.0
  %656 = vmatprep.subr.mxu0 0.0
  %657 = vmatpush1.xpose.msra.mxu0 0.0
  %658 = vmatprep.subr.mxu0 0.0
  %659 = vmatpush1.xpose.msra.mxu0 0.0
  %660 = vmatprep.subr.mxu0 0.0
  %661 = vmatpush1.xpose.msra.mxu0 0.0
  %662 = vmatprep.subr.mxu0 0.0
  %663 = vmatpush1.xpose.msra.mxu0 0.0
  %664 = vmatprep.subr.mxu0 0.0
  %665 = vmatpush1.xpose.msra.mxu0 0.0
  %666 = vmatprep.subr.mxu0 0.0
  %667 = vmatpush1.xpose.msra.mxu0 0.0
  %668 = vmatprep.subr.mxu0 0.0
  %669 = vmatpush1.xpose.msra.mxu0 0.0
  %670 = vmatprep.subr.mxu0 0.0
  %671 = vmatpush1.xpose.msra.mxu0 %v638
  %672 = vmatprep.subr.mxu0 0.0
  %673 = vmatpush2.xpose.msra.mxu0 0.0
  %674 = vmatprep.subr.mxu0 0.0
  %675 = vmatpush2.xpose.msra.mxu0 0.0
  %676 = vmatprep.subr.mxu0 0.0
  %677 = vmatpush2.xpose.msra.mxu0 0.0
  %678 = vmatprep.subr.mxu0 0.0
  %679 = vmatpush2.xpose.msra.mxu0 0.0
  %680 = vmatprep.subr.mxu0 0.0
  %681 = vmatpush2.xpose.msra.mxu0 0.0
  %682 = vmatprep.subr.mxu0 0.0
  %683 = vmatpush2.xpose.msra.mxu0 0.0
  %684 = vmatprep.subr.mxu0 0.0
  %685 = vmatpush2.xpose.msra.mxu0 0.0
  %686 = vmatprep.subr.mxu0 0.0
  %687 = vmatpush2.xpose.msra.mxu0 0.0
  %688 = vmatprep.subr.mxu0 0.0
  %689 = vmatpush2.xpose.msra.mxu0 0.0
  %690 = vmatprep.subr.mxu0 0.0
  %691 = vmatpush2.xpose.msra.mxu0 0.0
  %692 = vmatprep.subr.mxu0 0.0
  %693 = vmatpush2.xpose.msra.mxu0 0.0
  %694 = vmatprep.subr.mxu0 0.0
  %695 = vmatpush2.xpose.msra.mxu0 0.0
  %696 = vmatprep.subr.mxu0 0.0
  %697 = vmatpush2.xpose.msra.mxu0 0.0
  %698 = vmatprep.subr.mxu0 0.0
  %699 = vmatpush2.xpose.msra.mxu0 0.0
  %700 = vmatprep.subr.mxu0 0.0
  %701 = vmatpush2.xpose.msra.mxu0 0.0
  %702 = vmatprep.subr.mxu0 0.0
  %703 = vmatpush2.xpose.msra.mxu0 0.0
  %704 = vmatprep.mubr.f32.mxu0 0.0
  %705 = vmatmul.mubr.f32.gmra.mxu0 %v636
  %v706 = vpop.f32.mrf.mxu0
  %v707 = vadd.f32 0.0, %v706
  %v708 = vpop.f32.mrf.mxu0
  %709 = vdwg.mxu0
  %710 = vrot.lane.b32.xlu0 %v249, 104
  %v711 = vpop.permute.xlu0 %710
  %v712 = vsel %vm250, %v711, 0
  %714 = vmatprep.subr.mxu0 0.0
  %715 = vmatpush1.xpose.msra.mxu0 0.0
  %716 = vmatprep.subr.mxu0 0.0
  %717 = vmatpush1.xpose.msra.mxu0 0.0
  %718 = vmatprep.subr.mxu0 0.0
  %719 = vmatpush1.xpose.msra.mxu0 0.0
  %720 = vmatprep.subr.mxu0 0.0
  %721 = vmatpush1.xpose.msra.mxu0 0.0
  %722 = vmatprep.subr.mxu0 0.0
  %723 = vmatpush1.xpose.msra.mxu0 0.0
  %724 = vmatprep.subr.mxu0 0.0
  %725 = vmatpush1.xpose.msra.mxu0 0.0
  %726 = vmatprep.subr.mxu0 0.0
  %727 = vmatpush1.xpose.msra.mxu0 0.0
  %728 = vmatprep.subr.mxu0 0.0
  %729 = vmatpush1.xpose.msra.mxu0 0.0
  %730 = vmatprep.subr.mxu0 0.0
  %731 = vmatpush1.xpose.msra.mxu0 0.0
  %732 = vmatprep.subr.mxu0 0.0
  %733 = vmatpush1.xpose.msra.mxu0 0.0
  %734 = vmatprep.subr.mxu0 0.0
  %735 = vmatpush1.xpose.msra.mxu0 0.0
  %736 = vmatprep.subr.mxu0 0.0
  %737 = vmatpush1.xpose.msra.mxu0 0.0
  %738 = vmatprep.subr.mxu0 0.0
  %739 = vmatpush1.xpose.msra.mxu0 0.0
  %740 = vmatprep.subr.mxu0 0.0
  %741 = vmatpush1.xpose.msra.mxu0 0.0
  %742 = vmatprep.subr.mxu0 0.0
  %743 = vmatpush1.xpose.msra.mxu0 0.0
  %744 = vmatprep.subr.mxu0 0.0
  %745 = vmatpush1.xpose.msra.mxu0 %v638
  %746 = vmatprep.subr.mxu0 0.0
  %747 = vmatpush2.xpose.msra.mxu0 0.0
  %748 = vmatprep.subr.mxu0 0.0
  %749 = vmatpush2.xpose.msra.mxu0 0.0
  %750 = vmatprep.subr.mxu0 0.0
  %751 = vmatpush2.xpose.msra.mxu0 0.0
  %752 = vmatprep.subr.mxu0 0.0
  %753 = vmatpush2.xpose.msra.mxu0 0.0
  %754 = vmatprep.subr.mxu0 0.0
  %755 = vmatpush2.xpose.msra.mxu0 0.0
  %756 = vmatprep.subr.mxu0 0.0
  %757 = vmatpush2.xpose.msra.mxu0 0.0
  %758 = vmatprep.subr.mxu0 0.0
  %759 = vmatpush2.xpose.msra.mxu0 0.0
  %760 = vmatprep.subr.mxu0 0.0
  %761 = vmatpush2.xpose.msra.mxu0 0.0
  %762 = vmatprep.subr.mxu0 0.0
  %763 = vmatpush2.xpose.msra.mxu0 0.0
  %764 = vmatprep.subr.mxu0 0.0
  %765 = vmatpush2.xpose.msra.mxu0 0.0
  %766 = vmatprep.subr.mxu0 0.0
  %767 = vmatpush2.xpose.msra.mxu0 0.0
  %768 = vmatprep.subr.mxu0 0.0
  %769 = vmatpush2.xpose.msra.mxu0 0.0
  %770 = vmatprep.subr.mxu0 0.0
  %771 = vmatpush2.xpose.msra.mxu0 0.0
  %772 = vmatprep.subr.mxu0 0.0
  %773 = vmatpush2.xpose.msra.mxu0 0.0
  %774 = vmatprep.subr.mxu0 0.0
  %775 = vmatpush2.xpose.msra.mxu0 0.0
  %776 = vmatprep.subr.mxu0 0.0
  %777 = vmatpush2.xpose.msra.mxu0 0.0
  %778 = vmatprep.mubr.f32.mxu0 0.0
  %779 = vmatmul.mubr.f32.gmra.mxu0 %v712
  %v780 = vpop.f32.mrf.mxu0
  %v781 = vadd.f32 0.0, %v780
  %v782 = vpop.f32.mrf.mxu0
  %783 = vdwg.mxu0
  %v784 = vld [vmem:[%s7] sm:$0xff]
  %v785 = vld [vmem:[%s7 + $0x8] sm:$0xff]
  %787 = vrot.lane.b32.xlu0 %v147, 96
  %v788 = vpop.permute.xlu0 %787
  %v790 = vsel %vm250, %v239, 0
  %v792 = vsel %vm250, %v788, 0
  %794 = vmatprep.subr.mxu0 0.0
  %795 = vmatpush1.xpose.msra.mxu0 0.0
  %796 = vmatprep.subr.mxu0 0.0
  %797 = vmatpush1.xpose.msra.mxu0 0.0
  %798 = vmatprep.subr.mxu0 0.0
  %799 = vmatpush1.xpose.msra.mxu0 0.0
  %800 = vmatprep.subr.mxu0 0.0
  %801 = vmatpush1.xpose.msra.mxu0 0.0
  %802 = vmatprep.subr.mxu0 0.0
  %803 = vmatpush1.xpose.msra.mxu0 0.0
  %804 = vmatprep.subr.mxu0 0.0
  %805 = vmatpush1.xpose.msra.mxu0 0.0
  %806 = vmatprep.subr.mxu0 0.0
  %807 = vmatpush1.xpose.msra.mxu0 0.0
  %808 = vmatprep.subr.mxu0 0.0
  %809 = vmatpush1.xpose.msra.mxu0 0.0
  %810 = vmatprep.subr.mxu0 0.0
  %811 = vmatpush1.xpose.msra.mxu0 0.0
  %812 = vmatprep.subr.mxu0 0.0
  %813 = vmatpush1.xpose.msra.mxu0 0.0
  %814 = vmatprep.subr.mxu0 0.0
  %815 = vmatpush1.xpose.msra.mxu0 0.0
  %816 = vmatprep.subr.mxu0 0.0
  %817 = vmatpush1.xpose.msra.mxu0 0.0
  %818 = vmatprep.subr.mxu0 0.0
  %819 = vmatpush1.xpose.msra.mxu0 0.0
  %820 = vmatprep.subr.mxu0 0.0
  %821 = vmatpush1.xpose.msra.mxu0 0.0
  %822 = vmatprep.subr.mxu0 0.0
  %823 = vmatpush1.xpose.msra.mxu0 0.0
  %824 = vmatprep.subr.mxu0 0.0
  %825 = vmatpush1.xpose.msra.mxu0 %v792
  %826 = vmatprep.subr.mxu0 0.0
  %827 = vmatpush2.xpose.msra.mxu0 0.0
  %828 = vmatprep.subr.mxu0 0.0
  %829 = vmatpush2.xpose.msra.mxu0 0.0
  %830 = vmatprep.subr.mxu0 0.0
  %831 = vmatpush2.xpose.msra.mxu0 0.0
  %832 = vmatprep.subr.mxu0 0.0
  %833 = vmatpush2.xpose.msra.mxu0 0.0
  %834 = vmatprep.subr.mxu0 0.0
  %835 = vmatpush2.xpose.msra.mxu0 0.0
  %836 = vmatprep.subr.mxu0 0.0
  %837 = vmatpush2.xpose.msra.mxu0 0.0
  %838 = vmatprep.subr.mxu0 0.0
  %839 = vmatpush2.xpose.msra.mxu0 0.0
  %840 = vmatprep.subr.mxu0 0.0
  %841 = vmatpush2.xpose.msra.mxu0 0.0
  %842 = vmatprep.subr.mxu0 0.0
  %843 = vmatpush2.xpose.msra.mxu0 0.0
  %844 = vmatprep.subr.mxu0 0.0
  %845 = vmatpush2.xpose.msra.mxu0 0.0
  %846 = vmatprep.subr.mxu0 0.0
  %847 = vmatpush2.xpose.msra.mxu0 0.0
  %848 = vmatprep.subr.mxu0 0.0
  %849 = vmatpush2.xpose.msra.mxu0 0.0
  %850 = vmatprep.subr.mxu0 0.0
  %851 = vmatpush2.xpose.msra.mxu0 0.0
  %852 = vmatprep.subr.mxu0 0.0
  %853 = vmatpush2.xpose.msra.mxu0 0.0
  %854 = vmatprep.subr.mxu0 0.0
  %855 = vmatpush2.xpose.msra.mxu0 0.0
  %856 = vmatprep.subr.mxu0 0.0
  %857 = vmatpush2.xpose.msra.mxu0 0.0
  %858 = vmatprep.mubr.f32.mxu0 0.0
  %859 = vmatmul.mubr.f32.gmra.mxu0 %v790
  %v860 = vpop.f32.mrf.mxu0
  %v861 = vadd.f32 %v403, %v860
  %v862 = vpop.f32.mrf.mxu0
  %863 = vdwg.mxu0
  %865 = vrot.lane.b32.xlu0 %v152, 96
  %v866 = vpop.permute.xlu0 %865
  %v868 = vsel %vm250, %v240, 0
  %v870 = vsel %vm250, %v866, 0
  %872 = vmatprep.subr.mxu0 0.0
  %873 = vmatpush1.xpose.msra.mxu0 0.0
  %874 = vmatprep.subr.mxu0 0.0
  %875 = vmatpush1.xpose.msra.mxu0 0.0
  %876 = vmatprep.subr.mxu0 0.0
  %877 = vmatpush1.xpose.msra.mxu0 0.0
  %878 = vmatprep.subr.mxu0 0.0
  %879 = vmatpush1.xpose.msra.mxu0 0.0
  %880 = vmatprep.subr.mxu0 0.0
  %881 = vmatpush1.xpose.msra.mxu0 0.0
  %882 = vmatprep.subr.mxu0 0.0
  %883 = vmatpush1.xpose.msra.mxu0 0.0
  %884 = vmatprep.subr.mxu0 0.0
  %885 = vmatpush1.xpose.msra.mxu0 0.0
  %886 = vmatprep.subr.mxu0 0.0
  %887 = vmatpush1.xpose.msra.mxu0 0.0
  %888 = vmatprep.subr.mxu0 0.0
  %889 = vmatpush1.xpose.msra.mxu0 0.0
  %890 = vmatprep.subr.mxu0 0.0
  %891 = vmatpush1.xpose.msra.mxu0 0.0
  %892 = vmatprep.subr.mxu0 0.0
  %893 = vmatpush1.xpose.msra.mxu0 0.0
  %894 = vmatprep.subr.mxu0 0.0
  %895 = vmatpush1.xpose.msra.mxu0 0.0
  %896 = vmatprep.subr.mxu0 0.0
  %897 = vmatpush1.xpose.msra.mxu0 0.0
  %898 = vmatprep.subr.mxu0 0.0
  %899 = vmatpush1.xpose.msra.mxu0 0.0
  %900 = vmatprep.subr.mxu0 0.0
  %901 = vmatpush1.xpose.msra.mxu0 0.0
  %902 = vmatprep.subr.mxu0 0.0
  %903 = vmatpush1.xpose.msra.mxu0 %v870
  %904 = vmatprep.subr.mxu0 0.0
  %905 = vmatpush2.xpose.msra.mxu0 0.0
  %906 = vmatprep.subr.mxu0 0.0
  %907 = vmatpush2.xpose.msra.mxu0 0.0
  %908 = vmatprep.subr.mxu0 0.0
  %909 = vmatpush2.xpose.msra.mxu0 0.0
  %910 = vmatprep.subr.mxu0 0.0
  %911 = vmatpush2.xpose.msra.mxu0 0.0
  %912 = vmatprep.subr.mxu0 0.0
  %913 = vmatpush2.xpose.msra.mxu0 0.0
  %914 = vmatprep.subr.mxu0 0.0
  %915 = vmatpush2.xpose.msra.mxu0 0.0
  %916 = vmatprep.subr.mxu0 0.0
  %917 = vmatpush2.xpose.msra.mxu0 0.0
  %918 = vmatprep.subr.mxu0 0.0
  %919 = vmatpush2.xpose.msra.mxu0 0.0
  %920 = vmatprep.subr.mxu0 0.0
  %921 = vmatpush2.xpose.msra.mxu0 0.0
  %922 = vmatprep.subr.mxu0 0.0
  %923 = vmatpush2.xpose.msra.mxu0 0.0
  %924 = vmatprep.subr.mxu0 0.0
  %925 = vmatpush2.xpose.msra.mxu0 0.0
  %926 = vmatprep.subr.mxu0 0.0
  %927 = vmatpush2.xpose.msra.mxu0 0.0
  %928 = vmatprep.subr.mxu0 0.0
  %929 = vmatpush2.xpose.msra.mxu0 0.0
  %930 = vmatprep.subr.mxu0 0.0
  %931 = vmatpush2.xpose.msra.mxu0 0.0
  %932 = vmatprep.subr.mxu0 0.0
  %933 = vmatpush2.xpose.msra.mxu0 0.0
  %934 = vmatprep.subr.mxu0 0.0
  %935 = vmatpush2.xpose.msra.mxu0 0.0
  %936 = vmatprep.mubr.f32.mxu0 0.0
  %937 = vmatmul.mubr.f32.gmra.mxu0 %v868
  %v938 = vpop.f32.mrf.mxu0
  %v939 = vadd.f32 %v324, %v938
  %v940 = vpop.f32.mrf.mxu0
  %941 = vdwg.mxu0
  %v942 = vmul.f32 %v861, 0.35355338
  %v943 = vmul.f32 %v939, 0.35355338
  %v944 = vadd.f32 %v942, %v784
  %v945 = vadd.f32 %v943, %v785
  %946 = vrot.lane.b32.xlu0 %v239, 120
  %v947 = vpop.permute.xlu0 %946
  %948 = vrot.lane.b32.xlu0 %v147, 88
  %v949 = vpop.permute.xlu0 %948
  %v950 = vsel %vm250, %v947, 0
  %v952 = vsel %vm250, %v949, 0
  %954 = vmatprep.subr.mxu0 0.0
  %955 = vmatpush1.xpose.msra.mxu0 0.0
  %956 = vmatprep.subr.mxu0 0.0
  %957 = vmatpush1.xpose.msra.mxu0 0.0
  %958 = vmatprep.subr.mxu0 0.0
  %959 = vmatpush1.xpose.msra.mxu0 0.0
  %960 = vmatprep.subr.mxu0 0.0
  %961 = vmatpush1.xpose.msra.mxu0 0.0
  %962 = vmatprep.subr.mxu0 0.0
  %963 = vmatpush1.xpose.msra.mxu0 0.0
  %964 = vmatprep.subr.mxu0 0.0
  %965 = vmatpush1.xpose.msra.mxu0 0.0
  %966 = vmatprep.subr.mxu0 0.0
  %967 = vmatpush1.xpose.msra.mxu0 0.0
  %968 = vmatprep.subr.mxu0 0.0
  %969 = vmatpush1.xpose.msra.mxu0 0.0
  %970 = vmatprep.subr.mxu0 0.0
  %971 = vmatpush1.xpose.msra.mxu0 0.0
  %972 = vmatprep.subr.mxu0 0.0
  %973 = vmatpush1.xpose.msra.mxu0 0.0
  %974 = vmatprep.subr.mxu0 0.0
  %975 = vmatpush1.xpose.msra.mxu0 0.0
  %976 = vmatprep.subr.mxu0 0.0
  %977 = vmatpush1.xpose.msra.mxu0 0.0
  %978 = vmatprep.subr.mxu0 0.0
  %979 = vmatpush1.xpose.msra.mxu0 0.0
  %980 = vmatprep.subr.mxu0 0.0
  %981 = vmatpush1.xpose.msra.mxu0 0.0
  %982 = vmatprep.subr.mxu0 0.0
  %983 = vmatpush1.xpose.msra.mxu0 0.0
  %984 = vmatprep.subr.mxu0 0.0
  %985 = vmatpush1.xpose.msra.mxu0 %v952
  %986 = vmatprep.subr.mxu0 0.0
  %987 = vmatpush2.xpose.msra.mxu0 0.0
  %988 = vmatprep.subr.mxu0 0.0
  %989 = vmatpush2.xpose.msra.mxu0 0.0
  %990 = vmatprep.subr.mxu0 0.0
  %991 = vmatpush2.xpose.msra.mxu0 0.0
  %992 = vmatprep.subr.mxu0 0.0
  %993 = vmatpush2.xpose.msra.mxu0 0.0
  %994 = vmatprep.subr.mxu0 0.0
  %995 = vmatpush2.xpose.msra.mxu0 0.0
  %996 = vmatprep.subr.mxu0 0.0
  %997 = vmatpush2.xpose.msra.mxu0 0.0
  %998 = vmatprep.subr.mxu0 0.0
  %999 = vmatpush2.xpose.msra.mxu0 0.0
  %1000 = vmatprep.subr.mxu0 0.0
  %1001 = vmatpush2.xpose.msra.mxu0 0.0
  %1002 = vmatprep.subr.mxu0 0.0
  %1003 = vmatpush2.xpose.msra.mxu0 0.0
  %1004 = vmatprep.subr.mxu0 0.0
  %1005 = vmatpush2.xpose.msra.mxu0 0.0
  %1006 = vmatprep.subr.mxu0 0.0
  %1007 = vmatpush2.xpose.msra.mxu0 0.0
  %1008 = vmatprep.subr.mxu0 0.0
  %1009 = vmatpush2.xpose.msra.mxu0 0.0
  %1010 = vmatprep.subr.mxu0 0.0
  %1011 = vmatpush2.xpose.msra.mxu0 0.0
  %1012 = vmatprep.subr.mxu0 0.0
  %1013 = vmatpush2.xpose.msra.mxu0 0.0
  %1014 = vmatprep.subr.mxu0 0.0
  %1015 = vmatpush2.xpose.msra.mxu0 0.0
  %1016 = vmatprep.subr.mxu0 0.0
  %1017 = vmatpush2.xpose.msra.mxu0 0.0
  %1018 = vmatprep.mubr.f32.mxu0 0.0
  %1019 = vmatmul.mubr.f32.gmra.mxu0 %v950
  %v1020 = vpop.f32.mrf.mxu0
  %v1021 = vadd.f32 %v555, %v1020
  %v1022 = vpop.f32.mrf.mxu0
  %1023 = vdwg.mxu0
  %1024 = vrot.lane.b32.xlu0 %v240, 120
  %v1025 = vpop.permute.xlu0 %1024
  %1026 = vrot.lane.b32.xlu0 %v152, 88
  %v1027 = vpop.permute.xlu0 %1026
  %v1028 = vsel %vm250, %v1025, 0
  %v1030 = vsel %vm250, %v1027, 0
  %1032 = vmatprep.subr.mxu0 0.0
  %1033 = vmatpush1.xpose.msra.mxu0 0.0
  %1034 = vmatprep.subr.mxu0 0.0
  %1035 = vmatpush1.xpose.msra.mxu0 0.0
  %1036 = vmatprep.subr.mxu0 0.0
  %1037 = vmatpush1.xpose.msra.mxu0 0.0
  %1038 = vmatprep.subr.mxu0 0.0
  %1039 = vmatpush1.xpose.msra.mxu0 0.0
  %1040 = vmatprep.subr.mxu0 0.0
  %1041 = vmatpush1.xpose.msra.mxu0 0.0
  %1042 = vmatprep.subr.mxu0 0.0
  %1043 = vmatpush1.xpose.msra.mxu0 0.0
  %1044 = vmatprep.subr.mxu0 0.0
  %1045 = vmatpush1.xpose.msra.mxu0 0.0
  %1046 = vmatprep.subr.mxu0 0.0
  %1047 = vmatpush1.xpose.msra.mxu0 0.0
  %1048 = vmatprep.subr.mxu0 0.0
  %1049 = vmatpush1.xpose.msra.mxu0 0.0
  %1050 = vmatprep.subr.mxu0 0.0
  %1051 = vmatpush1.xpose.msra.mxu0 0.0
  %1052 = vmatprep.subr.mxu0 0.0
  %1053 = vmatpush1.xpose.msra.mxu0 0.0
  %1054 = vmatprep.subr.mxu0 0.0
  %1055 = vmatpush1.xpose.msra.mxu0 0.0
  %1056 = vmatprep.subr.mxu0 0.0
  %1057 = vmatpush1.xpose.msra.mxu0 0.0
  %1058 = vmatprep.subr.mxu0 0.0
  %1059 = vmatpush1.xpose.msra.mxu0 0.0
  %1060 = vmatprep.subr.mxu0 0.0
  %1061 = vmatpush1.xpose.msra.mxu0 0.0
  %1062 = vmatprep.subr.mxu0 0.0
  %1063 = vmatpush1.xpose.msra.mxu0 %v1030
  %1064 = vmatprep.subr.mxu0 0.0
  %1065 = vmatpush2.xpose.msra.mxu0 0.0
  %1066 = vmatprep.subr.mxu0 0.0
  %1067 = vmatpush2.xpose.msra.mxu0 0.0
  %1068 = vmatprep.subr.mxu0 0.0
  %1069 = vmatpush2.xpose.msra.mxu0 0.0
  %1070 = vmatprep.subr.mxu0 0.0
  %1071 = vmatpush2.xpose.msra.mxu0 0.0
  %1072 = vmatprep.subr.mxu0 0.0
  %1073 = vmatpush2.xpose.msra.mxu0 0.0
  %1074 = vmatprep.subr.mxu0 0.0
  %1075 = vmatpush2.xpose.msra.mxu0 0.0
  %1076 = vmatprep.subr.mxu0 0.0
  %1077 = vmatpush2.xpose.msra.mxu0 0.0
  %1078 = vmatprep.subr.mxu0 0.0
  %1079 = vmatpush2.xpose.msra.mxu0 0.0
  %1080 = vmatprep.subr.mxu0 0.0
  %1081 = vmatpush2.xpose.msra.mxu0 0.0
  %1082 = vmatprep.subr.mxu0 0.0
  %1083 = vmatpush2.xpose.msra.mxu0 0.0
  %1084 = vmatprep.subr.mxu0 0.0
  %1085 = vmatpush2.xpose.msra.mxu0 0.0
  %1086 = vmatprep.subr.mxu0 0.0
  %1087 = vmatpush2.xpose.msra.mxu0 0.0
  %1088 = vmatprep.subr.mxu0 0.0
  %1089 = vmatpush2.xpose.msra.mxu0 0.0
  %1090 = vmatprep.subr.mxu0 0.0
  %1091 = vmatpush2.xpose.msra.mxu0 0.0
  %1092 = vmatprep.subr.mxu0 0.0
  %1093 = vmatpush2.xpose.msra.mxu0 0.0
  %1094 = vmatprep.subr.mxu0 0.0
  %1095 = vmatpush2.xpose.msra.mxu0 0.0
  %1096 = vmatprep.mubr.f32.mxu0 0.0
  %1097 = vmatmul.mubr.f32.gmra.mxu0 %v1028
  %v1098 = vpop.f32.mrf.mxu0
  %v1099 = vadd.f32 %v477, %v1098
  %v1100 = vpop.f32.mrf.mxu0
  %1101 = vdwg.mxu0
  %v1102 = vmul.f32 %v1021, 0.35355338
  %v1103 = vmul.f32 %v1099, 0.35355338
  %v1104 = vadd.f32 %v1102, %v784
  %v1105 = vadd.f32 %v1103, %v785
  %1106 = vrot.lane.b32.xlu0 %v239, 112
  %v1107 = vpop.permute.xlu0 %1106
  %1108 = vrot.lane.b32.xlu0 %v147, 80
  %v1109 = vpop.permute.xlu0 %1108
  %v1110 = vsel %vm250, %v1107, 0
  %v1112 = vsel %vm250, %v1109, 0
  %1114 = vmatprep.subr.mxu0 0.0
  %1115 = vmatpush1.xpose.msra.mxu0 0.0
  %1116 = vmatprep.subr.mxu0 0.0
  %1117 = vmatpush1.xpose.msra.mxu0 0.0
  %1118 = vmatprep.subr.mxu0 0.0
  %1119 = vmatpush1.xpose.msra.mxu0 0.0
  %1120 = vmatprep.subr.mxu0 0.0
  %1121 = vmatpush1.xpose.msra.mxu0 0.0
  %1122 = vmatprep.subr.mxu0 0.0
  %1123 = vmatpush1.xpose.msra.mxu0 0.0
  %1124 = vmatprep.subr.mxu0 0.0
  %1125 = vmatpush1.xpose.msra.mxu0 0.0
  %1126 = vmatprep.subr.mxu0 0.0
  %1127 = vmatpush1.xpose.msra.mxu0 0.0
  %1128 = vmatprep.subr.mxu0 0.0
  %1129 = vmatpush1.xpose.msra.mxu0 0.0
  %1130 = vmatprep.subr.mxu0 0.0
  %1131 = vmatpush1.xpose.msra.mxu0 0.0
  %1132 = vmatprep.subr.mxu0 0.0
  %1133 = vmatpush1.xpose.msra.mxu0 0.0
  %1134 = vmatprep.subr.mxu0 0.0
  %1135 = vmatpush1.xpose.msra.mxu0 0.0
  %1136 = vmatprep.subr.mxu0 0.0
  %1137 = vmatpush1.xpose.msra.mxu0 0.0
  %1138 = vmatprep.subr.mxu0 0.0
  %1139 = vmatpush1.xpose.msra.mxu0 0.0
  %1140 = vmatprep.subr.mxu0 0.0
  %1141 = vmatpush1.xpose.msra.mxu0 0.0
  %1142 = vmatprep.subr.mxu0 0.0
  %1143 = vmatpush1.xpose.msra.mxu0 0.0
  %1144 = vmatprep.subr.mxu0 0.0
  %1145 = vmatpush1.xpose.msra.mxu0 %v1112
  %1146 = vmatprep.subr.mxu0 0.0
  %1147 = vmatpush2.xpose.msra.mxu0 0.0
  %1148 = vmatprep.subr.mxu0 0.0
  %1149 = vmatpush2.xpose.msra.mxu0 0.0
  %1150 = vmatprep.subr.mxu0 0.0
  %1151 = vmatpush2.xpose.msra.mxu0 0.0
  %1152 = vmatprep.subr.mxu0 0.0
  %1153 = vmatpush2.xpose.msra.mxu0 0.0
  %1154 = vmatprep.subr.mxu0 0.0
  %1155 = vmatpush2.xpose.msra.mxu0 0.0
  %1156 = vmatprep.subr.mxu0 0.0
  %1157 = vmatpush2.xpose.msra.mxu0 0.0
  %1158 = vmatprep.subr.mxu0 0.0
  %1159 = vmatpush2.xpose.msra.mxu0 0.0
  %1160 = vmatprep.subr.mxu0 0.0
  %1161 = vmatpush2.xpose.msra.mxu0 0.0
  %1162 = vmatprep.subr.mxu0 0.0
  %1163 = vmatpush2.xpose.msra.mxu0 0.0
  %1164 = vmatprep.subr.mxu0 0.0
  %1165 = vmatpush2.xpose.msra.mxu0 0.0
  %1166 = vmatprep.subr.mxu0 0.0
  %1167 = vmatpush2.xpose.msra.mxu0 0.0
  %1168 = vmatprep.subr.mxu0 0.0
  %1169 = vmatpush2.xpose.msra.mxu0 0.0
  %1170 = vmatprep.subr.mxu0 0.0
  %1171 = vmatpush2.xpose.msra.mxu0 0.0
  %1172 = vmatprep.subr.mxu0 0.0
  %1173 = vmatpush2.xpose.msra.mxu0 0.0
  %1174 = vmatprep.subr.mxu0 0.0
  %1175 = vmatpush2.xpose.msra.mxu0 0.0
  %1176 = vmatprep.subr.mxu0 0.0
  %1177 = vmatpush2.xpose.msra.mxu0 0.0
  %1178 = vmatprep.mubr.f32.mxu0 0.0
  %1179 = vmatmul.mubr.f32.gmra.mxu0 %v1110
  %v1180 = vpop.f32.mrf.mxu0
  %v1181 = vadd.f32 %v707, %v1180
  %v1182 = vpop.f32.mrf.mxu0
  %1183 = vdwg.mxu0
  %1184 = vrot.lane.b32.xlu0 %v240, 112
  %v1185 = vpop.permute.xlu0 %1184
  %1186 = vrot.lane.b32.xlu0 %v152, 80
  %v1187 = vpop.permute.xlu0 %1186
  %v1188 = vsel %vm250, %v1185, 0
  %v1190 = vsel %vm250, %v1187, 0
  %1192 = vmatprep.subr.mxu0 0.0
  %1193 = vmatpush1.xpose.msra.mxu0 0.0
  %1194 = vmatprep.subr.mxu0 0.0
  %1195 = vmatpush1.xpose.msra.mxu0 0.0
  %1196 = vmatprep.subr.mxu0 0.0
  %1197 = vmatpush1.xpose.msra.mxu0 0.0
  %1198 = vmatprep.subr.mxu0 0.0
  %1199 = vmatpush1.xpose.msra.mxu0 0.0
  %1200 = vmatprep.subr.mxu0 0.0
  %1201 = vmatpush1.xpose.msra.mxu0 0.0
  %1202 = vmatprep.subr.mxu0 0.0
  %1203 = vmatpush1.xpose.msra.mxu0 0.0
  %1204 = vmatprep.subr.mxu0 0.0
  %1205 = vmatpush1.xpose.msra.mxu0 0.0
  %1206 = vmatprep.subr.mxu0 0.0
  %1207 = vmatpush1.xpose.msra.mxu0 0.0
  %1208 = vmatprep.subr.mxu0 0.0
  %1209 = vmatpush1.xpose.msra.mxu0 0.0
  %1210 = vmatprep.subr.mxu0 0.0
  %1211 = vmatpush1.xpose.msra.mxu0 0.0
  %1212 = vmatprep.subr.mxu0 0.0
  %1213 = vmatpush1.xpose.msra.mxu0 0.0
  %1214 = vmatprep.subr.mxu0 0.0
  %1215 = vmatpush1.xpose.msra.mxu0 0.0
  %1216 = vmatprep.subr.mxu0 0.0
  %1217 = vmatpush1.xpose.msra.mxu0 0.0
  %1218 = vmatprep.subr.mxu0 0.0
  %1219 = vmatpush1.xpose.msra.mxu0 0.0
  %1220 = vmatprep.subr.mxu0 0.0
  %1221 = vmatpush1.xpose.msra.mxu0 0.0
  %1222 = vmatprep.subr.mxu0 0.0
  %1223 = vmatpush1.xpose.msra.mxu0 %v1190
  %1224 = vmatprep.subr.mxu0 0.0
  %1225 = vmatpush2.xpose.msra.mxu0 0.0
  %1226 = vmatprep.subr.mxu0 0.0
  %1227 = vmatpush2.xpose.msra.mxu0 0.0
  %1228 = vmatprep.subr.mxu0 0.0
  %1229 = vmatpush2.xpose.msra.mxu0 0.0
  %1230 = vmatprep.subr.mxu0 0.0
  %1231 = vmatpush2.xpose.msra.mxu0 0.0
  %1232 = vmatprep.subr.mxu0 0.0
  %1233 = vmatpush2.xpose.msra.mxu0 0.0
  %1234 = vmatprep.subr.mxu0 0.0
  %1235 = vmatpush2.xpose.msra.mxu0 0.0
  %1236 = vmatprep.subr.mxu0 0.0
  %1237 = vmatpush2.xpose.msra.mxu0 0.0
  %1238 = vmatprep.subr.mxu0 0.0
  %1239 = vmatpush2.xpose.msra.mxu0 0.0
  %1240 = vmatprep.subr.mxu0 0.0
  %1241 = vmatpush2.xpose.msra.mxu0 0.0
  %1242 = vmatprep.subr.mxu0 0.0
  %1243 = vmatpush2.xpose.msra.mxu0 0.0
  %1244 = vmatprep.subr.mxu0 0.0
  %1245 = vmatpush2.xpose.msra.mxu0 0.0
  %1246 = vmatprep.subr.mxu0 0.0
  %1247 = vmatpush2.xpose.msra.mxu0 0.0
  %1248 = vmatprep.subr.mxu0 0.0
  %1249 = vmatpush2.xpose.msra.mxu0 0.0
  %1250 = vmatprep.subr.mxu0 0.0
  %1251 = vmatpush2.xpose.msra.mxu0 0.0
  %1252 = vmatprep.subr.mxu0 0.0
  %1253 = vmatpush2.xpose.msra.mxu0 0.0
  %1254 = vmatprep.subr.mxu0 0.0
  %1255 = vmatpush2.xpose.msra.mxu0 0.0
  %1256 = vmatprep.mubr.f32.mxu0 0.0
  %1257 = vmatmul.mubr.f32.gmra.mxu0 %v1188
  %v1258 = vpop.f32.mrf.mxu0
  %v1259 = vadd.f32 %v629, %v1258
  %v1260 = vpop.f32.mrf.mxu0
  %1261 = vdwg.mxu0
  %v1262 = vmul.f32 %v1181, 0.35355338
  %v1263 = vmul.f32 %v1259, 0.35355338
  %v1264 = vadd.f32 %v1262, %v784
  %v1265 = vadd.f32 %v1263, %v785
  %1266 = vrot.lane.b32.xlu0 %v239, 104
  %v1267 = vpop.permute.xlu0 %1266
  %1268 = vrot.lane.b32.xlu0 %v147, 72
  %v1269 = vpop.permute.xlu0 %1268
  %v1270 = vsel %vm250, %v1267, 0
  %v1272 = vsel %vm250, %v1269, 0
  %1274 = vmatprep.subr.mxu0 0.0
  %1275 = vmatpush1.xpose.msra.mxu0 0.0
  %1276 = vmatprep.subr.mxu0 0.0
  %1277 = vmatpush1.xpose.msra.mxu0 0.0
  %1278 = vmatprep.subr.mxu0 0.0
  %1279 = vmatpush1.xpose.msra.mxu0 0.0
  %1280 = vmatprep.subr.mxu0 0.0
  %1281 = vmatpush1.xpose.msra.mxu0 0.0
  %1282 = vmatprep.subr.mxu0 0.0
  %1283 = vmatpush1.xpose.msra.mxu0 0.0
  %1284 = vmatprep.subr.mxu0 0.0
  %1285 = vmatpush1.xpose.msra.mxu0 0.0
  %1286 = vmatprep.subr.mxu0 0.0
  %1287 = vmatpush1.xpose.msra.mxu0 0.0
  %1288 = vmatprep.subr.mxu0 0.0
  %1289 = vmatpush1.xpose.msra.mxu0 0.0
  %1290 = vmatprep.subr.mxu0 0.0
  %1291 = vmatpush1.xpose.msra.mxu0 0.0
  %1292 = vmatprep.subr.mxu0 0.0
  %1293 = vmatpush1.xpose.msra.mxu0 0.0
  %1294 = vmatprep.subr.mxu0 0.0
  %1295 = vmatpush1.xpose.msra.mxu0 0.0
  %1296 = vmatprep.subr.mxu0 0.0
  %1297 = vmatpush1.xpose.msra.mxu0 0.0
  %1298 = vmatprep.subr.mxu0 0.0
  %1299 = vmatpush1.xpose.msra.mxu0 0.0
  %1300 = vmatprep.subr.mxu0 0.0
  %1301 = vmatpush1.xpose.msra.mxu0 0.0
  %1302 = vmatprep.subr.mxu0 0.0
  %1303 = vmatpush1.xpose.msra.mxu0 0.0
  %1304 = vmatprep.subr.mxu0 0.0
  %1305 = vmatpush1.xpose.msra.mxu0 %v1272
  %1306 = vmatprep.subr.mxu0 0.0
  %1307 = vmatpush2.xpose.msra.mxu0 0.0
  %1308 = vmatprep.subr.mxu0 0.0
  %1309 = vmatpush2.xpose.msra.mxu0 0.0
  %1310 = vmatprep.subr.mxu0 0.0
  %1311 = vmatpush2.xpose.msra.mxu0 0.0
  %1312 = vmatprep.subr.mxu0 0.0
  %1313 = vmatpush2.xpose.msra.mxu0 0.0
  %1314 = vmatprep.subr.mxu0 0.0
  %1315 = vmatpush2.xpose.msra.mxu0 0.0
  %1316 = vmatprep.subr.mxu0 0.0
  %1317 = vmatpush2.xpose.msra.mxu0 0.0
  %1318 = vmatprep.subr.mxu0 0.0
  %1319 = vmatpush2.xpose.msra.mxu0 0.0
  %1320 = vmatprep.subr.mxu0 0.0
  %1321 = vmatpush2.xpose.msra.mxu0 0.0
  %1322 = vmatprep.subr.mxu0 0.0
  %1323 = vmatpush2.xpose.msra.mxu0 0.0
  %1324 = vmatprep.subr.mxu0 0.0
  %1325 = vmatpush2.xpose.msra.mxu0 0.0
  %1326 = vmatprep.subr.mxu0 0.0
  %1327 = vmatpush2.xpose.msra.mxu0 0.0
  %1328 = vmatprep.subr.mxu0 0.0
  %1329 = vmatpush2.xpose.msra.mxu0 0.0
  %1330 = vmatprep.subr.mxu0 0.0
  %1331 = vmatpush2.xpose.msra.mxu0 0.0
  %1332 = vmatprep.subr.mxu0 0.0
  %1333 = vmatpush2.xpose.msra.mxu0 0.0
  %1334 = vmatprep.subr.mxu0 0.0
  %1335 = vmatpush2.xpose.msra.mxu0 0.0
  %1336 = vmatprep.subr.mxu0 0.0
  %1337 = vmatpush2.xpose.msra.mxu0 0.0
  %1338 = vmatprep.mubr.f32.mxu0 0.0
  %1339 = vmatmul.mubr.f32.gmra.mxu0 %v1270
  %v1340 = vpop.f32.mrf.mxu0
  %v1341 = vadd.f32 0.0, %v1340
  %v1342 = vpop.f32.mrf.mxu0
  %1343 = vdwg.mxu0
  %1344 = vrot.lane.b32.xlu0 %v240, 104
  %v1345 = vpop.permute.xlu0 %1344
  %1346 = vrot.lane.b32.xlu0 %v152, 72
  %v1347 = vpop.permute.xlu0 %1346
  %v1348 = vsel %vm250, %v1345, 0
  %v1350 = vsel %vm250, %v1347, 0
  %1352 = vmatprep.subr.mxu0 0.0
  %1353 = vmatpush1.xpose.msra.mxu0 0.0
  %1354 = vmatprep.subr.mxu0 0.0
  %1355 = vmatpush1.xpose.msra.mxu0 0.0
  %1356 = vmatprep.subr.mxu0 0.0
  %1357 = vmatpush1.xpose.msra.mxu0 0.0
  %1358 = vmatprep.subr.mxu0 0.0
  %1359 = vmatpush1.xpose.msra.mxu0 0.0
  %1360 = vmatprep.subr.mxu0 0.0
  %1361 = vmatpush1.xpose.msra.mxu0 0.0
  %1362 = vmatprep.subr.mxu0 0.0
  %1363 = vmatpush1.xpose.msra.mxu0 0.0
  %1364 = vmatprep.subr.mxu0 0.0
  %1365 = vmatpush1.xpose.msra.mxu0 0.0
  %1366 = vmatprep.subr.mxu0 0.0
  %1367 = vmatpush1.xpose.msra.mxu0 0.0
  %1368 = vmatprep.subr.mxu0 0.0
  %1369 = vmatpush1.xpose.msra.mxu0 0.0
  %1370 = vmatprep.subr.mxu0 0.0
  %1371 = vmatpush1.xpose.msra.mxu0 0.0
  %1372 = vmatprep.subr.mxu0 0.0
  %1373 = vmatpush1.xpose.msra.mxu0 0.0
  %1374 = vmatprep.subr.mxu0 0.0
  %1375 = vmatpush1.xpose.msra.mxu0 0.0
  %1376 = vmatprep.subr.mxu0 0.0
  %1377 = vmatpush1.xpose.msra.mxu0 0.0
  %1378 = vmatprep.subr.mxu0 0.0
  %1379 = vmatpush1.xpose.msra.mxu0 0.0
  %1380 = vmatprep.subr.mxu0 0.0
  %1381 = vmatpush1.xpose.msra.mxu0 0.0
  %1382 = vmatprep.subr.mxu0 0.0
  %1383 = vmatpush1.xpose.msra.mxu0 %v1350
  %1384 = vmatprep.subr.mxu0 0.0
  %1385 = vmatpush2.xpose.msra.mxu0 0.0
  %1386 = vmatprep.subr.mxu0 0.0
  %1387 = vmatpush2.xpose.msra.mxu0 0.0
  %1388 = vmatprep.subr.mxu0 0.0
  %1389 = vmatpush2.xpose.msra.mxu0 0.0
  %1390 = vmatprep.subr.mxu0 0.0
  %1391 = vmatpush2.xpose.msra.mxu0 0.0
  %1392 = vmatprep.subr.mxu0 0.0
  %1393 = vmatpush2.xpose.msra.mxu0 0.0
  %1394 = vmatprep.subr.mxu0 0.0
  %1395 = vmatpush2.xpose.msra.mxu0 0.0
  %1396 = vmatprep.subr.mxu0 0.0
  %1397 = vmatpush2.xpose.msra.mxu0 0.0
  %1398 = vmatprep.subr.mxu0 0.0
  %1399 = vmatpush2.xpose.msra.mxu0 0.0
  %1400 = vmatprep.subr.mxu0 0.0
  %1401 = vmatpush2.xpose.msra.mxu0 0.0
  %1402 = vmatprep.subr.mxu0 0.0
  %1403 = vmatpush2.xpose.msra.mxu0 0.0
  %1404 = vmatprep.subr.mxu0 0.0
  %1405 = vmatpush2.xpose.msra.mxu0 0.0
  %1406 = vmatprep.subr.mxu0 0.0
  %1407 = vmatpush2.xpose.msra.mxu0 0.0
  %1408 = vmatprep.subr.mxu0 0.0
  %1409 = vmatpush2.xpose.msra.mxu0 0.0
  %1410 = vmatprep.subr.mxu0 0.0
  %1411 = vmatpush2.xpose.msra.mxu0 0.0
  %1412 = vmatprep.subr.mxu0 0.0
  %1413 = vmatpush2.xpose.msra.mxu0 0.0
  %1414 = vmatprep.subr.mxu0 0.0
  %1415 = vmatpush2.xpose.msra.mxu0 0.0
  %1416 = vmatprep.mubr.f32.mxu0 0.0
  %1417 = vmatmul.mubr.f32.gmra.mxu0 %v1348
  %v1418 = vpop.f32.mrf.mxu0
  %v1419 = vadd.f32 %v781, %v1418
  %v1420 = vpop.f32.mrf.mxu0
  %1421 = vdwg.mxu0
  %v1422 = vmul.f32 %v1341, 0.35355338
  %v1423 = vmul.f32 %v1419, 0.35355338
  %v1424 = vadd.f32 %v1422, %v784
  %v1425 = vadd.f32 %v1423, %v785
  %v1426 = vsel %vm250, %v944, -inf
  %1427 = vmax.xlane.f32.xlu0 %v1426
  %v1428 = vpop.xlane.xlu0 %1427
  %v1429 = vsel %vm250, %v1104, -inf
  %1430 = vmax.xlane.f32.xlu0 %v1429
  %v1431 = vpop.xlane.xlu0 %1430
  %v1432 = vsel %vm250, %v1264, -inf
  %1433 = vmax.xlane.f32.xlu0 %v1432
  %v1434 = vpop.xlane.xlu0 %1433
  %v1435 = vsel %vm250, %v1424, -inf
  %1436 = vmax.xlane.f32.xlu0 %v1435
  %v1437 = vpop.xlane.xlu0 %1436
  %v1438 = vsel %vm250, %v945, -inf
  %1439 = vmax.xlane.f32.xlu0 %v1438
  %v1440 = vpop.xlane.xlu0 %1439
  %v1441 = vsel %vm250, %v1105, -inf
  %1442 = vmax.xlane.f32.xlu0 %v1441
  %v1443 = vpop.xlane.xlu0 %1442
  %v1444 = vsel %vm250, %v1265, -inf
  %1445 = vmax.xlane.f32.xlu0 %v1444
  %v1446 = vpop.xlane.xlu0 %1445
  %v1447 = vsel %vm250, %v1425, -inf
  %1448 = vmax.xlane.f32.xlu0 %v1447
  %v1449 = vpop.xlane.xlu0 %1448
  %v1450 = vsub.f32 %v944, %v1428
  %v1451 = vsub.f32 %v1104, %v1431
  %v1452 = vsub.f32 %v1264, %v1434
  %v1453 = vsub.f32 %v1424, %v1437
  %v1454 = vsub.f32 %v945, %v1440
  %v1455 = vsub.f32 %v1105, %v1443
  %v1456 = vsub.f32 %v1265, %v1446
  %v1457 = vsub.f32 %v1425, %v1449
  %v1458 = vmul.f32 %v1450, 1.442695
  %v1459 = vpow.pop %v1458
  %v1460 = vmul.f32 %v1451, 1.442695
  %v1461 = vpow.pop %v1460
  %v1462 = vmul.f32 %v1452, 1.442695
  %v1463 = vpow.pop %v1462
  %v1464 = vmul.f32 %v1453, 1.442695
  %v1465 = vpow.pop %v1464
  %v1466 = vmul.f32 %v1454, 1.442695
  %v1467 = vpow.pop %v1466
  %v1468 = vmul.f32 %v1455, 1.442695
  %v1469 = vpow.pop %v1468
  %v1470 = vmul.f32 %v1456, 1.442695
  %v1471 = vpow.pop %v1470
  %v1472 = vmul.f32 %v1457, 1.442695
  %v1473 = vpow.pop %v1472
  %v1474 = vsel %vm250, %v1459, 0.0
  %1475 = vadd.xlane.f32.xlu0 %v1474
  %v1476 = vpop.xlane.xlu0 %1475
  %v1477 = vsel %vm250, %v1461, 0.0
  %1478 = vadd.xlane.f32.xlu0 %v1477
  %v1479 = vpop.xlane.xlu0 %1478
  %v1480 = vsel %vm250, %v1463, 0.0
  %1481 = vadd.xlane.f32.xlu0 %v1480
  %v1482 = vpop.xlane.xlu0 %1481
  %v1483 = vsel %vm250, %v1465, 0.0
  %1484 = vadd.xlane.f32.xlu0 %v1483
  %v1485 = vpop.xlane.xlu0 %1484
  %v1486 = vsel %vm250, %v1467, 0.0
  %1487 = vadd.xlane.f32.xlu0 %v1486
  %v1488 = vpop.xlane.xlu0 %1487
  %v1489 = vsel %vm250, %v1469, 0.0
  %1490 = vadd.xlane.f32.xlu0 %v1489
  %v1491 = vpop.xlane.xlu0 %1490
  %v1492 = vsel %vm250, %v1471, 0.0
  %1493 = vadd.xlane.f32.xlu0 %v1492
  %v1494 = vpop.xlane.xlu0 %1493
  %v1495 = vsel %vm250, %v1473, 0.0
  %1496 = vadd.xlane.f32.xlu0 %v1495
  %v1497 = vpop.xlane.xlu0 %1496
  %v1498 = vrcp.pop %v1476
  %v1499 = vrcp.pop %v1479
  %v1500 = vrcp.pop %v1482
  %v1501 = vrcp.pop %v1485
  %v1502 = vrcp.pop %v1488
  %v1503 = vrcp.pop %v1491
  %v1504 = vrcp.pop %v1494
  %v1505 = vrcp.pop %v1497
  %v1506 = vmul.f32 %v1459, %v1498
  %v1507 = vmul.f32 %v1461, %v1499
  %v1508 = vmul.f32 %v1463, %v1500
  %v1509 = vmul.f32 %v1465, %v1501
  %v1510 = vmul.f32 %v1467, %v1502
  %v1511 = vmul.f32 %v1469, %v1503
  %v1512 = vmul.f32 %v1471, %v1504
  %v1513 = vmul.f32 %v1473, %v1505
  %1514 = vrot.lane.b32.xlu0 %v147, 64
  %v1515 = vpop.permute.xlu0 %1514
  %v1518 = vsel %vm250, %v1506, 0
  %1520 = vmatprep.subr.mxu0 0.0
  %1521 = vmatpush1.msra.mxu0 0.0
  %1522 = vmatprep.subr.mxu0 0.0
  %1523 = vmatpush1.msra.mxu0 0.0
  %1524 = vmatprep.subr.mxu0 0.0
  %1525 = vmatpush1.msra.mxu0 0.0
  %1526 = vmatprep.subr.mxu0 0.0
  %1527 = vmatpush1.msra.mxu0 0.0
  %1528 = vmatprep.subr.mxu0 0.0
  %1529 = vmatpush1.msra.mxu0 0.0
  %1530 = vmatprep.subr.mxu0 0.0
  %1531 = vmatpush1.msra.mxu0 0.0
  %1532 = vmatprep.subr.mxu0 0.0
  %1533 = vmatpush1.msra.mxu0 0.0
  %1534 = vmatprep.subr.mxu0 0.0
  %1535 = vmatpush1.msra.mxu0 0.0
  %1536 = vmatprep.subr.mxu0 0.0
  %1537 = vmatpush1.msra.mxu0 0.0
  %1538 = vmatprep.subr.mxu0 0.0
  %1539 = vmatpush1.msra.mxu0 0.0
  %1540 = vmatprep.subr.mxu0 0.0
  %1541 = vmatpush1.msra.mxu0 0.0
  %1542 = vmatprep.subr.mxu0 0.0
  %1543 = vmatpush1.msra.mxu0 0.0
  %1544 = vmatprep.subr.mxu0 0.0
  %1545 = vmatpush1.msra.mxu0 0.0
  %1546 = vmatprep.subr.mxu0 0.0
  %1547 = vmatpush1.msra.mxu0 0.0
  %1548 = vmatprep.subr.mxu0 0.0
  %1549 = vmatpush1.msra.mxu0 0.0
  %1550 = vmatprep.subr.mxu0 0.0
  %1551 = vmatpush1.msra.mxu0 %v1515
  %1552 = vmatprep.subr.mxu0 0.0
  %1553 = vmatpush2.msra.mxu0 0.0
  %1554 = vmatprep.subr.mxu0 0.0
  %1555 = vmatpush2.msra.mxu0 0.0
  %1556 = vmatprep.subr.mxu0 0.0
  %1557 = vmatpush2.msra.mxu0 0.0
  %1558 = vmatprep.subr.mxu0 0.0
  %1559 = vmatpush2.msra.mxu0 0.0
  %1560 = vmatprep.subr.mxu0 0.0
  %1561 = vmatpush2.msra.mxu0 0.0
  %1562 = vmatprep.subr.mxu0 0.0
  %1563 = vmatpush2.msra.mxu0 0.0
  %1564 = vmatprep.subr.mxu0 0.0
  %1565 = vmatpush2.msra.mxu0 0.0
  %1566 = vmatprep.subr.mxu0 0.0
  %1567 = vmatpush2.msra.mxu0 0.0
  %1568 = vmatprep.subr.mxu0 0.0
  %1569 = vmatpush2.msra.mxu0 0.0
  %1570 = vmatprep.subr.mxu0 0.0
  %1571 = vmatpush2.msra.mxu0 0.0
  %1572 = vmatprep.subr.mxu0 0.0
  %1573 = vmatpush2.msra.mxu0 0.0
  %1574 = vmatprep.subr.mxu0 0.0
  %1575 = vmatpush2.msra.mxu0 0.0
  %1576 = vmatprep.subr.mxu0 0.0
  %1577 = vmatpush2.msra.mxu0 0.0
  %1578 = vmatprep.subr.mxu0 0.0
  %1579 = vmatpush2.msra.mxu0 0.0
  %1580 = vmatprep.subr.mxu0 0.0
  %1581 = vmatpush2.msra.mxu0 0.0
  %1582 = vmatprep.subr.mxu0 0.0
  %1583 = vmatpush2.msra.mxu0 0.0
  %1584 = vmatprep.mubr.f32.mxu0 0.0
  %1585 = vmatmul.mubr.f32.gmra.mxu0 %v1518
  %v1586 = vpop.f32.mrf.mxu0
  %v1587 = vadd.f32 0.0, %v1586
  %v1588 = vpop.f32.mrf.mxu0
  %1589 = vdwg.mxu0
  %1590 = vrot.lane.b32.xlu0 %v152, 64
  %v1591 = vpop.permute.xlu0 %1590
  %v1594 = vsel %vm250, %v1510, 0
  %1596 = vmatprep.subr.mxu0 0.0
  %1597 = vmatpush1.msra.mxu0 0.0
  %1598 = vmatprep.subr.mxu0 0.0
  %1599 = vmatpush1.msra.mxu0 0.0
  %1600 = vmatprep.subr.mxu0 0.0
  %1601 = vmatpush1.msra.mxu0 0.0
  %1602 = vmatprep.subr.mxu0 0.0
  %1603 = vmatpush1.msra.mxu0 0.0
  %1604 = vmatprep.subr.mxu0 0.0
  %1605 = vmatpush1.msra.mxu0 0.0
  %1606 = vmatprep.subr.mxu0 0.0
  %1607 = vmatpush1.msra.mxu0 0.0
  %1608 = vmatprep.subr.mxu0 0.0
  %1609 = vmatpush1.msra.mxu0 0.0
  %1610 = vmatprep.subr.mxu0 0.0
  %1611 = vmatpush1.msra.mxu0 0.0
  %1612 = vmatprep.subr.mxu0 0.0
  %1613 = vmatpush1.msra.mxu0 0.0
  %1614 = vmatprep.subr.mxu0 0.0
  %1615 = vmatpush1.msra.mxu0 0.0
  %1616 = vmatprep.subr.mxu0 0.0
  %1617 = vmatpush1.msra.mxu0 0.0
  %1618 = vmatprep.subr.mxu0 0.0
  %1619 = vmatpush1.msra.mxu0 0.0
  %1620 = vmatprep.subr.mxu0 0.0
  %1621 = vmatpush1.msra.mxu0 0.0
  %1622 = vmatprep.subr.mxu0 0.0
  %1623 = vmatpush1.msra.mxu0 0.0
  %1624 = vmatprep.subr.mxu0 0.0
  %1625 = vmatpush1.msra.mxu0 0.0
  %1626 = vmatprep.subr.mxu0 0.0
  %1627 = vmatpush1.msra.mxu0 %v1591
  %1628 = vmatprep.subr.mxu0 0.0
  %1629 = vmatpush2.msra.mxu0 0.0
  %1630 = vmatprep.subr.mxu0 0.0
  %1631 = vmatpush2.msra.mxu0 0.0
  %1632 = vmatprep.subr.mxu0 0.0
  %1633 = vmatpush2.msra.mxu0 0.0
  %1634 = vmatprep.subr.mxu0 0.0
  %1635 = vmatpush2.msra.mxu0 0.0
  %1636 = vmatprep.subr.mxu0 0.0
  %1637 = vmatpush2.msra.mxu0 0.0
  %1638 = vmatprep.subr.mxu0 0.0
  %1639 = vmatpush2.msra.mxu0 0.0
  %1640 = vmatprep.subr.mxu0 0.0
  %1641 = vmatpush2.msra.mxu0 0.0
  %1642 = vmatprep.subr.mxu0 0.0
  %1643 = vmatpush2.msra.mxu0 0.0
  %1644 = vmatprep.subr.mxu0 0.0
  %1645 = vmatpush2.msra.mxu0 0.0
  %1646 = vmatprep.subr.mxu0 0.0
  %1647 = vmatpush2.msra.mxu0 0.0
  %1648 = vmatprep.subr.mxu0 0.0
  %1649 = vmatpush2.msra.mxu0 0.0
  %1650 = vmatprep.subr.mxu0 0.0
  %1651 = vmatpush2.msra.mxu0 0.0
  %1652 = vmatprep.subr.mxu0 0.0
  %1653 = vmatpush2.msra.mxu0 0.0
  %1654 = vmatprep.subr.mxu0 0.0
  %1655 = vmatpush2.msra.mxu0 0.0
  %1656 = vmatprep.subr.mxu0 0.0
  %1657 = vmatpush2.msra.mxu0 0.0
  %1658 = vmatprep.subr.mxu0 0.0
  %1659 = vmatpush2.msra.mxu0 0.0
  %1660 = vmatprep.mubr.f32.mxu0 0.0
  %1661 = vmatmul.mubr.f32.gmra.mxu0 %v1594
  %v1662 = vpop.f32.mrf.mxu0
  %v1663 = vadd.f32 0.0, %v1662
  %v1664 = vpop.f32.mrf.mxu0
  %1665 = vdwg.mxu0
  %1666 = vrot.lane.b32.xlu0 %v147, 56
  %v1667 = vpop.permute.xlu0 %1666
  %v1670 = vsel %vm250, %v1507, 0
  %1672 = vmatprep.subr.mxu0 0.0
  %1673 = vmatpush1.msra.mxu0 0.0
  %1674 = vmatprep.subr.mxu0 0.0
  %1675 = vmatpush1.msra.mxu0 0.0
  %1676 = vmatprep.subr.mxu0 0.0
  %1677 = vmatpush1.msra.mxu0 0.0
  %1678 = vmatprep.subr.mxu0 0.0
  %1679 = vmatpush1.msra.mxu0 0.0
  %1680 = vmatprep.subr.mxu0 0.0
  %1681 = vmatpush1.msra.mxu0 0.0
  %1682 = vmatprep.subr.mxu0 0.0
  %1683 = vmatpush1.msra.mxu0 0.0
  %1684 = vmatprep.subr.mxu0 0.0
  %1685 = vmatpush1.msra.mxu0 0.0
  %1686 = vmatprep.subr.mxu0 0.0
  %1687 = vmatpush1.msra.mxu0 0.0
  %1688 = vmatprep.subr.mxu0 0.0
  %1689 = vmatpush1.msra.mxu0 0.0
  %1690 = vmatprep.subr.mxu0 0.0
  %1691 = vmatpush1.msra.mxu0 0.0
  %1692 = vmatprep.subr.mxu0 0.0
  %1693 = vmatpush1.msra.mxu0 0.0
  %1694 = vmatprep.subr.mxu0 0.0
  %1695 = vmatpush1.msra.mxu0 0.0
  %1696 = vmatprep.subr.mxu0 0.0
  %1697 = vmatpush1.msra.mxu0 0.0
  %1698 = vmatprep.subr.mxu0 0.0
  %1699 = vmatpush1.msra.mxu0 0.0
  %1700 = vmatprep.subr.mxu0 0.0
  %1701 = vmatpush1.msra.mxu0 0.0
  %1702 = vmatprep.subr.mxu0 0.0
  %1703 = vmatpush1.msra.mxu0 %v1667
  %1704 = vmatprep.subr.mxu0 0.0
  %1705 = vmatpush2.msra.mxu0 0.0
  %1706 = vmatprep.subr.mxu0 0.0
  %1707 = vmatpush2.msra.mxu0 0.0
  %1708 = vmatprep.subr.mxu0 0.0
  %1709 = vmatpush2.msra.mxu0 0.0
  %1710 = vmatprep.subr.mxu0 0.0
  %1711 = vmatpush2.msra.mxu0 0.0
  %1712 = vmatprep.subr.mxu0 0.0
  %1713 = vmatpush2.msra.mxu0 0.0
  %1714 = vmatprep.subr.mxu0 0.0
  %1715 = vmatpush2.msra.mxu0 0.0
  %1716 = vmatprep.subr.mxu0 0.0
  %1717 = vmatpush2.msra.mxu0 0.0
  %1718 = vmatprep.subr.mxu0 0.0
  %1719 = vmatpush2.msra.mxu0 0.0
  %1720 = vmatprep.subr.mxu0 0.0
  %1721 = vmatpush2.msra.mxu0 0.0
  %1722 = vmatprep.subr.mxu0 0.0
  %1723 = vmatpush2.msra.mxu0 0.0
  %1724 = vmatprep.subr.mxu0 0.0
  %1725 = vmatpush2.msra.mxu0 0.0
  %1726 = vmatprep.subr.mxu0 0.0
  %1727 = vmatpush2.msra.mxu0 0.0
  %1728 = vmatprep.subr.mxu0 0.0
  %1729 = vmatpush2.msra.mxu0 0.0
  %1730 = vmatprep.subr.mxu0 0.0
  %1731 = vmatpush2.msra.mxu0 0.0
  %1732 = vmatprep.subr.mxu0 0.0
  %1733 = vmatpush2.msra.mxu0 0.0
  %1734 = vmatprep.subr.mxu0 0.0
  %1735 = vmatpush2.msra.mxu0 0.0
  %1736 = vmatprep.mubr.f32.mxu0 0.0
  %1737 = vmatmul.mubr.f32.gmra.mxu0 %v1670
  %v1738 = vpop.f32.mrf.mxu0
  %v1739 = vadd.f32 0.0, %v1738
  %v1740 = vpop.f32.mrf.mxu0
  %1741 = vdwg.mxu0
  %1742 = vrot.lane.b32.xlu0 %v152, 56
  %v1743 = vpop.permute.xlu0 %1742
  %v1746 = vsel %vm250, %v1511, 0
  %1748 = vmatprep.subr.mxu0 0.0
  %1749 = vmatpush1.msra.mxu0 0.0
  %1750 = vmatprep.subr.mxu0 0.0
  %1751 = vmatpush1.msra.mxu0 0.0
  %1752 = vmatprep.subr.mxu0 0.0
  %1753 = vmatpush1.msra.mxu0 0.0
  %1754 = vmatprep.subr.mxu0 0.0
  %1755 = vmatpush1.msra.mxu0 0.0
  %1756 = vmatprep.subr.mxu0 0.0
  %1757 = vmatpush1.msra.mxu0 0.0
  %1758 = vmatprep.subr.mxu0 0.0
  %1759 = vmatpush1.msra.mxu0 0.0
  %1760 = vmatprep.subr.mxu0 0.0
  %1761 = vmatpush1.msra.mxu0 0.0
  %1762 = vmatprep.subr.mxu0 0.0
  %1763 = vmatpush1.msra.mxu0 0.0
  %1764 = vmatprep.subr.mxu0 0.0
  %1765 = vmatpush1.msra.mxu0 0.0
  %1766 = vmatprep.subr.mxu0 0.0
  %1767 = vmatpush1.msra.mxu0 0.0
  %1768 = vmatprep.subr.mxu0 0.0
  %1769 = vmatpush1.msra.mxu0 0.0
  %1770 = vmatprep.subr.mxu0 0.0
  %1771 = vmatpush1.msra.mxu0 0.0
  %1772 = vmatprep.subr.mxu0 0.0
  %1773 = vmatpush1.msra.mxu0 0.0
  %1774 = vmatprep.subr.mxu0 0.0
  %1775 = vmatpush1.msra.mxu0 0.0
  %1776 = vmatprep.subr.mxu0 0.0
  %1777 = vmatpush1.msra.mxu0 0.0
  %1778 = vmatprep.subr.mxu0 0.0
  %1779 = vmatpush1.msra.mxu0 %v1743
  %1780 = vmatprep.subr.mxu0 0.0
  %1781 = vmatpush2.msra.mxu0 0.0
  %1782 = vmatprep.subr.mxu0 0.0
  %1783 = vmatpush2.msra.mxu0 0.0
  %1784 = vmatprep.subr.mxu0 0.0
  %1785 = vmatpush2.msra.mxu0 0.0
  %1786 = vmatprep.subr.mxu0 0.0
  %1787 = vmatpush2.msra.mxu0 0.0
  %1788 = vmatprep.subr.mxu0 0.0
  %1789 = vmatpush2.msra.mxu0 0.0
  %1790 = vmatprep.subr.mxu0 0.0
  %1791 = vmatpush2.msra.mxu0 0.0
  %1792 = vmatprep.subr.mxu0 0.0
  %1793 = vmatpush2.msra.mxu0 0.0
  %1794 = vmatprep.subr.mxu0 0.0
  %1795 = vmatpush2.msra.mxu0 0.0
  %1796 = vmatprep.subr.mxu0 0.0
  %1797 = vmatpush2.msra.mxu0 0.0
  %1798 = vmatprep.subr.mxu0 0.0
  %1799 = vmatpush2.msra.mxu0 0.0
  %1800 = vmatprep.subr.mxu0 0.0
  %1801 = vmatpush2.msra.mxu0 0.0
  %1802 = vmatprep.subr.mxu0 0.0
  %1803 = vmatpush2.msra.mxu0 0.0
  %1804 = vmatprep.subr.mxu0 0.0
  %1805 = vmatpush2.msra.mxu0 0.0
  %1806 = vmatprep.subr.mxu0 0.0
  %1807 = vmatpush2.msra.mxu0 0.0
  %1808 = vmatprep.subr.mxu0 0.0
  %1809 = vmatpush2.msra.mxu0 0.0
  %1810 = vmatprep.subr.mxu0 0.0
  %1811 = vmatpush2.msra.mxu0 0.0
  %1812 = vmatprep.mubr.f32.mxu0 0.0
  %1813 = vmatmul.mubr.f32.gmra.mxu0 %v1746
  %v1814 = vpop.f32.mrf.mxu0
  %v1815 = vadd.f32 0.0, %v1814
  %v1816 = vpop.f32.mrf.mxu0
  %1817 = vdwg.mxu0
  %1818 = vrot.lane.b32.xlu0 %v147, 48
  %v1819 = vpop.permute.xlu0 %1818
  %v1822 = vsel %vm250, %v1508, 0
  %1824 = vmatprep.subr.mxu0 0.0
  %1825 = vmatpush1.msra.mxu0 0.0
  %1826 = vmatprep.subr.mxu0 0.0
  %1827 = vmatpush1.msra.mxu0 0.0
  %1828 = vmatprep.subr.mxu0 0.0
  %1829 = vmatpush1.msra.mxu0 0.0
  %1830 = vmatprep.subr.mxu0 0.0
  %1831 = vmatpush1.msra.mxu0 0.0
  %1832 = vmatprep.subr.mxu0 0.0
  %1833 = vmatpush1.msra.mxu0 0.0
  %1834 = vmatprep.subr.mxu0 0.0
  %1835 = vmatpush1.msra.mxu0 0.0
  %1836 = vmatprep.subr.mxu0 0.0
  %1837 = vmatpush1.msra.mxu0 0.0
  %1838 = vmatprep.subr.mxu0 0.0
  %1839 = vmatpush1.msra.mxu0 0.0
  %1840 = vmatprep.subr.mxu0 0.0
  %1841 = vmatpush1.msra.mxu0 0.0
  %1842 = vmatprep.subr.mxu0 0.0
  %1843 = vmatpush1.msra.mxu0 0.0
  %1844 = vmatprep.subr.mxu0 0.0
  %1845 = vmatpush1.msra.mxu0 0.0
  %1846 = vmatprep.subr.mxu0 0.0
  %1847 = vmatpush1.msra.mxu0 0.0
  %1848 = vmatprep.subr.mxu0 0.0
  %1849 = vmatpush1.msra.mxu0 0.0
  %1850 = vmatprep.subr.mxu0 0.0
  %1851 = vmatpush1.msra.mxu0 0.0
  %1852 = vmatprep.subr.mxu0 0.0
  %1853 = vmatpush1.msra.mxu0 0.0
  %1854 = vmatprep.subr.mxu0 0.0
  %1855 = vmatpush1.msra.mxu0 %v1819
  %1856 = vmatprep.subr.mxu0 0.0
  %1857 = vmatpush2.msra.mxu0 0.0
  %1858 = vmatprep.subr.mxu0 0.0
  %1859 = vmatpush2.msra.mxu0 0.0
  %1860 = vmatprep.subr.mxu0 0.0
  %1861 = vmatpush2.msra.mxu0 0.0
  %1862 = vmatprep.subr.mxu0 0.0
  %1863 = vmatpush2.msra.mxu0 0.0
  %1864 = vmatprep.subr.mxu0 0.0
  %1865 = vmatpush2.msra.mxu0 0.0
  %1866 = vmatprep.subr.mxu0 0.0
  %1867 = vmatpush2.msra.mxu0 0.0
  %1868 = vmatprep.subr.mxu0 0.0
  %1869 = vmatpush2.msra.mxu0 0.0
  %1870 = vmatprep.subr.mxu0 0.0
  %1871 = vmatpush2.msra.mxu0 0.0
  %1872 = vmatprep.subr.mxu0 0.0
  %1873 = vmatpush2.msra.mxu0 0.0
  %1874 = vmatprep.subr.mxu0 0.0
  %1875 = vmatpush2.msra.mxu0 0.0
  %1876 = vmatprep.subr.mxu0 0.0
  %1877 = vmatpush2.msra.mxu0 0.0
  %1878 = vmatprep.subr.mxu0 0.0
  %1879 = vmatpush2.msra.mxu0 0.0
  %1880 = vmatprep.subr.mxu0 0.0
  %1881 = vmatpush2.msra.mxu0 0.0
  %1882 = vmatprep.subr.mxu0 0.0
  %1883 = vmatpush2.msra.mxu0 0.0
  %1884 = vmatprep.subr.mxu0 0.0
  %1885 = vmatpush2.msra.mxu0 0.0
  %1886 = vmatprep.subr.mxu0 0.0
  %1887 = vmatpush2.msra.mxu0 0.0
  %1888 = vmatprep.mubr.f32.mxu0 0.0
  %1889 = vmatmul.mubr.f32.gmra.mxu0 %v1822
  %v1890 = vpop.f32.mrf.mxu0
  %v1891 = vadd.f32 0.0, %v1890
  %v1892 = vpop.f32.mrf.mxu0
  %1893 = vdwg.mxu0
  %1894 = vrot.lane.b32.xlu0 %v152, 48
  %v1895 = vpop.permute.xlu0 %1894
  %v1898 = vsel %vm250, %v1512, 0
  %1900 = vmatprep.subr.mxu0 0.0
  %1901 = vmatpush1.msra.mxu0 0.0
  %1902 = vmatprep.subr.mxu0 0.0
  %1903 = vmatpush1.msra.mxu0 0.0
  %1904 = vmatprep.subr.mxu0 0.0
  %1905 = vmatpush1.msra.mxu0 0.0
  %1906 = vmatprep.subr.mxu0 0.0
  %1907 = vmatpush1.msra.mxu0 0.0
  %1908 = vmatprep.subr.mxu0 0.0
  %1909 = vmatpush1.msra.mxu0 0.0
  %1910 = vmatprep.subr.mxu0 0.0
  %1911 = vmatpush1.msra.mxu0 0.0
  %1912 = vmatprep.subr.mxu0 0.0
  %1913 = vmatpush1.msra.mxu0 0.0
  %1914 = vmatprep.subr.mxu0 0.0
  %1915 = vmatpush1.msra.mxu0 0.0
  %1916 = vmatprep.subr.mxu0 0.0
  %1917 = vmatpush1.msra.mxu0 0.0
  %1918 = vmatprep.subr.mxu0 0.0
  %1919 = vmatpush1.msra.mxu0 0.0
  %1920 = vmatprep.subr.mxu0 0.0
  %1921 = vmatpush1.msra.mxu0 0.0
  %1922 = vmatprep.subr.mxu0 0.0
  %1923 = vmatpush1.msra.mxu0 0.0
  %1924 = vmatprep.subr.mxu0 0.0
  %1925 = vmatpush1.msra.mxu0 0.0
  %1926 = vmatprep.subr.mxu0 0.0
  %1927 = vmatpush1.msra.mxu0 0.0
  %1928 = vmatprep.subr.mxu0 0.0
  %1929 = vmatpush1.msra.mxu0 0.0
  %1930 = vmatprep.subr.mxu0 0.0
  %1931 = vmatpush1.msra.mxu0 %v1895
  %1932 = vmatprep.subr.mxu0 0.0
  %1933 = vmatpush2.msra.mxu0 0.0
  %1934 = vmatprep.subr.mxu0 0.0
  %1935 = vmatpush2.msra.mxu0 0.0
  %1936 = vmatprep.subr.mxu0 0.0
  %1937 = vmatpush2.msra.mxu0 0.0
  %1938 = vmatprep.subr.mxu0 0.0
  %1939 = vmatpush2.msra.mxu0 0.0
  %1940 = vmatprep.subr.mxu0 0.0
  %1941 = vmatpush2.msra.mxu0 0.0
  %1942 = vmatprep.subr.mxu0 0.0
  %1943 = vmatpush2.msra.mxu0 0.0
  %1944 = vmatprep.subr.mxu0 0.0
  %1945 = vmatpush2.msra.mxu0 0.0
  %1946 = vmatprep.subr.mxu0 0.0
  %1947 = vmatpush2.msra.mxu0 0.0
  %1948 = vmatprep.subr.mxu0 0.0
  %1949 = vmatpush2.msra.mxu0 0.0
  %1950 = vmatprep.subr.mxu0 0.0
  %1951 = vmatpush2.msra.mxu0 0.0
  %1952 = vmatprep.subr.mxu0 0.0
  %1953 = vmatpush2.msra.mxu0 0.0
  %1954 = vmatprep.subr.mxu0 0.0
  %1955 = vmatpush2.msra.mxu0 0.0
  %1956 = vmatprep.subr.mxu0 0.0
  %1957 = vmatpush2.msra.mxu0 0.0
  %1958 = vmatprep.subr.mxu0 0.0
  %1959 = vmatpush2.msra.mxu0 0.0
  %1960 = vmatprep.subr.mxu0 0.0
  %1961 = vmatpush2.msra.mxu0 0.0
  %1962 = vmatprep.subr.mxu0 0.0
  %1963 = vmatpush2.msra.mxu0 0.0
  %1964 = vmatprep.mubr.f32.mxu0 0.0
  %1965 = vmatmul.mubr.f32.gmra.mxu0 %v1898
  %v1966 = vpop.f32.mrf.mxu0
  %v1967 = vadd.f32 0.0, %v1966
  %v1968 = vpop.f32.mrf.mxu0
  %1969 = vdwg.mxu0
  %1970 = vrot.lane.b32.xlu0 %v147, 40
  %v1971 = vpop.permute.xlu0 %1970
  %v1974 = vsel %vm250, %v1509, 0
  %1976 = vmatprep.subr.mxu0 0.0
  %1977 = vmatpush1.msra.mxu0 0.0
  %1978 = vmatprep.subr.mxu0 0.0
  %1979 = vmatpush1.msra.mxu0 0.0
  %1980 = vmatprep.subr.mxu0 0.0
  %1981 = vmatpush1.msra.mxu0 0.0
  %1982 = vmatprep.subr.mxu0 0.0
  %1983 = vmatpush1.msra.mxu0 0.0
  %1984 = vmatprep.subr.mxu0 0.0
  %1985 = vmatpush1.msra.mxu0 0.0
  %1986 = vmatprep.subr.mxu0 0.0
  %1987 = vmatpush1.msra.mxu0 0.0
  %1988 = vmatprep.subr.mxu0 0.0
  %1989 = vmatpush1.msra.mxu0 0.0
  %1990 = vmatprep.subr.mxu0 0.0
  %1991 = vmatpush1.msra.mxu0 0.0
  %1992 = vmatprep.subr.mxu0 0.0
  %1993 = vmatpush1.msra.mxu0 0.0
  %1994 = vmatprep.subr.mxu0 0.0
  %1995 = vmatpush1.msra.mxu0 0.0
  %1996 = vmatprep.subr.mxu0 0.0
  %1997 = vmatpush1.msra.mxu0 0.0
  %1998 = vmatprep.subr.mxu0 0.0
  %1999 = vmatpush1.msra.mxu0 0.0
  %2000 = vmatprep.subr.mxu0 0.0
  %2001 = vmatpush1.msra.mxu0 0.0
  %2002 = vmatprep.subr.mxu0 0.0
  %2003 = vmatpush1.msra.mxu0 0.0
  %2004 = vmatprep.subr.mxu0 0.0
  %2005 = vmatpush1.msra.mxu0 0.0
  %2006 = vmatprep.subr.mxu0 0.0
  %2007 = vmatpush1.msra.mxu0 %v1971
  %2008 = vmatprep.subr.mxu0 0.0
  %2009 = vmatpush2.msra.mxu0 0.0
  %2010 = vmatprep.subr.mxu0 0.0
  %2011 = vmatpush2.msra.mxu0 0.0
  %2012 = vmatprep.subr.mxu0 0.0
  %2013 = vmatpush2.msra.mxu0 0.0
  %2014 = vmatprep.subr.mxu0 0.0
  %2015 = vmatpush2.msra.mxu0 0.0
  %2016 = vmatprep.subr.mxu0 0.0
  %2017 = vmatpush2.msra.mxu0 0.0
  %2018 = vmatprep.subr.mxu0 0.0
  %2019 = vmatpush2.msra.mxu0 0.0
  %2020 = vmatprep.subr.mxu0 0.0
  %2021 = vmatpush2.msra.mxu0 0.0
  %2022 = vmatprep.subr.mxu0 0.0
  %2023 = vmatpush2.msra.mxu0 0.0
  %2024 = vmatprep.subr.mxu0 0.0
  %2025 = vmatpush2.msra.mxu0 0.0
  %2026 = vmatprep.subr.mxu0 0.0
  %2027 = vmatpush2.msra.mxu0 0.0
  %2028 = vmatprep.subr.mxu0 0.0
  %2029 = vmatpush2.msra.mxu0 0.0
  %2030 = vmatprep.subr.mxu0 0.0
  %2031 = vmatpush2.msra.mxu0 0.0
  %2032 = vmatprep.subr.mxu0 0.0
  %2033 = vmatpush2.msra.mxu0 0.0
  %2034 = vmatprep.subr.mxu0 0.0
  %2035 = vmatpush2.msra.mxu0 0.0
  %2036 = vmatprep.subr.mxu0 0.0
  %2037 = vmatpush2.msra.mxu0 0.0
  %2038 = vmatprep.subr.mxu0 0.0
  %2039 = vmatpush2.msra.mxu0 0.0
  %2040 = vmatprep.mubr.f32.mxu0 0.0
  %2041 = vmatmul.mubr.f32.gmra.mxu0 %v1974
  %v2042 = vpop.f32.mrf.mxu0
  %v2043 = vadd.f32 0.0, %v2042
  %v2044 = vpop.f32.mrf.mxu0
  %2045 = vdwg.mxu0
  %2046 = vrot.lane.b32.xlu0 %v152, 40
  %v2047 = vpop.permute.xlu0 %2046
  %v2050 = vsel %vm250, %v1513, 0
  %2052 = vmatprep.subr.mxu0 0.0
  %2053 = vmatpush1.msra.mxu0 0.0
  %2054 = vmatprep.subr.mxu0 0.0
  %2055 = vmatpush1.msra.mxu0 0.0
  %2056 = vmatprep.subr.mxu0 0.0
  %2057 = vmatpush1.msra.mxu0 0.0
  %2058 = vmatprep.subr.mxu0 0.0
  %2059 = vmatpush1.msra.mxu0 0.0
  %2060 = vmatprep.subr.mxu0 0.0
  %2061 = vmatpush1.msra.mxu0 0.0
  %2062 = vmatprep.subr.mxu0 0.0
  %2063 = vmatpush1.msra.mxu0 0.0
  %2064 = vmatprep.subr.mxu0 0.0
  %2065 = vmatpush1.msra.mxu0 0.0
  %2066 = vmatprep.subr.mxu0 0.0
  %2067 = vmatpush1.msra.mxu0 0.0
  %2068 = vmatprep.subr.mxu0 0.0
  %2069 = vmatpush1.msra.mxu0 0.0
  %2070 = vmatprep.subr.mxu0 0.0
  %2071 = vmatpush1.msra.mxu0 0.0
  %2072 = vmatprep.subr.mxu0 0.0
  %2073 = vmatpush1.msra.mxu0 0.0
  %2074 = vmatprep.subr.mxu0 0.0
  %2075 = vmatpush1.msra.mxu0 0.0
  %2076 = vmatprep.subr.mxu0 0.0
  %2077 = vmatpush1.msra.mxu0 0.0
  %2078 = vmatprep.subr.mxu0 0.0
  %2079 = vmatpush1.msra.mxu0 0.0
  %2080 = vmatprep.subr.mxu0 0.0
  %2081 = vmatpush1.msra.mxu0 0.0
  %2082 = vmatprep.subr.mxu0 0.0
  %2083 = vmatpush1.msra.mxu0 %v2047
  %2084 = vmatprep.subr.mxu0 0.0
  %2085 = vmatpush2.msra.mxu0 0.0
  %2086 = vmatprep.subr.mxu0 0.0
  %2087 = vmatpush2.msra.mxu0 0.0
  %2088 = vmatprep.subr.mxu0 0.0
  %2089 = vmatpush2.msra.mxu0 0.0
  %2090 = vmatprep.subr.mxu0 0.0
  %2091 = vmatpush2.msra.mxu0 0.0
  %2092 = vmatprep.subr.mxu0 0.0
  %2093 = vmatpush2.msra.mxu0 0.0
  %2094 = vmatprep.subr.mxu0 0.0
  %2095 = vmatpush2.msra.mxu0 0.0
  %2096 = vmatprep.subr.mxu0 0.0
  %2097 = vmatpush2.msra.mxu0 0.0
  %2098 = vmatprep.subr.mxu0 0.0
  %2099 = vmatpush2.msra.mxu0 0.0
  %2100 = vmatprep.subr.mxu0 0.0
  %2101 = vmatpush2.msra.mxu0 0.0
  %2102 = vmatprep.subr.mxu0 0.0
  %2103 = vmatpush2.msra.mxu0 0.0
  %2104 = vmatprep.subr.mxu0 0.0
  %2105 = vmatpush2.msra.mxu0 0.0
  %2106 = vmatprep.subr.mxu0 0.0
  %2107 = vmatpush2.msra.mxu0 0.0
  %2108 = vmatprep.subr.mxu0 0.0
  %2109 = vmatpush2.msra.mxu0 0.0
  %2110 = vmatprep.subr.mxu0 0.0
  %2111 = vmatpush2.msra.mxu0 0.0
  %2112 = vmatprep.subr.mxu0 0.0
  %2113 = vmatpush2.msra.mxu0 0.0
  %2114 = vmatprep.subr.mxu0 0.0
  %2115 = vmatpush2.msra.mxu0 0.0
  %2116 = vmatprep.mubr.f32.mxu0 0.0
  %2117 = vmatmul.mubr.f32.gmra.mxu0 %v2050
  %v2118 = vpop.f32.mrf.mxu0
  %v2119 = vadd.f32 0.0, %v2118
  %v2120 = vpop.f32.mrf.mxu0
  %2121 = vdwg.mxu0
  %v2124 = vrot.slane %v1587, 1
  %v2125 = vrot.slane %v1663, 1
  %2126 = vrot.lane.b32.xlu0 %v2124, 8
  %v2127 = vpop.permute.xlu0 %2126
  %2128 = vrot.lane.b32.xlu0 %v2125, 8
  %v2129 = vpop.permute.xlu0 %2128
  %v2132 = vrot.slane %v1587, 2
  %v2133 = vrot.slane %v1663, 2
  %2134 = vrot.lane.b32.xlu0 %v2132, 16
  %v2135 = vpop.permute.xlu0 %2134
  %2136 = vrot.lane.b32.xlu0 %v2133, 16
  %v2137 = vpop.permute.xlu0 %2136
  %v2140 = vrot.slane %v1587, 3
  %v2141 = vrot.slane %v1663, 3
  %2142 = vrot.lane.b32.xlu0 %v2140, 24
  %v2143 = vpop.permute.xlu0 %2142
  %2144 = vrot.lane.b32.xlu0 %v2141, 24
  %v2145 = vpop.permute.xlu0 %2144
  %v2148 = vsel %vm250, %v1587, %v2127
  %v2149 = vsel %vm250, %v1663, %v2129
  %vm2150 = vcmask 130048
  %v2151 = vsel %vm2150, %v2148, %v2135
  %v2152 = vsel %vm2150, %v2149, %v2137
  %vm2153 = vcmask 195584
  %v2154 = vsel %vm2153, %v2151, %v2143
  %v2155 = vsel %vm2153, %v2152, %v2145
  %v2158 = vrot.slane %v1739, 1
  %v2159 = vrot.slane %v1815, 1
  %2160 = vrot.lane.b32.xlu0 %v2158, 8
  %v2161 = vpop.permute.xlu0 %2160
  %2162 = vrot.lane.b32.xlu0 %v2159, 8
  %v2163 = vpop.permute.xlu0 %2162
  %v2166 = vrot.slane %v1739, 2
  %v2167 = vrot.slane %v1815, 2
  %2168 = vrot.lane.b32.xlu0 %v2166, 16
  %v2169 = vpop.permute.xlu0 %2168
  %2170 = vrot.lane.b32.xlu0 %v2167, 16
  %v2171 = vpop.permute.xlu0 %2170
  %v2174 = vrot.slane %v1739, 3
  %v2175 = vrot.slane %v1815, 3
  %2176 = vrot.lane.b32.xlu0 %v2174, 24
  %v2177 = vpop.permute.xlu0 %2176
  %2178 = vrot.lane.b32.xlu0 %v2175, 24
  %v2179 = vpop.permute.xlu0 %2178
  %v2182 = vsel %vm250, %v1739, %v2161
  %v2183 = vsel %vm250, %v1815, %v2163
  %v2184 = vsel %vm2150, %v2182, %v2169
  %v2185 = vsel %vm2150, %v2183, %v2171
  %v2186 = vsel %vm2153, %v2184, %v2177
  %v2187 = vsel %vm2153, %v2185, %v2179
  %v2190 = vrot.slane %v1891, 1
  %v2191 = vrot.slane %v1967, 1
  %2192 = vrot.lane.b32.xlu0 %v2190, 8
  %v2193 = vpop.permute.xlu0 %2192
  %2194 = vrot.lane.b32.xlu0 %v2191, 8
  %v2195 = vpop.permute.xlu0 %2194
  %v2198 = vrot.slane %v1891, 2
  %v2199 = vrot.slane %v1967, 2
  %2200 = vrot.lane.b32.xlu0 %v2198, 16
  %v2201 = vpop.permute.xlu0 %2200
  %2202 = vrot.lane.b32.xlu0 %v2199, 16
  %v2203 = vpop.permute.xlu0 %2202
  %v2206 = vrot.slane %v1891, 3
  %v2207 = vrot.slane %v1967, 3
  %2208 = vrot.lane.b32.xlu0 %v2206, 24
  %v2209 = vpop.permute.xlu0 %2208
  %2210 = vrot.lane.b32.xlu0 %v2207, 24
  %v2211 = vpop.permute.xlu0 %2210
  %v2214 = vsel %vm250, %v1891, %v2193
  %v2215 = vsel %vm250, %v1967, %v2195
  %v2216 = vsel %vm2150, %v2214, %v2201
  %v2217 = vsel %vm2150, %v2215, %v2203
  %v2218 = vsel %vm2153, %v2216, %v2209
  %v2219 = vsel %vm2153, %v2217, %v2211
  %v2222 = vrot.slane %v2043, 1
  %v2223 = vrot.slane %v2119, 1
  %2224 = vrot.lane.b32.xlu0 %v2222, 8
  %v2225 = vpop.permute.xlu0 %2224
  %2226 = vrot.lane.b32.xlu0 %v2223, 8
  %v2227 = vpop.permute.xlu0 %2226
  %v2230 = vrot.slane %v2043, 2
  %v2231 = vrot.slane %v2119, 2
  %2232 = vrot.lane.b32.xlu0 %v2230, 16
  %v2233 = vpop.permute.xlu0 %2232
  %2234 = vrot.lane.b32.xlu0 %v2231, 16
  %v2235 = vpop.permute.xlu0 %2234
  %v2238 = vrot.slane %v2043, 3
  %v2239 = vrot.slane %v2119, 3
  %2240 = vrot.lane.b32.xlu0 %v2238, 24
  %v2241 = vpop.permute.xlu0 %2240
  %2242 = vrot.lane.b32.xlu0 %v2239, 24
  %v2243 = vpop.permute.xlu0 %2242
  %v2246 = vsel %vm250, %v2043, %v2225
  %v2247 = vsel %vm250, %v2119, %v2227
  %v2248 = vsel %vm2150, %v2246, %v2233
  %v2249 = vsel %vm2150, %v2247, %v2235
  %v2250 = vsel %vm2153, %v2248, %v2241
  %v2251 = vsel %vm2153, %v2249, %v2243
  %v2254 = vrot.slane %v2154, 3
  %v2255 = vrot.slane %v2155, 3
  %v2260 = vrot.slane %v2186, 6
  %v2261 = vrot.slane %v2187, 6
  %v2264 = vrot.slane %v2186, 1
  %v2265 = vrot.slane %v2187, 1
  %v2270 = vrot.slane %v2218, 4
  %v2271 = vrot.slane %v2219, 4
  %v2274 = vrot.slane %v2218, 7
  %v2275 = vrot.slane %v2219, 7
  %v2280 = vrot.slane %v2250, 2
  %v2281 = vrot.slane %v2251, 2
  %v2284 = vrot.slane %v2250, 5
  %v2285 = vrot.slane %v2251, 5
  %vm2288 = vcmask 1040384
  %v2289 = vsel %vm2288, %v2154, %v2254
  %v2290 = vsel %vm2288, %v2155, %v2255
  %vm2291 = vcmask 1041408
  %v2292 = vsel %vm2291, %v2289, %v2260
  %v2293 = vsel %vm2291, %v2290, %v2261
  %vm2294 = vcmask 1042432
  %v2295 = vsel %vm2294, %v2292, %v2264
  %v2296 = vsel %vm2294, %v2293, %v2265
  %vm2297 = vcmask 1043456
  %v2298 = vsel %vm2297, %v2295, %v2270
  %v2299 = vsel %vm2297, %v2296, %v2271
  %vm2300 = vcmask 1044480
  %v2301 = vsel %vm2300, %v2298, %v2274
  %v2302 = vsel %vm2300, %v2299, %v2275
  %vm2303 = vcmask 1045504
  %v2304 = vsel %vm2303, %v2301, %v2280
  %v2305 = vsel %vm2303, %v2302, %v2281
  %vm2306 = vcmask 1046528
  %v2307 = vsel %vm2306, %v2304, %v2284
  %v2308 = vsel %vm2306, %v2305, %v2285
  %v2309 = vld [vmem:[%s8] sm:$0xff]
  %v2310 = vld [vmem:[%s8 + $0x8] sm:$0xff]
  %v2311 = vld [vmem:[%s8 + $0x10] sm:$0xff]
  %v2312 = vld [vmem:[%s8 + $0x18] sm:$0xff]
  %v2313 = vld [vmem:[%s9] sm:$0x1]
  %v2315 = vlaneseq
  %v2316 = vshrl.u32 %v2315, 7
  %v2317 = vsub.s32 0, %v2316
  %v2318 = vrot.slane %v2313, %v2317
  %v2321 = vsel %vm73, %v2307, 0
  %v2324 = vsel %vm73, %v2308, 0
  %2326 = vmatprep.subr.mxu0 0.0
  %2327 = vmatpush1.msra.mxu0 0.0
  %2328 = vmatprep.subr.mxu0 0.0
  %2329 = vmatpush1.msra.mxu0 0.0
  %2330 = vmatprep.subr.mxu0 0.0
  %2331 = vmatpush1.msra.mxu0 0.0
  %2332 = vmatprep.subr.mxu0 0.0
  %2333 = vmatpush1.msra.mxu0 0.0
  %2334 = vmatprep.subr.mxu0 0.0
  %2335 = vmatpush1.msra.mxu0 0.0
  %2336 = vmatprep.subr.mxu0 0.0
  %2337 = vmatpush1.msra.mxu0 0.0
  %2338 = vmatprep.subr.mxu0 0.0
  %2339 = vmatpush1.msra.mxu0 0.0
  %2340 = vmatprep.subr.mxu0 0.0
  %2341 = vmatpush1.msra.mxu0 0.0
  %2342 = vmatprep.subr.mxu0 0.0
  %2343 = vmatpush1.msra.mxu0 0.0
  %2344 = vmatprep.subr.mxu0 0.0
  %2345 = vmatpush1.msra.mxu0 0.0
  %2346 = vmatprep.subr.mxu0 0.0
  %2347 = vmatpush1.msra.mxu0 0.0
  %2348 = vmatprep.subr.mxu0 0.0
  %2349 = vmatpush1.msra.mxu0 0.0
  %2350 = vmatprep.subr.mxu0 0.0
  %2351 = vmatpush1.msra.mxu0 %v2312
  %2352 = vmatprep.subr.mxu0 0.0
  %2353 = vmatpush1.msra.mxu0 %v2311
  %2354 = vmatprep.subr.mxu0 0.0
  %2355 = vmatpush1.msra.mxu0 %v2310
  %2356 = vmatprep.subr.mxu0 0.0
  %2357 = vmatpush1.msra.mxu0 %v2309
  %2358 = vmatprep.subr.mxu0 0.0
  %2359 = vmatpush2.msra.mxu0 0.0
  %2360 = vmatprep.subr.mxu0 0.0
  %2361 = vmatpush2.msra.mxu0 0.0
  %2362 = vmatprep.subr.mxu0 0.0
  %2363 = vmatpush2.msra.mxu0 0.0
  %2364 = vmatprep.subr.mxu0 0.0
  %2365 = vmatpush2.msra.mxu0 0.0
  %2366 = vmatprep.subr.mxu0 0.0
  %2367 = vmatpush2.msra.mxu0 0.0
  %2368 = vmatprep.subr.mxu0 0.0
  %2369 = vmatpush2.msra.mxu0 0.0
  %2370 = vmatprep.subr.mxu0 0.0
  %2371 = vmatpush2.msra.mxu0 0.0
  %2372 = vmatprep.subr.mxu0 0.0
  %2373 = vmatpush2.msra.mxu0 0.0
  %2374 = vmatprep.subr.mxu0 0.0
  %2375 = vmatpush2.msra.mxu0 0.0
  %2376 = vmatprep.subr.mxu0 0.0
  %2377 = vmatpush2.msra.mxu0 0.0
  %2378 = vmatprep.subr.mxu0 0.0
  %2379 = vmatpush2.msra.mxu0 0.0
  %2380 = vmatprep.subr.mxu0 0.0
  %2381 = vmatpush2.msra.mxu0 0.0
  %2382 = vmatprep.subr.mxu0 0.0
  %2383 = vmatpush2.msra.mxu0 0.0
  %2384 = vmatprep.subr.mxu0 0.0
  %2385 = vmatpush2.msra.mxu0 0.0
  %2386 = vmatprep.subr.mxu0 0.0
  %2387 = vmatpush2.msra.mxu0 0.0
  %2388 = vmatprep.subr.mxu0 0.0
  %2389 = vmatpush2.msra.mxu0 0.0
  %2390 = vmatprep.mubr.f32.mxu0 0.0
  %2391 = vmatmul.mubr.f32.gmra.mxu0 %v2321
  %v2392 = vpop.f32.mrf.mxu0
  %v2393 = vadd.f32 %v2318, %v2392
  %v2394 = vpop.f32.mrf.mxu0
  %2395 = vmatprep.mubr.f32.mxu0 0.0
  %2396 = vmatmul.mubr.f32.gmra.mxu0 %v2324
  %v2397 = vpop.f32.mrf.mxu0
  %v2398 = vadd.f32 %v2318, %v2397
  %v2399 = vpop.f32.mrf.mxu0
  %2400 = vdwg.mxu0
  %v2401 = vadd.f32 %v59, %v2393
  %v2402 = vadd.f32 %v60, %v2398
  %v2403 = vld [vmem:[%s10] sm:$0x1]
  %v2404 = vld [vmem:[%s11] sm:$0x1]
  %v2405 = vsel %vm73, %v2401, 0.0
  %2406 = vadd.xlane.f32.xlu0 %v2405
  %v2407 = vpop.xlane.xlu0 %2406
  %v2408 = vsel %vm73, %v2402, 0.0
  %2409 = vadd.xlane.f32.xlu0 %v2408
  %v2410 = vpop.xlane.xlu0 %2409
  %v2411 = vrcp.pop 32.0
  %v2412 = vmul.f32 %v2407, %v2411
  %v2413 = vmul.f32 %v2410, %v2411
  %v2414 = vsub.f32 %v2401, %v2412
  %v2415 = vsub.f32 %v2402, %v2413
  %v2416 = vmul.f32 %v2414, %v2414
  %v2417 = vmul.f32 %v2415, %v2415
  %v2418 = vsel %vm73, %v2416, 0.0
  %2419 = vadd.xlane.f32.xlu0 %v2418
  %v2420 = vpop.xlane.xlu0 %2419
  %v2421 = vsel %vm73, %v2417, 0.0
  %2422 = vadd.xlane.f32.xlu0 %v2421
  %v2423 = vpop.xlane.xlu0 %2422
  %v2424 = vmul.f32 %v2420, %v2411
  %v2425 = vmul.f32 %v2423, %v2411
  %v2426 = vadd.f32 %v2424, 1e-06
  %v2427 = vadd.f32 %v2425, 1e-06
  %v2428 = vrsqrt.pop %v2426
  %v2429 = vrsqrt.pop %v2427
  %v2430 = vmul.f32 %v2414, %v2428
  %v2431 = vmul.f32 %v2415, %v2429
  %v2433 = vlaneseq
  %v2434 = vshrl.u32 %v2433, 7
  %v2435 = vsub.s32 0, %v2434
  %v2436 = vrot.slane %v2403, %v2435
  %v2438 = vmul.f32 %v2430, %v2436
  %v2439 = vmul.f32 %v2431, %v2436
  %v2441 = vlaneseq
  %v2442 = vshrl.u32 %v2441, 7
  %v2443 = vsub.s32 0, %v2442
  %v2444 = vrot.slane %v2404, %v2443
  %v2446 = vadd.f32 %v2438, %v2444
  %v2447 = vadd.f32 %v2439, %v2444
  %v2448 = vld [vmem:[%s12] sm:$0xff]
  %v2449 = vld [vmem:[%s12 + $0x8] sm:$0xff]
  %v2450 = vld [vmem:[%s12 + $0x10] sm:$0xff]
  %v2451 = vld [vmem:[%s12 + $0x18] sm:$0xff]
  %v2452 = vld [vmem:[%s13] sm:$0x1]
  %v2454 = vlaneseq
  %v2455 = vshrl.u32 %v2454, 7
  %v2456 = vsub.s32 0, %v2455
  %v2457 = vrot.slane %v2452, %v2456
  %v2460 = vsel %vm73, %v2446, 0
  %v2463 = vsel %vm73, %v2447, 0
  %2465 = vmatprep.subr.mxu0 0.0
  %2466 = vmatpush1.msra.mxu0 0.0
  %2467 = vmatprep.subr.mxu0 0.0
  %2468 = vmatpush1.msra.mxu0 0.0
  %2469 = vmatprep.subr.mxu0 0.0
  %2470 = vmatpush1.msra.mxu0 0.0
  %2471 = vmatprep.subr.mxu0 0.0
  %2472 = vmatpush1.msra.mxu0 0.0
  %2473 = vmatprep.subr.mxu0 0.0
  %2474 = vmatpush1.msra.mxu0 0.0
  %2475 = vmatprep.subr.mxu0 0.0
  %2476 = vmatpush1.msra.mxu0 0.0
  %2477 = vmatprep.subr.mxu0 0.0
  %2478 = vmatpush1.msra.mxu0 0.0
  %2479 = vmatprep.subr.mxu0 0.0
  %2480 = vmatpush1.msra.mxu0 0.0
  %2481 = vmatprep.subr.mxu0 0.0
  %2482 = vmatpush1.msra.mxu0 0.0
  %2483 = vmatprep.subr.mxu0 0.0
  %2484 = vmatpush1.msra.mxu0 0.0
  %2485 = vmatprep.subr.mxu0 0.0
  %2486 = vmatpush1.msra.mxu0 0.0
  %2487 = vmatprep.subr.mxu0 0.0
  %2488 = vmatpush1.msra.mxu0 0.0
  %2489 = vmatprep.subr.mxu0 0.0
  %2490 = vmatpush1.msra.mxu0 %v2451
  %2491 = vmatprep.subr.mxu0 0.0
  %2492 = vmatpush1.msra.mxu0 %v2450
  %2493 = vmatprep.subr.mxu0 0.0
  %2494 = vmatpush1.msra.mxu0 %v2449
  %2495 = vmatprep.subr.mxu0 0.0
  %2496 = vmatpush1.msra.mxu0 %v2448
  %2497 = vmatprep.subr.mxu0 0.0
  %2498 = vmatpush2.msra.mxu0 0.0
  %2499 = vmatprep.subr.mxu0 0.0
  %2500 = vmatpush2.msra.mxu0 0.0
  %2501 = vmatprep.subr.mxu0 0.0
  %2502 = vmatpush2.msra.mxu0 0.0
  %2503 = vmatprep.subr.mxu0 0.0
  %2504 = vmatpush2.msra.mxu0 0.0
  %2505 = vmatprep.subr.mxu0 0.0
  %2506 = vmatpush2.msra.mxu0 0.0
  %2507 = vmatprep.subr.mxu0 0.0
  %2508 = vmatpush2.msra.mxu0 0.0
  %2509 = vmatprep.subr.mxu0 0.0
  %2510 = vmatpush2.msra.mxu0 0.0
  %2511 = vmatprep.subr.mxu0 0.0
  %2512 = vmatpush2.msra.mxu0 0.0
  %2513 = vmatprep.subr.mxu0 0.0
  %2514 = vmatpush2.msra.mxu0 0.0
  %2515 = vmatprep.subr.mxu0 0.0
  %2516 = vmatpush2.msra.mxu0 0.0
  %2517 = vmatprep.subr.mxu0 0.0
  %2518 = vmatpush2.msra.mxu0 0.0
  %2519 = vmatprep.subr.mxu0 0.0
  %2520 = vmatpush2.msra.mxu0 0.0
  %2521 = vmatprep.subr.mxu0 0.0
  %2522 = vmatpush2.msra.mxu0 0.0
  %2523 = vmatprep.subr.mxu0 0.0
  %2524 = vmatpush2.msra.mxu0 0.0
  %2525 = vmatprep.subr.mxu0 0.0
  %2526 = vmatpush2.msra.mxu0 0.0
  %2527 = vmatprep.subr.mxu0 0.0
  %2528 = vmatpush2.msra.mxu0 0.0
  %2529 = vmatprep.mubr.f32.mxu0 0.0
  %2530 = vmatmul.mubr.f32.gmra.mxu0 %v2460
  %v2531 = vpop.f32.mrf.mxu0
  %v2532 = vadd.f32 %v2457, %v2531
  %v2533 = vpop.f32.mrf.mxu0
  %2534 = vmatprep.mubr.f32.mxu0 0.0
  %2535 = vmatmul.mubr.f32.gmra.mxu0 %v2463
  %v2536 = vpop.f32.mrf.mxu0
  %v2537 = vadd.f32 %v2457, %v2536
  %v2538 = vpop.f32.mrf.mxu0
  %2539 = vdwg.mxu0
  %v2540 = vmul.f32 %v2532, 0.5
  %v2541 = vmul.f32 %v2537, 0.5
  %v2542 = vmul.f32 %v2532, 0.044715
  %v2543 = vmul.f32 %v2537, 0.044715
  %v2544 = vmul.f32 %v2542, %v2532
  %v2545 = vmul.f32 %v2543, %v2537
  %v2546 = vmul.f32 %v2544, %v2532
  %v2547 = vmul.f32 %v2545, %v2537
  %v2548 = vadd.f32 %v2532, %v2546
  %v2549 = vadd.f32 %v2537, %v2547
  %v2550 = vmul.f32 %v2548, 0.7978846
  %v2551 = vmul.f32 %v2549, 0.7978846
  %v2552 = vtanh.pop %v2550
  %v2553 = vtanh.pop %v2551
  %v2554 = vadd.f32 %v2552, 1.0
  %v2555 = vadd.f32 %v2553, 1.0
  %v2556 = vmul.f32 %v2540, %v2554
  %v2557 = vmul.f32 %v2541, %v2555
  %v2558 = vld [vmem:[%s14] sm:$0xff]
  %v2559 = vld [vmem:[%s14 + $0x8] sm:$0xff]
  %v2560 = vld [vmem:[%s14 + $0x10] sm:$0xff]
  %v2561 = vld [vmem:[%s14 + $0x18] sm:$0xff]
  %v2562 = vld [vmem:[%s14 + $0x20] sm:$0xff]
  %v2563 = vld [vmem:[%s14 + $0x28] sm:$0xff]
  %v2564 = vld [vmem:[%s14 + $0x30] sm:$0xff]
  %v2565 = vld [vmem:[%s14 + $0x38] sm:$0xff]
  %v2566 = vld [vmem:[%s15] sm:$0x1]
  %v2568 = vlaneseq
  %v2569 = vshrl.u32 %v2568, 7
  %v2570 = vsub.s32 0, %v2569
  %v2571 = vrot.slane %v2566, %v2570
  %vm2573 = vcmask 523264
  %v2575 = vsel %vm2573, %v2556, 0
  %v2578 = vsel %vm2573, %v2557, 0
  %2580 = vmatprep.subr.mxu0 0.0
  %2581 = vmatpush1.msra.mxu0 0.0
  %2582 = vmatprep.subr.mxu0 0.0
  %2583 = vmatpush1.msra.mxu0 0.0
  %2584 = vmatprep.subr.mxu0 0.0
  %2585 = vmatpush1.msra.mxu0 0.0
  %2586 = vmatprep.subr.mxu0 0.0
  %2587 = vmatpush1.msra.mxu0 0.0
  %2588 = vmatprep.subr.mxu0 0.0
  %2589 = vmatpush1.msra.mxu0 0.0
  %2590 = vmatprep.subr.mxu0 0.0
  %2591 = vmatpush1.msra.mxu0 0.0
  %2592 = vmatprep.subr.mxu0 0.0
  %2593 = vmatpush1.msra.mxu0 0.0
  %2594 = vmatprep.subr.mxu0 0.0
  %2595 = vmatpush1.msra.mxu0 0.0
  %2596 = vmatprep.subr.mxu0 0.0
  %2597 = vmatpush1.msra.mxu0 %v2565
  %2598 = vmatprep.subr.mxu0 0.0
  %2599 = vmatpush1.msra.mxu0 %v2564
  %2600 = vmatprep.subr.mxu0 0.0
  %2601 = vmatpush1.msra.mxu0 %v2563
  %2602 = vmatprep.subr.mxu0 0.0
  %2603 = vmatpush1.msra.mxu0 %v2562
  %2604 = vmatprep.subr.mxu0 0.0
  %2605 = vmatpush1.msra.mxu0 %v2561
  %2606 = vmatprep.subr.mxu0 0.0
  %2607 = vmatpush1.msra.mxu0 %v2560
  %2608 = vmatprep.subr.mxu0 0.0
  %2609 = vmatpush1.msra.mxu0 %v2559
  %2610 = vmatprep.subr.mxu0 0.0
  %2611 = vmatpush1.msra.mxu0 %v2558
  %2612 = vmatprep.subr.mxu0 0.0
  %2613 = vmatpush2.msra.mxu0 0.0
  %2614 = vmatprep.subr.mxu0 0.0
  %2615 = vmatpush2.msra.mxu0 0.0
  %2616 = vmatprep.subr.mxu0 0.0
  %2617 = vmatpush2.msra.mxu0 0.0
  %2618 = vmatprep.subr.mxu0 0.0
  %2619 = vmatpush2.msra.mxu0 0.0
  %2620 = vmatprep.subr.mxu0 0.0
  %2621 = vmatpush2.msra.mxu0 0.0
  %2622 = vmatprep.subr.mxu0 0.0
  %2623 = vmatpush2.msra.mxu0 0.0
  %2624 = vmatprep.subr.mxu0 0.0
  %2625 = vmatpush2.msra.mxu0 0.0
  %2626 = vmatprep.subr.mxu0 0.0
  %2627 = vmatpush2.msra.mxu0 0.0
  %2628 = vmatprep.subr.mxu0 0.0
  %2629 = vmatpush2.msra.mxu0 0.0
  %2630 = vmatprep.subr.mxu0 0.0
  %2631 = vmatpush2.msra.mxu0 0.0
  %2632 = vmatprep.subr.mxu0 0.0
  %2633 = vmatpush2.msra.mxu0 0.0
  %2634 = vmatprep.subr.mxu0 0.0
  %2635 = vmatpush2.msra.mxu0 0.0
  %2636 = vmatprep.subr.mxu0 0.0
  %2637 = vmatpush2.msra.mxu0 0.0
  %2638 = vmatprep.subr.mxu0 0.0
  %2639 = vmatpush2.msra.mxu0 0.0
  %2640 = vmatprep.subr.mxu0 0.0
  %2641 = vmatpush2.msra.mxu0 0.0
  %2642 = vmatprep.subr.mxu0 0.0
  %2643 = vmatpush2.msra.mxu0 0.0
  %2644 = vmatprep.mubr.f32.mxu0 0.0
  %2645 = vmatmul.mubr.f32.gmra.mxu0 %v2575
  %v2646 = vpop.f32.mrf.mxu0
  %v2647 = vadd.f32 %v2571, %v2646
  %v2648 = vpop.f32.mrf.mxu0
  %2649 = vmatprep.mubr.f32.mxu0 0.0
  %2650 = vmatmul.mubr.f32.gmra.mxu0 %v2578
  %v2651 = vpop.f32.mrf.mxu0
  %v2652 = vadd.f32 %v2571, %v2651
  %v2653 = vpop.f32.mrf.mxu0
  %2654 = vdwg.mxu0
  %v2655 = vadd.f32 %v2647, %v2446
  %v2656 = vadd.f32 %v2652, %v2447
  %v2657 = vld [vmem:[%s16] sm:$0x1]
  %v2658 = vld [vmem:[%s17] sm:$0x1]
  %v2659 = vsel %vm73, %v2655, 0.0
  %2660 = vadd.xlane.f32.xlu0 %v2659
  %v2661 = vpop.xlane.xlu0 %2660
  %v2662 = vsel %vm73, %v2656, 0.0
  %2663 = vadd.xlane.f32.xlu0 %v2662
  %v2664 = vpop.xlane.xlu0 %2663
  %v2665 = vmul.f32 %v2661, %v2411
  %v2666 = vmul.f32 %v2664, %v2411
  %v2667 = vsub.f32 %v2655, %v2665
  %v2668 = vsub.f32 %v2656, %v2666
  %v2669 = vmul.f32 %v2667, %v2667
  %v2670 = vmul.f32 %v2668, %v2668
  %v2671 = vsel %vm73, %v2669, 0.0
  %2672 = vadd.xlane.f32.xlu0 %v2671
  %v2673 = vpop.xlane.xlu0 %2672
  %v2674 = vsel %vm73, %v2670, 0.0
  %2675 = vadd.xlane.f32.xlu0 %v2674
  %v2676 = vpop.xlane.xlu0 %2675
  %v2677 = vmul.f32 %v2673, %v2411
  %v2678 = vmul.f32 %v2676, %v2411
  %v2679 = vadd.f32 %v2677, 1e-06
  %v2680 = vadd.f32 %v2678, 1e-06
  %v2681 = vrsqrt.pop %v2679
  %v2682 = vrsqrt.pop %v2680
  %v2683 = vmul.f32 %v2667, %v2681
  %v2684 = vmul.f32 %v2668, %v2682
  %v2686 = vlaneseq
  %v2687 = vshrl.u32 %v2686, 7
  %v2688 = vsub.s32 0, %v2687
  %v2689 = vrot.slane %v2657, %v2688
  %v2691 = vmul.f32 %v2683, %v2689
  %v2692 = vmul.f32 %v2684, %v2689
  %v2694 = vlaneseq
  %v2695 = vshrl.u32 %v2694, 7
  %v2696 = vsub.s32 0, %v2695
  %v2697 = vrot.slane %v2658, %v2696
  %v2699 = vadd.f32 %v2691, %v2697
  %v2700 = vadd.f32 %v2692, %v2697
  %2701 = vst.msk [vmem:[%s18] sm:$0xff] %vm73, %v2699
  %2702 = vst.msk [vmem:[%s18 + $0x8] sm:$0xff] %vm73, %v2700
  // Predicated region
  $region74: #{decoder_forward.2} parent=0 // pred_check
    _
  $region75: #{decoder_forward.2} parent=0 // pred_check_branch
    %2704 = sbr.rel (0) target = $region77
  $region76: #{decoder_forward.2} parent=0 // pred_region
    _
  $region77: #{decoder_forward.2} parent=0 // pred_fallthru
    _
  // Predicated region
  $region78: #{decoder_forward.2} parent=0 // pred_check
    _
  $region79: #{decoder_forward.2} parent=0 // pred_check_branch
    %2706 = sbr.rel (0) target = $region81
  $region80: #{decoder_forward.2} parent=0 // pred_region
    _
  $region81: #{decoder_forward.2} parent=0 // pred_fallthru
    _

</llo_original>
